<compile_context>
chip_gen: v7x
topology: tpu7x:2x2x1
jax: 0.10.0
libtpu: 0.0.40
codegen_flags: <defaults>
</compile_context>

<pallas_src>
import math
import numpy as np
import jax
import jax.numpy as jnp
from jax.experimental import pallas as pl
from jax.experimental.pallas import tpu as pltpu

# ---- small hyper-parameters implied by the module's forward ----
V = 32            # embedding vocab size
E = 15            # embedding dim; LSTM input = E + 1 (token value concatenated)
DIN = E + 1       # 16
H = 64            # LSTM hidden size per direction  (bi-output = 2H = 128)
S = 8             # sequence length
B = 2             # batch
BP = 8            # batch padded to a full sublane tile
OUT = 32          # hidden1 output features
POOL = 2          # MaxPool1d kernel = stride = 2 over the 2H feature dim
FLAT = S * (2 * H // POOL)   # 512 features going into hidden1
G = 2 * H         # 128: one fused gate block ([fwd | bwd]) = one full lane tile

GATE_PERM = [0, 1, 3, 2]     # PyTorch (i,f,g,o) -> packed (i,f,o,g)


def blstm_feature_kernel(comb_ref, wih_ref, whh_ref, bias_ref, w1_ref, b1_ref,
                         out_ref, hbuf):
    """Fused bi-LSTM -> (dropout=identity) -> MaxPool1d(2) -> flatten -> Linear -> ReLU."""
    # Hoisted input projection for BOTH directions and ALL steps: a single
    # (S*BP, 2*DIN) @ (2*DIN, 8H) bf16 matmul off the serial recurrence path.
    xproj = (jnp.dot(comb_ref[...], wih_ref[...],
                     preferred_element_type=jnp.float32)
             + bias_ref[...])                                   # (S*BP, 8H) f32

    h = jnp.zeros((BP, 2 * H), jnp.float32)                     # [h_f | h_b] on lanes
    c = jnp.zeros((BP, 2 * H), jnp.float32)                     # [c_f | c_b] on lanes

    # TODO(synk): nn.Dropout is stochastic in train mode; applied as eval-mode identity.
    for t in range(S):
        # fused-direction recurrence: fwd consumes comb[t], bwd consumes comb[S-1-t].
        # BP=8 makes the xproj slice a tile-aligned (8, 8H) block; whh is the
        # only MXU RHS inside the loop so it stays weight-resident.
        gates = xproj[t * BP:(t + 1) * BP, :] + jnp.dot(
            h.astype(jnp.bfloat16), whh_ref[...],
            preferred_element_type=jnp.float32)                 # (BP, 8H)
        # gate columns are packed [i|f|o|g]: one tanh-based sigmoid over a
        # contiguous 3*128-lane slab, one tanh over the last 128 lanes.
        sg = 0.5 * jnp.tanh(0.5 * gates[:, :3 * G]) + 0.5       # sigmoid(i|f|o)
        gg = jnp.tanh(gates[:, 3 * G:4 * G])
        i = sg[:, 0 * G:1 * G]
        f = sg[:, 1 * G:2 * G]
        o = sg[:, 2 * G:3 * G]
        c = f * c + i * gg
        h = o * jnp.tanh(c)

        # MaxPool1d(k=2,s=2): adjacent-lane pair max via an XLU lane rotate
        # (shift 2H-1 == -1 mod 2H).  Even lanes hold the pooled value; odd
        # lanes are garbage but multiply exact-zero rows of w1.
        m = jnp.maximum(h, pltpu.roll(h, shift=2 * H - 1, axis=1))
        hbuf[:, t * G:(t + 1) * G] = m                          # lane offset t*128

    # Hoisted hidden1: ONE (BP, S*2H) @ (S*2H, OUT) matmul after the loop.
    acc = jnp.dot(hbuf[...].astype(jnp.bfloat16), w1_ref[...],
                  preferred_element_type=jnp.float32) + b1_ref[...]   # (BP, OUT)
    out_ref[...] = jnp.maximum(acc[:B, :], 0.0)                 # ReLU, drop pad rows


def pack_params(p):
    """One-time parameter re-layout (kept OUTSIDE the jitted per-call forward)."""
    # fused gate layout: columns = [i_f|i_b | f_f|f_b | o_f|o_b | g_f|g_b], 64 each.
    wf = p["w_ih_f"].T.reshape(DIN, 4, H)[:, GATE_PERM, :]
    wb = p["w_ih_b"].T.reshape(DIN, 4, H)[:, GATE_PERM, :]
    wih_pair = jnp.zeros((2, DIN, 4, 2, H), jnp.float32)
    wih_pair = wih_pair.at[0, :, :, 0, :].set(wf)     # rows 0:DIN   -> fwd gate cols
    wih_pair = wih_pair.at[1, :, :, 1, :].set(wb)     # rows DIN:2DIN-> bwd gate cols
    wih_pair = wih_pair.reshape(2 * DIN, 8 * H).astype(jnp.bfloat16)   # (32, 512)

    uf = p["w_hh_f"].T.reshape(H, 4, H)[:, GATE_PERM, :]
    ub = p["w_hh_b"].T.reshape(H, 4, H)[:, GATE_PERM, :]
    whh = jnp.zeros((2, H, 4, 2, H), jnp.float32)
    whh = whh.at[0, :, :, 0, :].set(uf)               # h_f rows -> fwd gate cols
    whh = whh.at[1, :, :, 1, :].set(ub)               # h_b rows -> bwd gate cols
    whh = whh.reshape(2 * H, 8 * H).astype(jnp.bfloat16)               # (128, 512)

    bf = (p["b_ih_f"] + p["b_hh_f"]).reshape(4, H)[GATE_PERM, :]
    bb = (p["b_ih_b"] + p["b_hh_b"]).reshape(4, H)[GATE_PERM, :]
    bias = jnp.stack([bf, bb], axis=1).reshape(1, 8 * H)   # (1, 512) f32

    # hidden1 weight as one (S*2H, OUT) matrix: row block t matches the pooled
    # hidden stored at lane offset t*128, i.e. h_fwd(t) on lanes [0,64) and
    # h_bwd(S-1-t) on lanes [64,128).  Even rows carry the real weights
    # (matching the flatten order of (B, S, 2H//POOL)); odd rows are EXACTLY
    # zero (pair-max invariant — do not perturb).
    w1t = p["w1"].T.reshape(S, 2, H // POOL, OUT)     # [time, half, c, out]
    w1e = jnp.zeros((S, 2, H, OUT), jnp.float32)
    w1e = w1e.at[:, 0, 0::2, :].set(w1t[:, 0])        # fwd half, original time t
    w1e = w1e.at[:, 1, 0::2, :].set(w1t[::-1, 1])     # bwd half, original time S-1-t
    w1big = w1e.reshape(S * 2 * H, OUT).astype(jnp.bfloat16)           # (1024, 32)

    b1 = p["b1"][None, :]                             # (1, OUT) f32
    return dict(wih_pair=wih_pair, whh=whh, bias=bias, w1=w1big, b1=b1)


def init_params(key):
    ks = jax.random.split(key, 12)
    klstm = 1.0 / math.sqrt(H)
    klin = 1.0 / math.sqrt(FLAT)
    u = lambda k, shp, s: jax.random.uniform(k, shp, jnp.float32, -s, s)
    return dict(
        embedding=jax.random.normal(ks[0], (V, E), jnp.float32),
        w_ih_f=u(ks[1], (4 * H, DIN), klstm), w_hh_f=u(ks[2], (4 * H, H), klstm),
        b_ih_f=u(ks[3], (4 * H,), klstm),     b_hh_f=u(ks[4], (4 * H,), klstm),
        w_ih_b=u(ks[5], (4 * H, DIN), klstm), w_hh_b=u(ks[6], (4 * H, H), klstm),
        b_ih_b=u(ks[7], (4 * H,), klstm),     b_hh_b=u(ks[8], (4 * H,), klstm),
        w1=u(ks[9], (OUT, FLAT), klin),       b1=u(ks[10], (OUT,), klin),
    )


def blstm_python_feature_net(tokens, embedding, packed):
    # ---- glue: embedding gather + concat(raw token value), time-major transpose ----
    emb = jnp.take(embedding, tokens, axis=0)                         # (B,S,E)
    ts = tokens.astype(jnp.float32)[..., None]                        # (B,S,1)
    comb = jnp.concatenate([emb, ts], axis=-1)                        # (B,S,DIN)
    comb_t = jnp.transpose(comb, (1, 0, 2))                           # (S,B,DIN)
    # per-step lane pair [x_fwd(t) | x_bwd(t)] with x_bwd(t) = comb[S-1-t];
    # batch zero-padded to a full sublane tile (BP=8), cast to bf16 for DMA/MXU.
    comb_pair = jnp.concatenate([comb_t, comb_t[::-1]], axis=-1)      # (S,B,2*DIN)
    comb_pad = jnp.zeros((S, BP, 2 * DIN), jnp.float32)
    comb_pad = comb_pad.at[:, :B, :].set(comb_pair)
    comb_flat = comb_pad.reshape(S * BP, 2 * DIN).astype(jnp.bfloat16)  # (64, 32)

    vmem = pl.BlockSpec(memory_space=pltpu.MemorySpace.VMEM)
    return pl.pallas_call(
        blstm_feature_kernel,
        out_shape=jax.ShapeDtypeStruct((B, OUT), jnp.float32),
        in_specs=[vmem] * 6,
        out_specs=vmem,
        scratch_shapes=[pltpu.VMEM((BP, S * 2 * H), jnp.float32)],
    )(comb_flat, packed["wih_pair"], packed["whh"], packed["bias"],
      packed["w1"], packed["b1"])


def reference(tokens, p):
    """Pure-JAX replica of the PyTorch forward (dropout = identity)."""
    emb = jnp.take(p["embedding"], tokens, axis=0)
    comb = jnp.concatenate([emb, tokens.astype(jnp.float32)[..., None]], axis=-1)

    def run(wih, whh, bih, bhh, reverse):
        order = range(S - 1, -1, -1) if reverse else range(S)
        h = jnp.zeros((B, H)); c = jnp.zeros((B, H))
        outs = [None] * S
        for t in order:
            gates = comb[:, t] @ wih.T + h @ whh.T + bih + bhh
            i = jax.nn.sigmoid(gates[:, :H]); f = jax.nn.sigmoid(gates[:, H:2 * H])
            g = jnp.tanh(gates[:, 2 * H:3 * H]); o = jax.nn.sigmoid(gates[:, 3 * H:])
            c = f * c + i * g
            h = o * jnp.tanh(c)
            outs[t] = h
        return jnp.stack(outs, axis=1)                                # (B,S,H)

    out_f = run(p["w_ih_f"], p["w_hh_f"], p["b_ih_f"], p["b_hh_f"], False)
    out_b = run(p["w_ih_b"], p["w_hh_b"], p["b_ih_b"], p["b_hh_b"], True)
    x = jnp.concatenate([out_f, out_b], axis=-1)                      # (B,S,2H)
    x = jnp.max(x.reshape(B, S, 2 * H // POOL, POOL), axis=-1)        # MaxPool1d(2)
    x = x.reshape(B, -1)                                              # (B, FLAT)
    return jax.nn.relu(x @ p["w1"].T + p["b1"])


if __name__ == "__main__":
    key = jax.random.PRNGKey(0)
    kp, kx = jax.random.split(key)
    params = init_params(kp)
    tokens = jax.random.randint(kx, (B, S), 0, V, dtype=jnp.int32)

    packed = pack_params(params)      # built once, outside the jitted forward path
    fwd = jax.jit(blstm_python_feature_net)
    out = jax.block_until_ready(fwd(tokens, params["embedding"], packed))
    ref = jax.block_until_ready(reference(tokens, params))

    assert out.shape == (B, OUT) and out.dtype == jnp.float32
    # loose tolerance: bf16 weights / MXU default precision and the fused
    # summation order differ slightly from the plain-XLA f32 reference.
    np.testing.assert_allclose(np.asarray(out), np.asarray(ref), rtol=5e-2, atol=5e-2)
    print("KERNEL_OK")
</pallas_src>

<mosaic_0001>
module attributes {stable_mosaic.version = 11 : i64} {
  func.func @blstm_feature_kernel(%arg0: memref<64x32xbf16, #tpu.memory_space<vmem>>, %arg1: memref<32x512xbf16, #tpu.memory_space<vmem>>, %arg2: memref<128x512xbf16, #tpu.memory_space<vmem>>, %arg3: memref<1x512xf32, #tpu.memory_space<vmem>>, %arg4: memref<1024x32xbf16, #tpu.memory_space<vmem>>, %arg5: memref<1x32xf32, #tpu.memory_space<vmem>>, %arg6: memref<2x32xf32, #tpu.memory_space<vmem>>, %arg7: memref<8x1024xf32, #tpu.memory_space<vmem>>) attributes {dimension_semantics = [], scalar_prefetch = 0 : i64, scratch_operands = 1 : i64, tpu.core_type = #tpu.core_type<tc>} {
    %c0 = arith.constant 0 : index
    %c0_0 = arith.constant 0 : index
    %0 = vector.load %arg0[%c0, %c0_0] : memref<64x32xbf16, #tpu.memory_space<vmem>>, vector<64x32xbf16>
    %c0_1 = arith.constant 0 : index
    %c0_2 = arith.constant 0 : index
    %1 = vector.load %arg1[%c0_1, %c0_2] : memref<32x512xbf16, #tpu.memory_space<vmem>>, vector<32x512xbf16>
    %cst = arith.constant dense<0.000000e+00> : vector<64x512xf32>
    %2 = tpu.matmul %0, %1, %cst {dimension_numbers = #tpu.dot_dimension_numbers<[1], [0], [0], [1], [0, 0, 1, 1], [], []>} : vector<64x32xbf16>, vector<32x512xbf16>, vector<64x512xf32> -> vector<64x512xf32>
    %c0_3 = arith.constant 0 : index
    %c0_4 = arith.constant 0 : index
    %3 = vector.load %arg3[%c0_3, %c0_4] : memref<1x512xf32, #tpu.memory_space<vmem>>, vector<1x512xf32>
    %4 = vector.broadcast %3 : vector<1x512xf32> to vector<64x512xf32>
    %5 = arith.addf %2, %4 : vector<64x512xf32>
    %cst_5 = arith.constant 0.000000e+00 : f32
    %6 = vector.broadcast %cst_5 : f32 to vector<8x128xf32>
    %cst_6 = arith.constant 0.000000e+00 : f32
    %7 = vector.broadcast %cst_6 : f32 to vector<8x128xf32>
    %8 = vector.extract_strided_slice %5 {offsets = [0, 0], sizes = [8, 512], strides = [1, 1]} : vector<64x512xf32> to vector<8x512xf32>
    %9 = arith.truncf %6 : vector<8x128xf32> to vector<8x128xbf16>
    %c0_7 = arith.constant 0 : index
    %c0_8 = arith.constant 0 : index
    %10 = vector.load %arg2[%c0_7, %c0_8] : memref<128x512xbf16, #tpu.memory_space<vmem>>, vector<128x512xbf16>
    %cst_9 = arith.constant dense<0.000000e+00> : vector<8x512xf32>
    %11 = tpu.matmul %9, %10, %cst_9 {dimension_numbers = #tpu.dot_dimension_numbers<[1], [0], [0], [1], [0, 0, 1, 1], [], []>} : vector<8x128xbf16>, vector<128x512xbf16>, vector<8x512xf32> -> vector<8x512xf32>
    %12 = arith.addf %8, %11 : vector<8x512xf32>
    %13 = vector.extract_strided_slice %12 {offsets = [0, 0], sizes = [8, 384], strides = [1, 1]} : vector<8x512xf32> to vector<8x384xf32>
    %cst_10 = arith.constant 5.000000e-01 : f32
    %14 = vector.broadcast %cst_10 : f32 to vector<8x384xf32>
    %15 = arith.mulf %14, %13 : vector<8x384xf32>
    %16 = math.tanh %15 : vector<8x384xf32>
    %cst_11 = arith.constant 5.000000e-01 : f32
    %17 = vector.broadcast %cst_11 : f32 to vector<8x384xf32>
    %18 = arith.mulf %17, %16 : vector<8x384xf32>
    %cst_12 = arith.constant 5.000000e-01 : f32
    %19 = vector.broadcast %cst_12 : f32 to vector<8x384xf32>
    %20 = arith.addf %18, %19 : vector<8x384xf32>
    %21 = vector.extract_strided_slice %12 {offsets = [0, 384], sizes = [8, 128], strides = [1, 1]} : vector<8x512xf32> to vector<8x128xf32>
    %22 = math.tanh %21 : vector<8x128xf32>
    %23 = vector.extract_strided_slice %20 {offsets = [0, 0], sizes = [8, 128], strides = [1, 1]} : vector<8x384xf32> to vector<8x128xf32>
    %24 = vector.extract_strided_slice %20 {offsets = [0, 128], sizes = [8, 128], strides = [1, 1]} : vector<8x384xf32> to vector<8x128xf32>
    %25 = vector.extract_strided_slice %20 {offsets = [0, 256], sizes = [8, 128], strides = [1, 1]} : vector<8x384xf32> to vector<8x128xf32>
    %26 = arith.mulf %24, %7 : vector<8x128xf32>
    %27 = arith.mulf %23, %22 : vector<8x128xf32>
    %28 = arith.addf %26, %27 : vector<8x128xf32>
    %29 = math.tanh %28 : vector<8x128xf32>
    %30 = arith.mulf %25, %29 : vector<8x128xf32>
    %c127_i32 = arith.constant 127 : i32
    %31 = tpu.dynamic_rotate %30 by %c127_i32 dim 1 : vector<8x128xf32>, i32 -> vector<8x128xf32>
    %32 = arith.maximumf %30, %31 : vector<8x128xf32>
    %c0_13 = arith.constant 0 : index
    %c0_14 = arith.constant 0 : index
    %33 = vector.load %arg7[%c0_13, %c0_14] : memref<8x1024xf32, #tpu.memory_space<vmem>>, vector<8x128xf32>
    tpu.vector_store %arg7[%c0_13, %c0_14], %32 {strides = array<i32>} : memref<8x1024xf32, #tpu.memory_space<vmem>>, vector<8x128xf32>,
    %34 = vector.extract_strided_slice %5 {offsets = [8, 0], sizes = [8, 512], strides = [1, 1]} : vector<64x512xf32> to vector<8x512xf32>
    %35 = arith.truncf %30 : vector<8x128xf32> to vector<8x128xbf16>
    %c0_15 = arith.constant 0 : index
    %c0_16 = arith.constant 0 : index
    %36 = vector.load %arg2[%c0_15, %c0_16] : memref<128x512xbf16, #tpu.memory_space<vmem>>, vector<128x512xbf16>
    %cst_17 = arith.constant dense<0.000000e+00> : vector<8x512xf32>
    %37 = tpu.matmul %35, %36, %cst_17 {dimension_numbers = #tpu.dot_dimension_numbers<[1], [0], [0], [1], [0, 0, 1, 1], [], []>} : vector<8x128xbf16>, vector<128x512xbf16>, vector<8x512xf32> -> vector<8x512xf32>
    %38 = arith.addf %34, %37 : vector<8x512xf32>
    %39 = vector.extract_strided_slice %38 {offsets = [0, 0], sizes = [8, 384], strides = [1, 1]} : vector<8x512xf32> to vector<8x384xf32>
    %cst_18 = arith.constant 5.000000e-01 : f32
    %40 = vector.broadcast %cst_18 : f32 to vector<8x384xf32>
    %41 = arith.mulf %40, %39 : vector<8x384xf32>
    %42 = math.tanh %41 : vector<8x384xf32>
    %cst_19 = arith.constant 5.000000e-01 : f32
    %43 = vector.broadcast %cst_19 : f32 to vector<8x384xf32>
    %44 = arith.mulf %43, %42 : vector<8x384xf32>
    %cst_20 = arith.constant 5.000000e-01 : f32
    %45 = vector.broadcast %cst_20 : f32 to vector<8x384xf32>
    %46 = arith.addf %44, %45 : vector<8x384xf32>
    %47 = vector.extract_strided_slice %38 {offsets = [0, 384], sizes = [8, 128], strides = [1, 1]} : vector<8x512xf32> to vector<8x128xf32>
    %48 = math.tanh %47 : vector<8x128xf32>
    %49 = vector.extract_strided_slice %46 {offsets = [0, 0], sizes = [8, 128], strides = [1, 1]} : vector<8x384xf32> to vector<8x128xf32>
    %50 = vector.extract_strided_slice %46 {offsets = [0, 128], sizes = [8, 128], strides = [1, 1]} : vector<8x384xf32> to vector<8x128xf32>
    %51 = vector.extract_strided_slice %46 {offsets = [0, 256], sizes = [8, 128], strides = [1, 1]} : vector<8x384xf32> to vector<8x128xf32>
    %52 = arith.mulf %50, %28 : vector<8x128xf32>
    %53 = arith.mulf %49, %48 : vector<8x128xf32>
    %54 = arith.addf %52, %53 : vector<8x128xf32>
    %55 = math.tanh %54 : vector<8x128xf32>
    %56 = arith.mulf %51, %55 : vector<8x128xf32>
    %c127_i32_21 = arith.constant 127 : i32
    %57 = tpu.dynamic_rotate %56 by %c127_i32_21 dim 1 : vector<8x128xf32>, i32 -> vector<8x128xf32>
    %58 = arith.maximumf %56, %57 : vector<8x128xf32>
    %c0_22 = arith.constant 0 : index
    %c128 = arith.constant 128 : index
    %59 = vector.load %arg7[%c0_22, %c128] : memref<8x1024xf32, #tpu.memory_space<vmem>>, vector<8x128xf32>
    tpu.vector_store %arg7[%c0_22, %c128], %58 {strides = array<i32>} : memref<8x1024xf32, #tpu.memory_space<vmem>>, vector<8x128xf32>,
    %60 = vector.extract_strided_slice %5 {offsets = [16, 0], sizes = [8, 512], strides = [1, 1]} : vector<64x512xf32> to vector<8x512xf32>
    %61 = arith.truncf %56 : vector<8x128xf32> to vector<8x128xbf16>
    %c0_23 = arith.constant 0 : index
    %c0_24 = arith.constant 0 : index
    %62 = vector.load %arg2[%c0_23, %c0_24] : memref<128x512xbf16, #tpu.memory_space<vmem>>, vector<128x512xbf16>
    %cst_25 = arith.constant dense<0.000000e+00> : vector<8x512xf32>
    %63 = tpu.matmul %61, %62, %cst_25 {dimension_numbers = #tpu.dot_dimension_numbers<[1], [0], [0], [1], [0, 0, 1, 1], [], []>} : vector<8x128xbf16>, vector<128x512xbf16>, vector<8x512xf32> -> vector<8x512xf32>
    %64 = arith.addf %60, %63 : vector<8x512xf32>
    %65 = vector.extract_strided_slice %64 {offsets = [0, 0], sizes = [8, 384], strides = [1, 1]} : vector<8x512xf32> to vector<8x384xf32>
    %cst_26 = arith.constant 5.000000e-01 : f32
    %66 = vector.broadcast %cst_26 : f32 to vector<8x384xf32>
    %67 = arith.mulf %66, %65 : vector<8x384xf32>
    %68 = math.tanh %67 : vector<8x384xf32>
    %cst_27 = arith.constant 5.000000e-01 : f32
    %69 = vector.broadcast %cst_27 : f32 to vector<8x384xf32>
    %70 = arith.mulf %69, %68 : vector<8x384xf32>
    %cst_28 = arith.constant 5.000000e-01 : f32
    %71 = vector.broadcast %cst_28 : f32 to vector<8x384xf32>
    %72 = arith.addf %70, %71 : vector<8x384xf32>
    %73 = vector.extract_strided_slice %64 {offsets = [0, 384], sizes = [8, 128], strides = [1, 1]} : vector<8x512xf32> to vector<8x128xf32>
    %74 = math.tanh %73 : vector<8x128xf32>
    %75 = vector.extract_strided_slice %72 {offsets = [0, 0], sizes = [8, 128], strides = [1, 1]} : vector<8x384xf32> to vector<8x128xf32>
    %76 = vector.extract_strided_slice %72 {offsets = [0, 128], sizes = [8, 128], strides = [1, 1]} : vector<8x384xf32> to vector<8x128xf32>
    %77 = vector.extract_strided_slice %72 {offsets = [0, 256], sizes = [8, 128], strides = [1, 1]} : vector<8x384xf32> to vector<8x128xf32>
    %78 = arith.mulf %76, %54 : vector<8x128xf32>
    %79 = arith.mulf %75, %74 : vector<8x128xf32>
    %80 = arith.addf %78, %79 : vector<8x128xf32>
    %81 = math.tanh %80 : vector<8x128xf32>
    %82 = arith.mulf %77, %81 : vector<8x128xf32>
    %c127_i32_29 = arith.constant 127 : i32
    %83 = tpu.dynamic_rotate %82 by %c127_i32_29 dim 1 : vector<8x128xf32>, i32 -> vector<8x128xf32>
    %84 = arith.maximumf %82, %83 : vector<8x128xf32>
    %c0_30 = arith.constant 0 : index
    %c256 = arith.constant 256 : index
    %85 = vector.load %arg7[%c0_30, %c256] : memref<8x1024xf32, #tpu.memory_space<vmem>>, vector<8x128xf32>
    tpu.vector_store %arg7[%c0_30, %c256], %84 {strides = array<i32>} : memref<8x1024xf32, #tpu.memory_space<vmem>>, vector<8x128xf32>,
    %86 = vector.extract_strided_slice %5 {offsets = [24, 0], sizes = [8, 512], strides = [1, 1]} : vector<64x512xf32> to vector<8x512xf32>
    %87 = arith.truncf %82 : vector<8x128xf32> to vector<8x128xbf16>
    %c0_31 = arith.constant 0 : index
    %c0_32 = arith.constant 0 : index
    %88 = vector.load %arg2[%c0_31, %c0_32] : memref<128x512xbf16, #tpu.memory_space<vmem>>, vector<128x512xbf16>
    %cst_33 = arith.constant dense<0.000000e+00> : vector<8x512xf32>
    %89 = tpu.matmul %87, %88, %cst_33 {dimension_numbers = #tpu.dot_dimension_numbers<[1], [0], [0], [1], [0, 0, 1, 1], [], []>} : vector<8x128xbf16>, vector<128x512xbf16>, vector<8x512xf32> -> vector<8x512xf32>
    %90 = arith.addf %86, %89 : vector<8x512xf32>
    %91 = vector.extract_strided_slice %90 {offsets = [0, 0], sizes = [8, 384], strides = [1, 1]} : vector<8x512xf32> to vector<8x384xf32>
    %cst_34 = arith.constant 5.000000e-01 : f32
    %92 = vector.broadcast %cst_34 : f32 to vector<8x384xf32>
    %93 = arith.mulf %92, %91 : vector<8x384xf32>
    %94 = math.tanh %93 : vector<8x384xf32>
    %cst_35 = arith.constant 5.000000e-01 : f32
    %95 = vector.broadcast %cst_35 : f32 to vector<8x384xf32>
    %96 = arith.mulf %95, %94 : vector<8x384xf32>
    %cst_36 = arith.constant 5.000000e-01 : f32
    %97 = vector.broadcast %cst_36 : f32 to vector<8x384xf32>
    %98 = arith.addf %96, %97 : vector<8x384xf32>
    %99 = vector.extract_strided_slice %90 {offsets = [0, 384], sizes = [8, 128], strides = [1, 1]} : vector<8x512xf32> to vector<8x128xf32>
    %100 = math.tanh %99 : vector<8x128xf32>
    %101 = vector.extract_strided_slice %98 {offsets = [0, 0], sizes = [8, 128], strides = [1, 1]} : vector<8x384xf32> to vector<8x128xf32>
    %102 = vector.extract_strided_slice %98 {offsets = [0, 128], sizes = [8, 128], strides = [1, 1]} : vector<8x384xf32> to vector<8x128xf32>
    %103 = vector.extract_strided_slice %98 {offsets = [0, 256], sizes = [8, 128], strides = [1, 1]} : vector<8x384xf32> to vector<8x128xf32>
    %104 = arith.mulf %102, %80 : vector<8x128xf32>
    %105 = arith.mulf %101, %100 : vector<8x128xf32>
    %106 = arith.addf %104, %105 : vector<8x128xf32>
    %107 = math.tanh %106 : vector<8x128xf32>
    %108 = arith.mulf %103, %107 : vector<8x128xf32>
    %c127_i32_37 = arith.constant 127 : i32
    %109 = tpu.dynamic_rotate %108 by %c127_i32_37 dim 1 : vector<8x128xf32>, i32 -> vector<8x128xf32>
    %110 = arith.maximumf %108, %109 : vector<8x128xf32>
    %c0_38 = arith.constant 0 : index
    %c384 = arith.constant 384 : index
    %111 = vector.load %arg7[%c0_38, %c384] : memref<8x1024xf32, #tpu.memory_space<vmem>>, vector<8x128xf32>
    tpu.vector_store %arg7[%c0_38, %c384], %110 {strides = array<i32>} : memref<8x1024xf32, #tpu.memory_space<vmem>>, vector<8x128xf32>,
    %112 = vector.extract_strided_slice %5 {offsets = [32, 0], sizes = [8, 512], strides = [1, 1]} : vector<64x512xf32> to vector<8x512xf32>
    %113 = arith.truncf %108 : vector<8x128xf32> to vector<8x128xbf16>
    %c0_39 = arith.constant 0 : index
    %c0_40 = arith.constant 0 : index
    %114 = vector.load %arg2[%c0_39, %c0_40] : memref<128x512xbf16, #tpu.memory_space<vmem>>, vector<128x512xbf16>
    %cst_41 = arith.constant dense<0.000000e+00> : vector<8x512xf32>
    %115 = tpu.matmul %113, %114, %cst_41 {dimension_numbers = #tpu.dot_dimension_numbers<[1], [0], [0], [1], [0, 0, 1, 1], [], []>} : vector<8x128xbf16>, vector<128x512xbf16>, vector<8x512xf32> -> vector<8x512xf32>
    %116 = arith.addf %112, %115 : vector<8x512xf32>
    %117 = vector.extract_strided_slice %116 {offsets = [0, 0], sizes = [8, 384], strides = [1, 1]} : vector<8x512xf32> to vector<8x384xf32>
    %cst_42 = arith.constant 5.000000e-01 : f32
    %118 = vector.broadcast %cst_42 : f32 to vector<8x384xf32>
    %119 = arith.mulf %118, %117 : vector<8x384xf32>
    %120 = math.tanh %119 : vector<8x384xf32>
    %cst_43 = arith.constant 5.000000e-01 : f32
    %121 = vector.broadcast %cst_43 : f32 to vector<8x384xf32>
    %122 = arith.mulf %121, %120 : vector<8x384xf32>
    %cst_44 = arith.constant 5.000000e-01 : f32
    %123 = vector.broadcast %cst_44 : f32 to vector<8x384xf32>
    %124 = arith.addf %122, %123 : vector<8x384xf32>
    %125 = vector.extract_strided_slice %116 {offsets = [0, 384], sizes = [8, 128], strides = [1, 1]} : vector<8x512xf32> to vector<8x128xf32>
    %126 = math.tanh %125 : vector<8x128xf32>
    %127 = vector.extract_strided_slice %124 {offsets = [0, 0], sizes = [8, 128], strides = [1, 1]} : vector<8x384xf32> to vector<8x128xf32>
    %128 = vector.extract_strided_slice %124 {offsets = [0, 128], sizes = [8, 128], strides = [1, 1]} : vector<8x384xf32> to vector<8x128xf32>
    %129 = vector.extract_strided_slice %124 {offsets = [0, 256], sizes = [8, 128], strides = [1, 1]} : vector<8x384xf32> to vector<8x128xf32>
    %130 = arith.mulf %128, %106 : vector<8x128xf32>
    %131 = arith.mulf %127, %126 : vector<8x128xf32>
    %132 = arith.addf %130, %131 : vector<8x128xf32>
    %133 = math.tanh %132 : vector<8x128xf32>
    %134 = arith.mulf %129, %133 : vector<8x128xf32>
    %c127_i32_45 = arith.constant 127 : i32
    %135 = tpu.dynamic_rotate %134 by %c127_i32_45 dim 1 : vector<8x128xf32>, i32 -> vector<8x128xf32>
    %136 = arith.maximumf %134, %135 : vector<8x128xf32>
    %c0_46 = arith.constant 0 : index
    %c512 = arith.constant 512 : index
    %137 = vector.load %arg7[%c0_46, %c512] : memref<8x1024xf32, #tpu.memory_space<vmem>>, vector<8x128xf32>
    tpu.vector_store %arg7[%c0_46, %c512], %136 {strides = array<i32>} : memref<8x1024xf32, #tpu.memory_space<vmem>>, vector<8x128xf32>,
    %138 = vector.extract_strided_slice %5 {offsets = [40, 0], sizes = [8, 512], strides = [1, 1]} : vector<64x512xf32> to vector<8x512xf32>
    %139 = arith.truncf %134 : vector<8x128xf32> to vector<8x128xbf16>
    %c0_47 = arith.constant 0 : index
    %c0_48 = arith.constant 0 : index
    %140 = vector.load %arg2[%c0_47, %c0_48] : memref<128x512xbf16, #tpu.memory_space<vmem>>, vector<128x512xbf16>
    %cst_49 = arith.constant dense<0.000000e+00> : vector<8x512xf32>
    %141 = tpu.matmul %139, %140, %cst_49 {dimension_numbers = #tpu.dot_dimension_numbers<[1], [0], [0], [1], [0, 0, 1, 1], [], []>} : vector<8x128xbf16>, vector<128x512xbf16>, vector<8x512xf32> -> vector<8x512xf32>
    %142 = arith.addf %138, %141 : vector<8x512xf32>
    %143 = vector.extract_strided_slice %142 {offsets = [0, 0], sizes = [8, 384], strides = [1, 1]} : vector<8x512xf32> to vector<8x384xf32>
    %cst_50 = arith.constant 5.000000e-01 : f32
    %144 = vector.broadcast %cst_50 : f32 to vector<8x384xf32>
    %145 = arith.mulf %144, %143 : vector<8x384xf32>
    %146 = math.tanh %145 : vector<8x384xf32>
    %cst_51 = arith.constant 5.000000e-01 : f32
    %147 = vector.broadcast %cst_51 : f32 to vector<8x384xf32>
    %148 = arith.mulf %147, %146 : vector<8x384xf32>
    %cst_52 = arith.constant 5.000000e-01 : f32
    %149 = vector.broadcast %cst_52 : f32 to vector<8x384xf32>
    %150 = arith.addf %148, %149 : vector<8x384xf32>
    %151 = vector.extract_strided_slice %142 {offsets = [0, 384], sizes = [8, 128], strides = [1, 1]} : vector<8x512xf32> to vector<8x128xf32>
    %152 = math.tanh %151 : vector<8x128xf32>
    %153 = vector.extract_strided_slice %150 {offsets = [0, 0], sizes = [8, 128], strides = [1, 1]} : vector<8x384xf32> to vector<8x128xf32>
    %154 = vector.extract_strided_slice %150 {offsets = [0, 128], sizes = [8, 128], strides = [1, 1]} : vector<8x384xf32> to vector<8x128xf32>
    %155 = vector.extract_strided_slice %150 {offsets = [0, 256], sizes = [8, 128], strides = [1, 1]} : vector<8x384xf32> to vector<8x128xf32>
    %156 = arith.mulf %154, %132 : vector<8x128xf32>
    %157 = arith.mulf %153, %152 : vector<8x128xf32>
    %158 = arith.addf %156, %157 : vector<8x128xf32>
    %159 = math.tanh %158 : vector<8x128xf32>
    %160 = arith.mulf %155, %159 : vector<8x128xf32>
    %c127_i32_53 = arith.constant 127 : i32
    %161 = tpu.dynamic_rotate %160 by %c127_i32_53 dim 1 : vector<8x128xf32>, i32 -> vector<8x128xf32>
    %162 = arith.maximumf %160, %161 : vector<8x128xf32>
    %c0_54 = arith.constant 0 : index
    %c640 = arith.constant 640 : index
    %163 = vector.load %arg7[%c0_54, %c640] : memref<8x1024xf32, #tpu.memory_space<vmem>>, vector<8x128xf32>
    tpu.vector_store %arg7[%c0_54, %c640], %162 {strides = array<i32>} : memref<8x1024xf32, #tpu.memory_space<vmem>>, vector<8x128xf32>,
    %164 = vector.extract_strided_slice %5 {offsets = [48, 0], sizes = [8, 512], strides = [1, 1]} : vector<64x512xf32> to vector<8x512xf32>
    %165 = arith.truncf %160 : vector<8x128xf32> to vector<8x128xbf16>
    %c0_55 = arith.constant 0 : index
    %c0_56 = arith.constant 0 : index
    %166 = vector.load %arg2[%c0_55, %c0_56] : memref<128x512xbf16, #tpu.memory_space<vmem>>, vector<128x512xbf16>
    %cst_57 = arith.constant dense<0.000000e+00> : vector<8x512xf32>
    %167 = tpu.matmul %165, %166, %cst_57 {dimension_numbers = #tpu.dot_dimension_numbers<[1], [0], [0], [1], [0, 0, 1, 1], [], []>} : vector<8x128xbf16>, vector<128x512xbf16>, vector<8x512xf32> -> vector<8x512xf32>
    %168 = arith.addf %164, %167 : vector<8x512xf32>
    %169 = vector.extract_strided_slice %168 {offsets = [0, 0], sizes = [8, 384], strides = [1, 1]} : vector<8x512xf32> to vector<8x384xf32>
    %cst_58 = arith.constant 5.000000e-01 : f32
    %170 = vector.broadcast %cst_58 : f32 to vector<8x384xf32>
    %171 = arith.mulf %170, %169 : vector<8x384xf32>
    %172 = math.tanh %171 : vector<8x384xf32>
    %cst_59 = arith.constant 5.000000e-01 : f32
    %173 = vector.broadcast %cst_59 : f32 to vector<8x384xf32>
    %174 = arith.mulf %173, %172 : vector<8x384xf32>
    %cst_60 = arith.constant 5.000000e-01 : f32
    %175 = vector.broadcast %cst_60 : f32 to vector<8x384xf32>
    %176 = arith.addf %174, %175 : vector<8x384xf32>
    %177 = vector.extract_strided_slice %168 {offsets = [0, 384], sizes = [8, 128], strides = [1, 1]} : vector<8x512xf32> to vector<8x128xf32>
    %178 = math.tanh %177 : vector<8x128xf32>
    %179 = vector.extract_strided_slice %176 {offsets = [0, 0], sizes = [8, 128], strides = [1, 1]} : vector<8x384xf32> to vector<8x128xf32>
    %180 = vector.extract_strided_slice %176 {offsets = [0, 128], sizes = [8, 128], strides = [1, 1]} : vector<8x384xf32> to vector<8x128xf32>
    %181 = vector.extract_strided_slice %176 {offsets = [0, 256], sizes = [8, 128], strides = [1, 1]} : vector<8x384xf32> to vector<8x128xf32>
    %182 = arith.mulf %180, %158 : vector<8x128xf32>
    %183 = arith.mulf %179, %178 : vector<8x128xf32>
    %184 = arith.addf %182, %183 : vector<8x128xf32>
    %185 = math.tanh %184 : vector<8x128xf32>
    %186 = arith.mulf %181, %185 : vector<8x128xf32>
    %c127_i32_61 = arith.constant 127 : i32
    %187 = tpu.dynamic_rotate %186 by %c127_i32_61 dim 1 : vector<8x128xf32>, i32 -> vector<8x128xf32>
    %188 = arith.maximumf %186, %187 : vector<8x128xf32>
    %c0_62 = arith.constant 0 : index
    %c768 = arith.constant 768 : index
    %189 = vector.load %arg7[%c0_62, %c768] : memref<8x1024xf32, #tpu.memory_space<vmem>>, vector<8x128xf32>
    tpu.vector_store %arg7[%c0_62, %c768], %188 {strides = array<i32>} : memref<8x1024xf32, #tpu.memory_space<vmem>>, vector<8x128xf32>,
    %190 = vector.extract_strided_slice %5 {offsets = [56, 0], sizes = [8, 512], strides = [1, 1]} : vector<64x512xf32> to vector<8x512xf32>
    %191 = arith.truncf %186 : vector<8x128xf32> to vector<8x128xbf16>
    %c0_63 = arith.constant 0 : index
    %c0_64 = arith.constant 0 : index
    %192 = vector.load %arg2[%c0_63, %c0_64] : memref<128x512xbf16, #tpu.memory_space<vmem>>, vector<128x512xbf16>
    %cst_65 = arith.constant dense<0.000000e+00> : vector<8x512xf32>
    %193 = tpu.matmul %191, %192, %cst_65 {dimension_numbers = #tpu.dot_dimension_numbers<[1], [0], [0], [1], [0, 0, 1, 1], [], []>} : vector<8x128xbf16>, vector<128x512xbf16>, vector<8x512xf32> -> vector<8x512xf32>
    %194 = arith.addf %190, %193 : vector<8x512xf32>
    %195 = vector.extract_strided_slice %194 {offsets = [0, 0], sizes = [8, 384], strides = [1, 1]} : vector<8x512xf32> to vector<8x384xf32>
    %cst_66 = arith.constant 5.000000e-01 : f32
    %196 = vector.broadcast %cst_66 : f32 to vector<8x384xf32>
    %197 = arith.mulf %196, %195 : vector<8x384xf32>
    %198 = math.tanh %197 : vector<8x384xf32>
    %cst_67 = arith.constant 5.000000e-01 : f32
    %199 = vector.broadcast %cst_67 : f32 to vector<8x384xf32>
    %200 = arith.mulf %199, %198 : vector<8x384xf32>
    %cst_68 = arith.constant 5.000000e-01 : f32
    %201 = vector.broadcast %cst_68 : f32 to vector<8x384xf32>
    %202 = arith.addf %200, %201 : vector<8x384xf32>
    %203 = vector.extract_strided_slice %194 {offsets = [0, 384], sizes = [8, 128], strides = [1, 1]} : vector<8x512xf32> to vector<8x128xf32>
    %204 = math.tanh %203 : vector<8x128xf32>
    %205 = vector.extract_strided_slice %202 {offsets = [0, 0], sizes = [8, 128], strides = [1, 1]} : vector<8x384xf32> to vector<8x128xf32>
    %206 = vector.extract_strided_slice %202 {offsets = [0, 128], sizes = [8, 128], strides = [1, 1]} : vector<8x384xf32> to vector<8x128xf32>
    %207 = vector.extract_strided_slice %202 {offsets = [0, 256], sizes = [8, 128], strides = [1, 1]} : vector<8x384xf32> to vector<8x128xf32>
    %208 = arith.mulf %206, %184 : vector<8x128xf32>
    %209 = arith.mulf %205, %204 : vector<8x128xf32>
    %210 = arith.addf %208, %209 : vector<8x128xf32>
    %211 = math.tanh %210 : vector<8x128xf32>
    %212 = arith.mulf %207, %211 : vector<8x128xf32>
    %c127_i32_69 = arith.constant 127 : i32
    %213 = tpu.dynamic_rotate %212 by %c127_i32_69 dim 1 : vector<8x128xf32>, i32 -> vector<8x128xf32>
    %214 = arith.maximumf %212, %213 : vector<8x128xf32>
    %c0_70 = arith.constant 0 : index
    %c896 = arith.constant 896 : index
    %215 = vector.load %arg7[%c0_70, %c896] : memref<8x1024xf32, #tpu.memory_space<vmem>>, vector<8x128xf32>
    tpu.vector_store %arg7[%c0_70, %c896], %214 {strides = array<i32>} : memref<8x1024xf32, #tpu.memory_space<vmem>>, vector<8x128xf32>,
    %c0_71 = arith.constant 0 : index
    %c0_72 = arith.constant 0 : index
    %216 = vector.load %arg7[%c0_71, %c0_72] : memref<8x1024xf32, #tpu.memory_space<vmem>>, vector<8x1024xf32>
    %217 = arith.truncf %216 : vector<8x1024xf32> to vector<8x1024xbf16>
    %c0_73 = arith.constant 0 : index
    %c0_74 = arith.constant 0 : index
    %218 = vector.load %arg4[%c0_73, %c0_74] : memref<1024x32xbf16, #tpu.memory_space<vmem>>, vector<1024x32xbf16>
    %cst_75 = arith.constant dense<0.000000e+00> : vector<8x32xf32>
    %219 = tpu.matmul %217, %218, %cst_75 {dimension_numbers = #tpu.dot_dimension_numbers<[1], [0], [0], [1], [0, 0, 1, 1], [], []>} : vector<8x1024xbf16>, vector<1024x32xbf16>, vector<8x32xf32> -> vector<8x32xf32>
    %c0_76 = arith.constant 0 : index
    %c0_77 = arith.constant 0 : index
    %220 = vector.load %arg5[%c0_76, %c0_77] : memref<1x32xf32, #tpu.memory_space<vmem>>, vector<1x32xf32>
    %221 = vector.broadcast %220 : vector<1x32xf32> to vector<8x32xf32>
    %222 = arith.addf %219, %221 : vector<8x32xf32>
    %223 = vector.extract_strided_slice %222 {offsets = [0, 0], sizes = [2, 32], strides = [1, 1]} : vector<8x32xf32> to vector<2x32xf32>
    %cst_78 = arith.constant 0.000000e+00 : f32
    %224 = vector.broadcast %cst_78 : f32 to vector<2x32xf32>
    %225 = arith.maximumf %223, %224 : vector<2x32xf32>
    %c0_79 = arith.constant 0 : index
    %c0_80 = arith.constant 0 : index
    %226 = vector.load %arg6[%c0_79, %c0_80] : memref<2x32xf32, #tpu.memory_space<vmem>>, vector<2x32xf32>
    tpu.vector_store %arg6[%c0_79, %c0_80], %225 {strides = array<i32>} : memref<2x32xf32, #tpu.memory_space<vmem>>, vector<2x32xf32>,
    return
  }
}

</mosaic_0001>

<llo_original>
// kernel: blstm_python_feature_net.1
$region0: #{blstm_python_feature_net.1}
  #allocation0 [shape = 'u32[]', space=smem, size = 0x4, offset = 0x4, fixed_abs, tag = 'smem constant byte address 0x4 - core index']
  #allocation1 [shape = 'u32[144,128]{1,0:T(1,128)}', space=vmem, size = 0x12000, scoped, tag = 'internal scratch']
  #allocation2 [shape = 'f32[8,1024]{1,0:T(8,128)}', space=vmem, size = 0x8000, scoped, tag = 'scratch operand']
  %s0 = inlined_call_operand.vmem [shape: bf16[64,32], index: 0, kind: input, shape index: {}]
  %s1 = inlined_call_operand.vmem [shape: bf16[32,512], index: 1, kind: input, shape index: {}]
  %s2 = inlined_call_operand.vmem [shape: bf16[128,512], index: 2, kind: input, shape index: {}]
  %s3 = inlined_call_operand.vmem [shape: f32[1,512], index: 3, kind: input, shape index: {}]
  %s4 = inlined_call_operand.vmem [shape: bf16[1024,32], index: 4, kind: input, shape index: {}]
  %s5 = inlined_call_operand.vmem [shape: f32[1,32], index: 5, kind: input, shape index: {}]
  %s6 = inlined_call_operand.hbm [shape: f32[2,32], index: 6, kind: output, shape index: {}]
  %s7 = sld [smem:[#allocation0]]
  $region34: #{blstm_python_feature_net.1} parent=0
    _
  %s9 = ssub.s32 1, %s7
  %s10 = scalar_select 0, %s9, %s7
  $region1: #{blstm_python_feature_net.1} parent=0
    #allocation3 [shape = 'u8[1024]{0}', space=vmem, size = 0x400, scoped, tag = 'output window, operand 0, single buffered']
    #allocation4 [shape = 's32[1]{0}', space=sflag, size = 0x4, scoped, tag = 'scoped memory for blstm_python_feature_net.1']
    %11 = vsyncpa [#allocation4], 0
    // Predicated region
    $region2: #{blstm_python_feature_net.1} parent=1 // pred_check
      _
    $region3: #{blstm_python_feature_net.1} parent=1 // pred_check_branch
      %13 = sbr.rel (0) target = $region5
    $region4: #{blstm_python_feature_net.1} parent=1 // pred_region
      _
    $region5: #{blstm_python_feature_net.1} parent=1 // pred_fallthru
      _
    // Predicated region
    $region6: #{blstm_python_feature_net.1} parent=1 // pred_check
      _
    $region7: #{blstm_python_feature_net.1} parent=1 // pred_check_branch
      %15 = sbr.rel (0) target = $region9
    $region8: #{blstm_python_feature_net.1} parent=1 // pred_region
      _
    $region9: #{blstm_python_feature_net.1} parent=1 // pred_fallthru
      _
    // Predicated region
    $region10: #{blstm_python_feature_net.1} parent=1 // pred_check
      _
    $region11: #{blstm_python_feature_net.1} parent=1 // pred_check_branch
      %17 = sbr.rel (0) target = $region13
    $region12: #{blstm_python_feature_net.1} parent=1 // pred_region
      _
    $region13: #{blstm_python_feature_net.1} parent=1 // pred_fallthru
      _
    // Predicated region
    $region14: #{blstm_python_feature_net.1} parent=1 // pred_check
      _
    $region15: #{blstm_python_feature_net.1} parent=1 // pred_check_branch
      %19 = sbr.rel (0) target = $region17
    $region16: #{blstm_python_feature_net.1} parent=1 // pred_region
      _
    $region17: #{blstm_python_feature_net.1} parent=1 // pred_fallthru
      _
    // Predicated region
    $region18: #{blstm_python_feature_net.1} parent=1 // pred_check
      _
    $region19: #{blstm_python_feature_net.1} parent=1 // pred_check_branch
      %21 = sbr.rel (0) target = $region21
    $region20: #{blstm_python_feature_net.1} parent=1 // pred_region
      _
    $region21: #{blstm_python_feature_net.1} parent=1 // pred_fallthru
      _
    // Predicated region
    $region22: #{blstm_python_feature_net.1} parent=1 // pred_check
      _
    $region23: #{blstm_python_feature_net.1} parent=1 // pred_check_branch
      %23 = sbr.rel (0) target = $region25
    $region24: #{blstm_python_feature_net.1} parent=1 // pred_region
      _
    $region25: #{blstm_python_feature_net.1} parent=1 // pred_fallthru
      _
    %v25 = vld [vmem:[%s0] sm:$0xf]
    %v26 = vld [vmem:[%s0 + $0x4] sm:$0xf]
    %v27 = vld [vmem:[%s0 + $0x8] sm:$0xf]
    %v28 = vld [vmem:[%s0 + $0xc] sm:$0xf]
    %v29 = vld [vmem:[%s0 + $0x10] sm:$0xf]
    %v30 = vld [vmem:[%s0 + $0x14] sm:$0xf]
    %v31 = vld [vmem:[%s0 + $0x18] sm:$0xf]
    %v32 = vld [vmem:[%s0 + $0x1c] sm:$0xf]
    %v33 = vld [vmem:[%s1] sm:$0xff]
    %v34 = vld [vmem:[%s1 + $0x8] sm:$0xff]
    %v35 = vld [vmem:[%s1 + $0x10] sm:$0xff]
    %v36 = vld [vmem:[%s1 + $0x18] sm:$0xff]
    %v37 = vld [vmem:[%s1 + $0x20] sm:$0xff]
    %v38 = vld [vmem:[%s1 + $0x28] sm:$0xff]
    %v39 = vld [vmem:[%s1 + $0x30] sm:$0xff]
    %v40 = vld [vmem:[%s1 + $0x38] sm:$0xff]
    %v41 = vld [vmem:[%s3] sm:$0xf]
    %v43 = vlaneseq
    %v44 = vshrl.u32 %v43, 7
    %v45 = vsub.s32 0, %v44
    %v46 = vrot.slane %v41, %v45
    %v47 = vlaneseq
    %v48 = vshrl.u32 %v47, 7
    %v49 = vsub.s32 1, %v48
    %v50 = vrot.slane %v41, %v49
    %v51 = vlaneseq
    %v52 = vshrl.u32 %v51, 7
    %v53 = vsub.s32 2, %v52
    %v54 = vrot.slane %v41, %v53
    %v55 = vlaneseq
    %v56 = vshrl.u32 %v55, 7
    %v57 = vsub.s32 3, %v56
    %v58 = vrot.slane %v41, %v57
    %v71 = vunpack.c.l.b16 %v25
    %v72 = vunpack.c.l.b16 %v26
    %v73 = vunpack.c.l.b16 %v27
    %v74 = vunpack.c.l.b16 %v28
    %v75 = vunpack.c.l.b16 %v29
    %v76 = vunpack.c.l.b16 %v30
    %v77 = vunpack.c.l.b16 %v31
    %v78 = vunpack.c.l.b16 %v32
    %v79 = vpack.c.b16 %v72, %v71
    %v80 = vpack.c.b16 %v74, %v73
    %v81 = vpack.c.b16 %v76, %v75
    %v82 = vpack.c.b16 %v78, %v77
    %v91 = vunpack.c.l.b16 %v33
    %v92 = vunpack.c.h.b16 %v33
    %v93 = vunpack.c.l.b16 %v34
    %v94 = vunpack.c.h.b16 %v34
    %v95 = vunpack.c.l.b16 %v35
    %v96 = vunpack.c.h.b16 %v35
    %v97 = vunpack.c.l.b16 %v36
    %v98 = vunpack.c.h.b16 %v36
    %v99 = vunpack.c.l.b16 %v37
    %v100 = vunpack.c.h.b16 %v37
    %v101 = vunpack.c.l.b16 %v38
    %v102 = vunpack.c.h.b16 %v38
    %v103 = vunpack.c.l.b16 %v39
    %v104 = vunpack.c.h.b16 %v39
    %v105 = vunpack.c.l.b16 %v40
    %v106 = vunpack.c.h.b16 %v40
    %v107 = vpack.c.b16 %v95, %v91
    %v108 = vpack.c.b16 %v96, %v92
    %v109 = vpack.c.b16 %v97, %v93
    %v110 = vpack.c.b16 %v98, %v94
    %v111 = vpack.c.b16 %v103, %v99
    %v112 = vpack.c.b16 %v104, %v100
    %v113 = vpack.c.b16 %v105, %v101
    %v114 = vpack.c.b16 %v106, %v102
    %vm123 = vcmask 261120
    %v125 = vsel %vm123, %v79, 0
    %v128 = vsel %vm123, %v80, 0
    %v131 = vsel %vm123, %v81, 0
    %v134 = vsel %vm123, %v82, 0
    %136 = vmatprep.subr.bf16.mxu0 %v108
    %137 = vmatpush1.bf16.msra.mxu0 %v107
    %138 = vmatprep.subr.bf16.mxu0 %v112
    %139 = vmatpush1.bf16.msra.mxu0 %v111
    %140 = vmatprep.subr.bf16.mxu0 0
    %141 = vmatpush1.bf16.msra.mxu0 0
    %142 = vmatprep.subr.bf16.mxu0 0
    %143 = vmatpush1.bf16.msra.mxu0 0
    %144 = vmatprep.subr.bf16.mxu0 0
    %145 = vmatpush1.bf16.msra.mxu0 0
    %146 = vmatprep.subr.bf16.mxu0 0
    %147 = vmatpush1.bf16.msra.mxu0 0
    %148 = vmatprep.subr.bf16.mxu0 0
    %149 = vmatpush1.bf16.msra.mxu0 0
    %150 = vmatprep.subr.bf16.mxu0 0
    %151 = vmatpush1.bf16.msra.mxu0 0
    %152 = vmatprep.subr.bf16.mxu0 0
    %153 = vmatpush1.bf16.msra.mxu0 0
    %154 = vmatprep.subr.bf16.mxu0 0
    %155 = vmatpush1.bf16.msra.mxu0 0
    %156 = vmatprep.subr.bf16.mxu0 0
    %157 = vmatpush1.bf16.msra.mxu0 0
    %158 = vmatprep.subr.bf16.mxu0 0
    %159 = vmatpush1.bf16.msra.mxu0 0
    %160 = vmatprep.subr.bf16.mxu0 0
    %161 = vmatpush1.bf16.msra.mxu0 0
    %162 = vmatprep.subr.bf16.mxu0 0
    %163 = vmatpush1.bf16.msra.mxu0 0
    %164 = vmatprep.subr.bf16.mxu0 0
    %165 = vmatpush1.bf16.msra.mxu0 0
    %166 = vmatprep.subr.bf16.mxu0 0
    %167 = vmatpush1.bf16.msra.mxu0 0
    %168 = vmatprep.mubr.bf16.mxu0 0
    %169 = vmatmul.mubr.bf16.gmra.mrb[0].mxu0 %v125
    %v170 = vpop.f32.mrb[0].mxu0
    %v171 = vadd.f32 %v46, %v170
    %v172 = vpop.f32.mrb[0].mxu0
    %v173 = vadd.f32 %v50, %v172
    %v174 = vpop.f32.mrb[0].mxu0
    %v175 = vadd.f32 %v46, %v174
    %v176 = vpop.f32.mrb[0].mxu0
    %v177 = vadd.f32 %v50, %v176
    %178 = vmatprep.mubr.bf16.mxu0 0
    %179 = vmatmul.mubr.bf16.gmra.mrb[0].mxu0 %v128
    %v180 = vpop.f32.mrb[0].mxu0
    %v181 = vadd.f32 %v46, %v180
    %v182 = vpop.f32.mrb[0].mxu0
    %v183 = vadd.f32 %v50, %v182
    %v184 = vpop.f32.mrb[0].mxu0
    %v185 = vadd.f32 %v46, %v184
    %v186 = vpop.f32.mrb[0].mxu0
    %v187 = vadd.f32 %v50, %v186
    %188 = vmatprep.mubr.bf16.mxu0 0
    %189 = vmatmul.mubr.bf16.gmra.mrb[0].mxu0 %v131
    %v190 = vpop.f32.mrb[0].mxu0
    %v191 = vadd.f32 %v46, %v190
    %v192 = vpop.f32.mrb[0].mxu0
    %v193 = vadd.f32 %v50, %v192
    %v194 = vpop.f32.mrb[0].mxu0
    %v195 = vadd.f32 %v46, %v194
    %v196 = vpop.f32.mrb[0].mxu0
    %v197 = vadd.f32 %v50, %v196
    %198 = vmatprep.mubr.bf16.mxu0 0
    %199 = vmatmul.mubr.bf16.gmra.mrb[0].mxu0 %v134
    %v200 = vpop.f32.mrb[0].mxu0
    %v201 = vadd.f32 %v46, %v200
    %v202 = vpop.f32.mrb[0].mxu0
    %v203 = vadd.f32 %v50, %v202
    %v204 = vpop.f32.mrb[0].mxu0
    %v205 = vadd.f32 %v46, %v204
    %v206 = vpop.f32.mrb[0].mxu0
    %v207 = vadd.f32 %v50, %v206
    %208 = vdwg.mxu0
    %209 = vmatprep.subr.bf16.mxu0 %v110
    %210 = vmatpush1.bf16.msra.mxu0 %v109
    %211 = vmatprep.subr.bf16.mxu0 %v114
    %212 = vmatpush1.bf16.msra.mxu0 %v113
    %213 = vmatprep.subr.bf16.mxu0 0
    %214 = vmatpush1.bf16.msra.mxu0 0
    %215 = vmatprep.subr.bf16.mxu0 0
    %216 = vmatpush1.bf16.msra.mxu0 0
    %217 = vmatprep.subr.bf16.mxu0 0
    %218 = vmatpush1.bf16.msra.mxu0 0
    %219 = vmatprep.subr.bf16.mxu0 0
    %220 = vmatpush1.bf16.msra.mxu0 0
    %221 = vmatprep.subr.bf16.mxu0 0
    %222 = vmatpush1.bf16.msra.mxu0 0
    %223 = vmatprep.subr.bf16.mxu0 0
    %224 = vmatpush1.bf16.msra.mxu0 0
    %225 = vmatprep.subr.bf16.mxu0 0
    %226 = vmatpush1.bf16.msra.mxu0 0
    %227 = vmatprep.subr.bf16.mxu0 0
    %228 = vmatpush1.bf16.msra.mxu0 0
    %229 = vmatprep.subr.bf16.mxu0 0
    %230 = vmatpush1.bf16.msra.mxu0 0
    %231 = vmatprep.subr.bf16.mxu0 0
    %232 = vmatpush1.bf16.msra.mxu0 0
    %233 = vmatprep.subr.bf16.mxu0 0
    %234 = vmatpush1.bf16.msra.mxu0 0
    %235 = vmatprep.subr.bf16.mxu0 0
    %236 = vmatpush1.bf16.msra.mxu0 0
    %237 = vmatprep.subr.bf16.mxu0 0
    %238 = vmatpush1.bf16.msra.mxu0 0
    %239 = vmatprep.subr.bf16.mxu0 0
    %240 = vmatpush1.bf16.msra.mxu0 0
    %241 = vmatprep.mubr.bf16.mxu0 0
    %242 = vmatmul.mubr.bf16.gmra.mrb[0].mxu0 %v125
    %v243 = vpop.f32.mrb[0].mxu0
    %v244 = vadd.f32 %v54, %v243
    %v245 = vpop.f32.mrb[0].mxu0
    %v246 = vadd.f32 %v58, %v245
    %v247 = vpop.f32.mrb[0].mxu0
    %v248 = vadd.f32 %v54, %v247
    %v249 = vpop.f32.mrb[0].mxu0
    %v250 = vadd.f32 %v58, %v249
    %251 = vmatprep.mubr.bf16.mxu0 0
    %252 = vmatmul.mubr.bf16.gmra.mrb[0].mxu0 %v128
    %v253 = vpop.f32.mrb[0].mxu0
    %v254 = vadd.f32 %v54, %v253
    %v255 = vpop.f32.mrb[0].mxu0
    %v256 = vadd.f32 %v58, %v255
    %v257 = vpop.f32.mrb[0].mxu0
    %v258 = vadd.f32 %v54, %v257
    %v259 = vpop.f32.mrb[0].mxu0
    %v260 = vadd.f32 %v58, %v259
    %261 = vmatprep.mubr.bf16.mxu0 0
    %262 = vmatmul.mubr.bf16.gmra.mrb[0].mxu0 %v131
    %v263 = vpop.f32.mrb[0].mxu0
    %v264 = vadd.f32 %v54, %v263
    %v265 = vpop.f32.mrb[0].mxu0
    %v266 = vadd.f32 %v58, %v265
    %v267 = vpop.f32.mrb[0].mxu0
    %v268 = vadd.f32 %v54, %v267
    %v269 = vpop.f32.mrb[0].mxu0
    %v270 = vadd.f32 %v58, %v269
    %271 = vmatprep.mubr.bf16.mxu0 0
    %272 = vmatmul.mubr.bf16.gmra.mrb[0].mxu0 %v134
    %v273 = vpop.f32.mrb[0].mxu0
    %v274 = vadd.f32 %v54, %v273
    %v275 = vpop.f32.mrb[0].mxu0
    %v276 = vadd.f32 %v58, %v275
    %v277 = vpop.f32.mrb[0].mxu0
    %v278 = vadd.f32 %v54, %v277
    %v279 = vpop.f32.mrb[0].mxu0
    %v280 = vadd.f32 %v58, %v279
    %281 = vdwg.mxu0
    %v282 = vld [vmem:[%s2] sm:$0xff]
    %v283 = vld [vmem:[%s2 + $0x8] sm:$0xff]
    %v284 = vld [vmem:[%s2 + $0x10] sm:$0xff]
    %v285 = vld [vmem:[%s2 + $0x18] sm:$0xff]
    %v286 = vld [vmem:[%s2 + $0x20] sm:$0xff]
    %v287 = vld [vmem:[%s2 + $0x28] sm:$0xff]
    %v288 = vld [vmem:[%s2 + $0x30] sm:$0xff]
    %v289 = vld [vmem:[%s2 + $0x38] sm:$0xff]
    %v290 = vld [vmem:[%s2 + $0x40] sm:$0xff]
    %v291 = vld [vmem:[%s2 + $0x48] sm:$0xff]
    %v292 = vld [vmem:[%s2 + $0x50] sm:$0xff]
    %v293 = vld [vmem:[%s2 + $0x58] sm:$0xff]
    %v294 = vld [vmem:[%s2 + $0x60] sm:$0xff]
    %v295 = vld [vmem:[%s2 + $0x68] sm:$0xff]
    %v296 = vld [vmem:[%s2 + $0x70] sm:$0xff]
    %v297 = vld [vmem:[%s2 + $0x78] sm:$0xff]
    %v298 = vld [vmem:[%s2 + $0x80] sm:$0xff]
    %v299 = vld [vmem:[%s2 + $0x88] sm:$0xff]
    %v300 = vld [vmem:[%s2 + $0x90] sm:$0xff]
    %v301 = vld [vmem:[%s2 + $0x98] sm:$0xff]
    %v302 = vld [vmem:[%s2 + $0xa0] sm:$0xff]
    %v303 = vld [vmem:[%s2 + $0xa8] sm:$0xff]
    %v304 = vld [vmem:[%s2 + $0xb0] sm:$0xff]
    %v305 = vld [vmem:[%s2 + $0xb8] sm:$0xff]
    %v306 = vld [vmem:[%s2 + $0xc0] sm:$0xff]
    %v307 = vld [vmem:[%s2 + $0xc8] sm:$0xff]
    %v308 = vld [vmem:[%s2 + $0xd0] sm:$0xff]
    %v309 = vld [vmem:[%s2 + $0xd8] sm:$0xff]
    %v310 = vld [vmem:[%s2 + $0xe0] sm:$0xff]
    %v311 = vld [vmem:[%s2 + $0xe8] sm:$0xff]
    %v312 = vld [vmem:[%s2 + $0xf0] sm:$0xff]
    %v313 = vld [vmem:[%s2 + $0xf8] sm:$0xff]
    %v346 = vunpack.c.l.b16 %v282
    %v347 = vunpack.c.h.b16 %v282
    %v348 = vunpack.c.l.b16 %v283
    %v349 = vunpack.c.h.b16 %v283
    %v350 = vunpack.c.l.b16 %v284
    %v351 = vunpack.c.h.b16 %v284
    %v352 = vunpack.c.l.b16 %v285
    %v353 = vunpack.c.h.b16 %v285
    %v354 = vunpack.c.l.b16 %v286
    %v355 = vunpack.c.h.b16 %v286
    %v356 = vunpack.c.l.b16 %v287
    %v357 = vunpack.c.h.b16 %v287
    %v358 = vunpack.c.l.b16 %v288
    %v359 = vunpack.c.h.b16 %v288
    %v360 = vunpack.c.l.b16 %v289
    %v361 = vunpack.c.h.b16 %v289
    %v362 = vunpack.c.l.b16 %v290
    %v363 = vunpack.c.h.b16 %v290
    %v364 = vunpack.c.l.b16 %v291
    %v365 = vunpack.c.h.b16 %v291
    %v366 = vunpack.c.l.b16 %v292
    %v367 = vunpack.c.h.b16 %v292
    %v368 = vunpack.c.l.b16 %v293
    %v369 = vunpack.c.h.b16 %v293
    %v370 = vunpack.c.l.b16 %v294
    %v371 = vunpack.c.h.b16 %v294
    %v372 = vunpack.c.l.b16 %v295
    %v373 = vunpack.c.h.b16 %v295
    %v374 = vunpack.c.l.b16 %v296
    %v375 = vunpack.c.h.b16 %v296
    %v376 = vunpack.c.l.b16 %v297
    %v377 = vunpack.c.h.b16 %v297
    %v378 = vunpack.c.l.b16 %v298
    %v379 = vunpack.c.h.b16 %v298
    %v380 = vunpack.c.l.b16 %v299
    %v381 = vunpack.c.h.b16 %v299
    %v382 = vunpack.c.l.b16 %v300
    %v383 = vunpack.c.h.b16 %v300
    %v384 = vunpack.c.l.b16 %v301
    %v385 = vunpack.c.h.b16 %v301
    %v386 = vunpack.c.l.b16 %v302
    %v387 = vunpack.c.h.b16 %v302
    %v388 = vunpack.c.l.b16 %v303
    %v389 = vunpack.c.h.b16 %v303
    %v390 = vunpack.c.l.b16 %v304
    %v391 = vunpack.c.h.b16 %v304
    %v392 = vunpack.c.l.b16 %v305
    %v393 = vunpack.c.h.b16 %v305
    %v394 = vunpack.c.l.b16 %v306
    %v395 = vunpack.c.h.b16 %v306
    %v396 = vunpack.c.l.b16 %v307
    %v397 = vunpack.c.h.b16 %v307
    %v398 = vunpack.c.l.b16 %v308
    %v399 = vunpack.c.h.b16 %v308
    %v400 = vunpack.c.l.b16 %v309
    %v401 = vunpack.c.h.b16 %v309
    %v402 = vunpack.c.l.b16 %v310
    %v403 = vunpack.c.h.b16 %v310
    %v404 = vunpack.c.l.b16 %v311
    %v405 = vunpack.c.h.b16 %v311
    %v406 = vunpack.c.l.b16 %v312
    %v407 = vunpack.c.h.b16 %v312
    %v408 = vunpack.c.l.b16 %v313
    %v409 = vunpack.c.h.b16 %v313
    %v410 = vpack.c.b16 %v350, %v346
    %v411 = vpack.c.b16 %v351, %v347
    %v412 = vpack.c.b16 %v352, %v348
    %v413 = vpack.c.b16 %v353, %v349
    %v414 = vpack.c.b16 %v358, %v354
    %v415 = vpack.c.b16 %v359, %v355
    %v416 = vpack.c.b16 %v360, %v356
    %v417 = vpack.c.b16 %v361, %v357
    %v418 = vpack.c.b16 %v366, %v362
    %v419 = vpack.c.b16 %v367, %v363
    %v420 = vpack.c.b16 %v368, %v364
    %v421 = vpack.c.b16 %v369, %v365
    %v422 = vpack.c.b16 %v374, %v370
    %v423 = vpack.c.b16 %v375, %v371
    %v424 = vpack.c.b16 %v376, %v372
    %v425 = vpack.c.b16 %v377, %v373
    %v426 = vpack.c.b16 %v382, %v378
    %v427 = vpack.c.b16 %v383, %v379
    %v428 = vpack.c.b16 %v384, %v380
    %v429 = vpack.c.b16 %v385, %v381
    %v430 = vpack.c.b16 %v390, %v386
    %v431 = vpack.c.b16 %v391, %v387
    %v432 = vpack.c.b16 %v392, %v388
    %v433 = vpack.c.b16 %v393, %v389
    %v434 = vpack.c.b16 %v398, %v394
    %v435 = vpack.c.b16 %v399, %v395
    %v436 = vpack.c.b16 %v400, %v396
    %v437 = vpack.c.b16 %v401, %v397
    %v438 = vpack.c.b16 %v406, %v402
    %v439 = vpack.c.b16 %v407, %v403
    %v440 = vpack.c.b16 %v408, %v404
    %v441 = vpack.c.b16 %v409, %v405
    %474 = vmatprep.subr.bf16.mxu0 %v411
    %475 = vmatpush1.bf16.msra.mxu0 %v410
    %476 = vmatprep.subr.bf16.mxu0 %v415
    %477 = vmatpush1.bf16.msra.mxu0 %v414
    %478 = vmatprep.subr.bf16.mxu0 %v419
    %479 = vmatpush1.bf16.msra.mxu0 %v418
    %480 = vmatprep.subr.bf16.mxu0 %v423
    %481 = vmatpush1.bf16.msra.mxu0 %v422
    %482 = vmatprep.subr.bf16.mxu0 %v427
    %483 = vmatpush1.bf16.msra.mxu0 %v426
    %484 = vmatprep.subr.bf16.mxu0 %v431
    %485 = vmatpush1.bf16.msra.mxu0 %v430
    %486 = vmatprep.subr.bf16.mxu0 %v435
    %487 = vmatpush1.bf16.msra.mxu0 %v434
    %488 = vmatprep.subr.bf16.mxu0 %v439
    %489 = vmatpush1.bf16.msra.mxu0 %v438
    %490 = vmatprep.subr.bf16.mxu0 0
    %491 = vmatpush1.bf16.msra.mxu0 0
    %492 = vmatprep.subr.bf16.mxu0 0
    %493 = vmatpush1.bf16.msra.mxu0 0
    %494 = vmatprep.subr.bf16.mxu0 0
    %495 = vmatpush1.bf16.msra.mxu0 0
    %496 = vmatprep.subr.bf16.mxu0 0
    %497 = vmatpush1.bf16.msra.mxu0 0
    %498 = vmatprep.subr.bf16.mxu0 0
    %499 = vmatpush1.bf16.msra.mxu0 0
    %500 = vmatprep.subr.bf16.mxu0 0
    %501 = vmatpush1.bf16.msra.mxu0 0
    %502 = vmatprep.subr.bf16.mxu0 0
    %503 = vmatpush1.bf16.msra.mxu0 0
    %504 = vmatprep.subr.bf16.mxu0 0
    %505 = vmatpush1.bf16.msra.mxu0 0
    %506 = vmatprep.mubr.bf16.mxu0 0
    %507 = vmatmul.mubr.bf16.gmra.mrb[0].mxu0 0
    %v508 = vpop.f32.mrb[0].mxu0
    %v509 = vadd.f32 0.0, %v508
    %v510 = vpop.f32.mrb[0].mxu0
    %v511 = vadd.f32 0.0, %v510
    %v512 = vpop.f32.mrb[0].mxu0
    %v513 = vpop.f32.mrb[0].mxu0
    %514 = vdwg.mxu0
    %515 = vmatprep.subr.bf16.mxu0 %v413
    %516 = vmatpush1.bf16.msra.mxu0 %v412
    %517 = vmatprep.subr.bf16.mxu0 %v417
    %518 = vmatpush1.bf16.msra.mxu0 %v416
    %519 = vmatprep.subr.bf16.mxu0 %v421
    %520 = vmatpush1.bf16.msra.mxu0 %v420
    %521 = vmatprep.subr.bf16.mxu0 %v425
    %522 = vmatpush1.bf16.msra.mxu0 %v424
    %523 = vmatprep.subr.bf16.mxu0 %v429
    %524 = vmatpush1.bf16.msra.mxu0 %v428
    %525 = vmatprep.subr.bf16.mxu0 %v433
    %526 = vmatpush1.bf16.msra.mxu0 %v432
    %527 = vmatprep.subr.bf16.mxu0 %v437
    %528 = vmatpush1.bf16.msra.mxu0 %v436
    %529 = vmatprep.subr.bf16.mxu0 %v441
    %530 = vmatpush1.bf16.msra.mxu0 %v440
    %531 = vmatprep.subr.bf16.mxu0 0
    %532 = vmatpush1.bf16.msra.mxu0 0
    %533 = vmatprep.subr.bf16.mxu0 0
    %534 = vmatpush1.bf16.msra.mxu0 0
    %535 = vmatprep.subr.bf16.mxu0 0
    %536 = vmatpush1.bf16.msra.mxu0 0
    %537 = vmatprep.subr.bf16.mxu0 0
    %538 = vmatpush1.bf16.msra.mxu0 0
    %539 = vmatprep.subr.bf16.mxu0 0
    %540 = vmatpush1.bf16.msra.mxu0 0
    %541 = vmatprep.subr.bf16.mxu0 0
    %542 = vmatpush1.bf16.msra.mxu0 0
    %543 = vmatprep.subr.bf16.mxu0 0
    %544 = vmatpush1.bf16.msra.mxu0 0
    %545 = vmatprep.subr.bf16.mxu0 0
    %546 = vmatpush1.bf16.msra.mxu0 0
    %547 = vmatprep.mubr.bf16.mxu0 0
    %548 = vmatmul.mubr.bf16.gmra.mrb[0].mxu0 0
    %v549 = vpop.f32.mrb[0].mxu0
    %v550 = vadd.f32 0.0, %v549
    %v551 = vpop.f32.mrb[0].mxu0
    %v552 = vadd.f32 0.0, %v551
    %v553 = vpop.f32.mrb[0].mxu0
    %v554 = vpop.f32.mrb[0].mxu0
    %555 = vdwg.mxu0
    %v556 = vadd.f32 %v171, %v509
    %v557 = vadd.f32 %v173, %v511
    %v558 = vadd.f32 %v244, %v550
    %v559 = vadd.f32 %v246, %v552
    %v560 = vmul.f32 %v556, 0.5
    %v561 = vmul.f32 %v557, 0.5
    %v562 = vmul.f32 %v558, 0.5
    %v563 = vtanh.pop %v560
    %v564 = vtanh.pop %v561
    %v565 = vtanh.pop %v562
    %v566 = vmul.f32 %v563, 0.5
    %v567 = vmul.f32 %v564, 0.5
    %v568 = vmul.f32 %v565, 0.5
    %v569 = vadd.f32 %v566, 0.5
    %v570 = vadd.f32 %v567, 0.5
    %v571 = vadd.f32 %v568, 0.5
    %v572 = vtanh.pop %v559
    %v573 = vmul.f32 %v570, 0.0
    %v574 = vmul.f32 %v569, %v572
    %v575 = vadd.f32 %v573, %v574
    %v576 = vtanh.pop %v575
    %v577 = vmul.f32 %v571, %v576
    %578 = vrot.lane.b32.xlu0 %v577, 127
    %v579 = vpop.permute.xlu0 %578
    %v580 = vmax.f32 %v577, %v579
    %581 = vst [vmem:[#allocation2] sm:$0xff] %v580
    %v582 = vpack.c.bf16 %v577, %v577
    %v583 = vld [vmem:[%s2] sm:$0xff]
    %v584 = vld [vmem:[%s2 + $0x8] sm:$0xff]
    %v585 = vld [vmem:[%s2 + $0x10] sm:$0xff]
    %v586 = vld [vmem:[%s2 + $0x18] sm:$0xff]
    %v587 = vld [vmem:[%s2 + $0x20] sm:$0xff]
    %v588 = vld [vmem:[%s2 + $0x28] sm:$0xff]
    %v589 = vld [vmem:[%s2 + $0x30] sm:$0xff]
    %v590 = vld [vmem:[%s2 + $0x38] sm:$0xff]
    %v591 = vld [vmem:[%s2 + $0x40] sm:$0xff]
    %v592 = vld [vmem:[%s2 + $0x48] sm:$0xff]
    %v593 = vld [vmem:[%s2 + $0x50] sm:$0xff]
    %v594 = vld [vmem:[%s2 + $0x58] sm:$0xff]
    %v595 = vld [vmem:[%s2 + $0x60] sm:$0xff]
    %v596 = vld [vmem:[%s2 + $0x68] sm:$0xff]
    %v597 = vld [vmem:[%s2 + $0x70] sm:$0xff]
    %v598 = vld [vmem:[%s2 + $0x78] sm:$0xff]
    %v599 = vld [vmem:[%s2 + $0x80] sm:$0xff]
    %v600 = vld [vmem:[%s2 + $0x88] sm:$0xff]
    %v601 = vld [vmem:[%s2 + $0x90] sm:$0xff]
    %v602 = vld [vmem:[%s2 + $0x98] sm:$0xff]
    %v603 = vld [vmem:[%s2 + $0xa0] sm:$0xff]
    %v604 = vld [vmem:[%s2 + $0xa8] sm:$0xff]
    %v605 = vld [vmem:[%s2 + $0xb0] sm:$0xff]
    %v606 = vld [vmem:[%s2 + $0xb8] sm:$0xff]
    %v607 = vld [vmem:[%s2 + $0xc0] sm:$0xff]
    %v608 = vld [vmem:[%s2 + $0xc8] sm:$0xff]
    %v609 = vld [vmem:[%s2 + $0xd0] sm:$0xff]
    %v610 = vld [vmem:[%s2 + $0xd8] sm:$0xff]
    %v611 = vld [vmem:[%s2 + $0xe0] sm:$0xff]
    %v612 = vld [vmem:[%s2 + $0xe8] sm:$0xff]
    %v613 = vld [vmem:[%s2 + $0xf0] sm:$0xff]
    %v614 = vld [vmem:[%s2 + $0xf8] sm:$0xff]
    %v647 = vunpack.c.l.b16 %v583
    %v648 = vunpack.c.h.b16 %v583
    %v649 = vunpack.c.l.b16 %v584
    %v650 = vunpack.c.h.b16 %v584
    %v651 = vunpack.c.l.b16 %v585
    %v652 = vunpack.c.h.b16 %v585
    %v653 = vunpack.c.l.b16 %v586
    %v654 = vunpack.c.h.b16 %v586
    %v655 = vunpack.c.l.b16 %v587
    %v656 = vunpack.c.h.b16 %v587
    %v657 = vunpack.c.l.b16 %v588
    %v658 = vunpack.c.h.b16 %v588
    %v659 = vunpack.c.l.b16 %v589
    %v660 = vunpack.c.h.b16 %v589
    %v661 = vunpack.c.l.b16 %v590
    %v662 = vunpack.c.h.b16 %v590
    %v663 = vunpack.c.l.b16 %v591
    %v664 = vunpack.c.h.b16 %v591
    %v665 = vunpack.c.l.b16 %v592
    %v666 = vunpack.c.h.b16 %v592
    %v667 = vunpack.c.l.b16 %v593
    %v668 = vunpack.c.h.b16 %v593
    %v669 = vunpack.c.l.b16 %v594
    %v670 = vunpack.c.h.b16 %v594
    %v671 = vunpack.c.l.b16 %v595
    %v672 = vunpack.c.h.b16 %v595
    %v673 = vunpack.c.l.b16 %v596
    %v674 = vunpack.c.h.b16 %v596
    %v675 = vunpack.c.l.b16 %v597
    %v676 = vunpack.c.h.b16 %v597
    %v677 = vunpack.c.l.b16 %v598
    %v678 = vunpack.c.h.b16 %v598
    %v679 = vunpack.c.l.b16 %v599
    %v680 = vunpack.c.h.b16 %v599
    %v681 = vunpack.c.l.b16 %v600
    %v682 = vunpack.c.h.b16 %v600
    %v683 = vunpack.c.l.b16 %v601
    %v684 = vunpack.c.h.b16 %v601
    %v685 = vunpack.c.l.b16 %v602
    %v686 = vunpack.c.h.b16 %v602
    %v687 = vunpack.c.l.b16 %v603
    %v688 = vunpack.c.h.b16 %v603
    %v689 = vunpack.c.l.b16 %v604
    %v690 = vunpack.c.h.b16 %v604
    %v691 = vunpack.c.l.b16 %v605
    %v692 = vunpack.c.h.b16 %v605
    %v693 = vunpack.c.l.b16 %v606
    %v694 = vunpack.c.h.b16 %v606
    %v695 = vunpack.c.l.b16 %v607
    %v696 = vunpack.c.h.b16 %v607
    %v697 = vunpack.c.l.b16 %v608
    %v698 = vunpack.c.h.b16 %v608
    %v699 = vunpack.c.l.b16 %v609
    %v700 = vunpack.c.h.b16 %v609
    %v701 = vunpack.c.l.b16 %v610
    %v702 = vunpack.c.h.b16 %v610
    %v703 = vunpack.c.l.b16 %v611
    %v704 = vunpack.c.h.b16 %v611
    %v705 = vunpack.c.l.b16 %v612
    %v706 = vunpack.c.h.b16 %v612
    %v707 = vunpack.c.l.b16 %v613
    %v708 = vunpack.c.h.b16 %v613
    %v709 = vunpack.c.l.b16 %v614
    %v710 = vunpack.c.h.b16 %v614
    %v711 = vpack.c.b16 %v651, %v647
    %v712 = vpack.c.b16 %v652, %v648
    %v713 = vpack.c.b16 %v653, %v649
    %v714 = vpack.c.b16 %v654, %v650
    %v715 = vpack.c.b16 %v659, %v655
    %v716 = vpack.c.b16 %v660, %v656
    %v717 = vpack.c.b16 %v661, %v657
    %v718 = vpack.c.b16 %v662, %v658
    %v719 = vpack.c.b16 %v667, %v663
    %v720 = vpack.c.b16 %v668, %v664
    %v721 = vpack.c.b16 %v669, %v665
    %v722 = vpack.c.b16 %v670, %v666
    %v723 = vpack.c.b16 %v675, %v671
    %v724 = vpack.c.b16 %v676, %v672
    %v725 = vpack.c.b16 %v677, %v673
    %v726 = vpack.c.b16 %v678, %v674
    %v727 = vpack.c.b16 %v683, %v679
    %v728 = vpack.c.b16 %v684, %v680
    %v729 = vpack.c.b16 %v685, %v681
    %v730 = vpack.c.b16 %v686, %v682
    %v731 = vpack.c.b16 %v691, %v687
    %v732 = vpack.c.b16 %v692, %v688
    %v733 = vpack.c.b16 %v693, %v689
    %v734 = vpack.c.b16 %v694, %v690
    %v735 = vpack.c.b16 %v699, %v695
    %v736 = vpack.c.b16 %v700, %v696
    %v737 = vpack.c.b16 %v701, %v697
    %v738 = vpack.c.b16 %v702, %v698
    %v739 = vpack.c.b16 %v707, %v703
    %v740 = vpack.c.b16 %v708, %v704
    %v741 = vpack.c.b16 %v709, %v705
    %v742 = vpack.c.b16 %v710, %v706
    %775 = vmatprep.subr.bf16.mxu0 %v712
    %776 = vmatpush1.bf16.msra.mxu0 %v711
    %777 = vmatprep.subr.bf16.mxu0 %v716
    %778 = vmatpush1.bf16.msra.mxu0 %v715
    %779 = vmatprep.subr.bf16.mxu0 %v720
    %780 = vmatpush1.bf16.msra.mxu0 %v719
    %781 = vmatprep.subr.bf16.mxu0 %v724
    %782 = vmatpush1.bf16.msra.mxu0 %v723
    %783 = vmatprep.subr.bf16.mxu0 %v728
    %784 = vmatpush1.bf16.msra.mxu0 %v727
    %785 = vmatprep.subr.bf16.mxu0 %v732
    %786 = vmatpush1.bf16.msra.mxu0 %v731
    %787 = vmatprep.subr.bf16.mxu0 %v736
    %788 = vmatpush1.bf16.msra.mxu0 %v735
    %789 = vmatprep.subr.bf16.mxu0 %v740
    %790 = vmatpush1.bf16.msra.mxu0 %v739
    %791 = vmatprep.subr.bf16.mxu0 0
    %792 = vmatpush1.bf16.msra.mxu0 0
    %793 = vmatprep.subr.bf16.mxu0 0
    %794 = vmatpush1.bf16.msra.mxu0 0
    %795 = vmatprep.subr.bf16.mxu0 0
    %796 = vmatpush1.bf16.msra.mxu0 0
    %797 = vmatprep.subr.bf16.mxu0 0
    %798 = vmatpush1.bf16.msra.mxu0 0
    %799 = vmatprep.subr.bf16.mxu0 0
    %800 = vmatpush1.bf16.msra.mxu0 0
    %801 = vmatprep.subr.bf16.mxu0 0
    %802 = vmatpush1.bf16.msra.mxu0 0
    %803 = vmatprep.subr.bf16.mxu0 0
    %804 = vmatpush1.bf16.msra.mxu0 0
    %805 = vmatprep.subr.bf16.mxu0 0
    %806 = vmatpush1.bf16.msra.mxu0 0
    %807 = vmatprep.mubr.bf16.mxu0 0
    %808 = vmatmul.mubr.bf16.gmra.mrb[0].mxu0 %v582
    %v809 = vpop.f32.mrb[0].mxu0
    %v810 = vadd.f32 0.0, %v809
    %v811 = vpop.f32.mrb[0].mxu0
    %v812 = vadd.f32 0.0, %v811
    %v813 = vpop.f32.mrb[0].mxu0
    %v814 = vpop.f32.mrb[0].mxu0
    %815 = vdwg.mxu0
    %816 = vmatprep.subr.bf16.mxu0 %v714
    %817 = vmatpush1.bf16.msra.mxu0 %v713
    %818 = vmatprep.subr.bf16.mxu0 %v718
    %819 = vmatpush1.bf16.msra.mxu0 %v717
    %820 = vmatprep.subr.bf16.mxu0 %v722
    %821 = vmatpush1.bf16.msra.mxu0 %v721
    %822 = vmatprep.subr.bf16.mxu0 %v726
    %823 = vmatpush1.bf16.msra.mxu0 %v725
    %824 = vmatprep.subr.bf16.mxu0 %v730
    %825 = vmatpush1.bf16.msra.mxu0 %v729
    %826 = vmatprep.subr.bf16.mxu0 %v734
    %827 = vmatpush1.bf16.msra.mxu0 %v733
    %828 = vmatprep.subr.bf16.mxu0 %v738
    %829 = vmatpush1.bf16.msra.mxu0 %v737
    %830 = vmatprep.subr.bf16.mxu0 %v742
    %831 = vmatpush1.bf16.msra.mxu0 %v741
    %832 = vmatprep.subr.bf16.mxu0 0
    %833 = vmatpush1.bf16.msra.mxu0 0
    %834 = vmatprep.subr.bf16.mxu0 0
    %835 = vmatpush1.bf16.msra.mxu0 0
    %836 = vmatprep.subr.bf16.mxu0 0
    %837 = vmatpush1.bf16.msra.mxu0 0
    %838 = vmatprep.subr.bf16.mxu0 0
    %839 = vmatpush1.bf16.msra.mxu0 0
    %840 = vmatprep.subr.bf16.mxu0 0
    %841 = vmatpush1.bf16.msra.mxu0 0
    %842 = vmatprep.subr.bf16.mxu0 0
    %843 = vmatpush1.bf16.msra.mxu0 0
    %844 = vmatprep.subr.bf16.mxu0 0
    %845 = vmatpush1.bf16.msra.mxu0 0
    %846 = vmatprep.subr.bf16.mxu0 0
    %847 = vmatpush1.bf16.msra.mxu0 0
    %848 = vmatprep.mubr.bf16.mxu0 0
    %849 = vmatmul.mubr.bf16.gmra.mrb[0].mxu0 %v582
    %v850 = vpop.f32.mrb[0].mxu0
    %v851 = vadd.f32 0.0, %v850
    %v852 = vpop.f32.mrb[0].mxu0
    %v853 = vadd.f32 0.0, %v852
    %v854 = vpop.f32.mrb[0].mxu0
    %v855 = vpop.f32.mrb[0].mxu0
    %856 = vdwg.mxu0
    %v857 = vadd.f32 %v175, %v810
    %v858 = vadd.f32 %v177, %v812
    %v859 = vadd.f32 %v248, %v851
    %v860 = vadd.f32 %v250, %v853
    %v861 = vmul.f32 %v857, 0.5
    %v862 = vmul.f32 %v858, 0.5
    %v863 = vmul.f32 %v859, 0.5
    %v864 = vtanh.pop %v861
    %v865 = vtanh.pop %v862
    %v866 = vtanh.pop %v863
    %v867 = vmul.f32 %v864, 0.5
    %v868 = vmul.f32 %v865, 0.5
    %v869 = vmul.f32 %v866, 0.5
    %v870 = vadd.f32 %v867, 0.5
    %v871 = vadd.f32 %v868, 0.5
    %v872 = vadd.f32 %v869, 0.5
    %v873 = vtanh.pop %v860
    %v874 = vmul.f32 %v871, %v575
    %v875 = vmul.f32 %v870, %v873
    %v876 = vadd.f32 %v874, %v875
    %v877 = vtanh.pop %v876
    %v878 = vmul.f32 %v872, %v877
    %879 = vrot.lane.b32.xlu0 %v878, 127
    %v880 = vpop.permute.xlu0 %879
    %v881 = vmax.f32 %v878, %v880
    %882 = vst [vmem:[#allocation2 + $0x8] sm:$0xff] %v881
    %v883 = vpack.c.bf16 %v878, %v878
    %v884 = vld [vmem:[%s2] sm:$0xff]
    %v885 = vld [vmem:[%s2 + $0x8] sm:$0xff]
    %v886 = vld [vmem:[%s2 + $0x10] sm:$0xff]
    %v887 = vld [vmem:[%s2 + $0x18] sm:$0xff]
    %v888 = vld [vmem:[%s2 + $0x20] sm:$0xff]
    %v889 = vld [vmem:[%s2 + $0x28] sm:$0xff]
    %v890 = vld [vmem:[%s2 + $0x30] sm:$0xff]
    %v891 = vld [vmem:[%s2 + $0x38] sm:$0xff]
    %v892 = vld [vmem:[%s2 + $0x40] sm:$0xff]
    %v893 = vld [vmem:[%s2 + $0x48] sm:$0xff]
    %v894 = vld [vmem:[%s2 + $0x50] sm:$0xff]
    %v895 = vld [vmem:[%s2 + $0x58] sm:$0xff]
    %v896 = vld [vmem:[%s2 + $0x60] sm:$0xff]
    %v897 = vld [vmem:[%s2 + $0x68] sm:$0xff]
    %v898 = vld [vmem:[%s2 + $0x70] sm:$0xff]
    %v899 = vld [vmem:[%s2 + $0x78] sm:$0xff]
    %v900 = vld [vmem:[%s2 + $0x80] sm:$0xff]
    %v901 = vld [vmem:[%s2 + $0x88] sm:$0xff]
    %v902 = vld [vmem:[%s2 + $0x90] sm:$0xff]
    %v903 = vld [vmem:[%s2 + $0x98] sm:$0xff]
    %v904 = vld [vmem:[%s2 + $0xa0] sm:$0xff]
    %v905 = vld [vmem:[%s2 + $0xa8] sm:$0xff]
    %v906 = vld [vmem:[%s2 + $0xb0] sm:$0xff]
    %v907 = vld [vmem:[%s2 + $0xb8] sm:$0xff]
    %v908 = vld [vmem:[%s2 + $0xc0] sm:$0xff]
    %v909 = vld [vmem:[%s2 + $0xc8] sm:$0xff]
    %v910 = vld [vmem:[%s2 + $0xd0] sm:$0xff]
    %v911 = vld [vmem:[%s2 + $0xd8] sm:$0xff]
    %v912 = vld [vmem:[%s2 + $0xe0] sm:$0xff]
    %v913 = vld [vmem:[%s2 + $0xe8] sm:$0xff]
    %v914 = vld [vmem:[%s2 + $0xf0] sm:$0xff]
    %v915 = vld [vmem:[%s2 + $0xf8] sm:$0xff]
    %v948 = vunpack.c.l.b16 %v884
    %v949 = vunpack.c.h.b16 %v884
    %v950 = vunpack.c.l.b16 %v885
    %v951 = vunpack.c.h.b16 %v885
    %v952 = vunpack.c.l.b16 %v886
    %v953 = vunpack.c.h.b16 %v886
    %v954 = vunpack.c.l.b16 %v887
    %v955 = vunpack.c.h.b16 %v887
    %v956 = vunpack.c.l.b16 %v888
    %v957 = vunpack.c.h.b16 %v888
    %v958 = vunpack.c.l.b16 %v889
    %v959 = vunpack.c.h.b16 %v889
    %v960 = vunpack.c.l.b16 %v890
    %v961 = vunpack.c.h.b16 %v890
    %v962 = vunpack.c.l.b16 %v891
    %v963 = vunpack.c.h.b16 %v891
    %v964 = vunpack.c.l.b16 %v892
    %v965 = vunpack.c.h.b16 %v892
    %v966 = vunpack.c.l.b16 %v893
    %v967 = vunpack.c.h.b16 %v893
    %v968 = vunpack.c.l.b16 %v894
    %v969 = vunpack.c.h.b16 %v894
    %v970 = vunpack.c.l.b16 %v895
    %v971 = vunpack.c.h.b16 %v895
    %v972 = vunpack.c.l.b16 %v896
    %v973 = vunpack.c.h.b16 %v896
    %v974 = vunpack.c.l.b16 %v897
    %v975 = vunpack.c.h.b16 %v897
    %v976 = vunpack.c.l.b16 %v898
    %v977 = vunpack.c.h.b16 %v898
    %v978 = vunpack.c.l.b16 %v899
    %v979 = vunpack.c.h.b16 %v899
    %v980 = vunpack.c.l.b16 %v900
    %v981 = vunpack.c.h.b16 %v900
    %v982 = vunpack.c.l.b16 %v901
    %v983 = vunpack.c.h.b16 %v901
    %v984 = vunpack.c.l.b16 %v902
    %v985 = vunpack.c.h.b16 %v902
    %v986 = vunpack.c.l.b16 %v903
    %v987 = vunpack.c.h.b16 %v903
    %v988 = vunpack.c.l.b16 %v904
    %v989 = vunpack.c.h.b16 %v904
    %v990 = vunpack.c.l.b16 %v905
    %v991 = vunpack.c.h.b16 %v905
    %v992 = vunpack.c.l.b16 %v906
    %v993 = vunpack.c.h.b16 %v906
    %v994 = vunpack.c.l.b16 %v907
    %v995 = vunpack.c.h.b16 %v907
    %v996 = vunpack.c.l.b16 %v908
    %v997 = vunpack.c.h.b16 %v908
    %v998 = vunpack.c.l.b16 %v909
    %v999 = vunpack.c.h.b16 %v909
    %v1000 = vunpack.c.l.b16 %v910
    %v1001 = vunpack.c.h.b16 %v910
    %v1002 = vunpack.c.l.b16 %v911
    %v1003 = vunpack.c.h.b16 %v911
    %v1004 = vunpack.c.l.b16 %v912
    %v1005 = vunpack.c.h.b16 %v912
    %v1006 = vunpack.c.l.b16 %v913
    %v1007 = vunpack.c.h.b16 %v913
    %v1008 = vunpack.c.l.b16 %v914
    %v1009 = vunpack.c.h.b16 %v914
    %v1010 = vunpack.c.l.b16 %v915
    %v1011 = vunpack.c.h.b16 %v915
    %v1012 = vpack.c.b16 %v952, %v948
    %v1013 = vpack.c.b16 %v953, %v949
    %v1014 = vpack.c.b16 %v954, %v950
    %v1015 = vpack.c.b16 %v955, %v951
    %v1016 = vpack.c.b16 %v960, %v956
    %v1017 = vpack.c.b16 %v961, %v957
    %v1018 = vpack.c.b16 %v962, %v958
    %v1019 = vpack.c.b16 %v963, %v959
    %v1020 = vpack.c.b16 %v968, %v964
    %v1021 = vpack.c.b16 %v969, %v965
    %v1022 = vpack.c.b16 %v970, %v966
    %v1023 = vpack.c.b16 %v971, %v967
    %v1024 = vpack.c.b16 %v976, %v972
    %v1025 = vpack.c.b16 %v977, %v973
    %v1026 = vpack.c.b16 %v978, %v974
    %v1027 = vpack.c.b16 %v979, %v975
    %v1028 = vpack.c.b16 %v984, %v980
    %v1029 = vpack.c.b16 %v985, %v981
    %v1030 = vpack.c.b16 %v986, %v982
    %v1031 = vpack.c.b16 %v987, %v983
    %v1032 = vpack.c.b16 %v992, %v988
    %v1033 = vpack.c.b16 %v993, %v989
    %v1034 = vpack.c.b16 %v994, %v990
    %v1035 = vpack.c.b16 %v995, %v991
    %v1036 = vpack.c.b16 %v1000, %v996
    %v1037 = vpack.c.b16 %v1001, %v997
    %v1038 = vpack.c.b16 %v1002, %v998
    %v1039 = vpack.c.b16 %v1003, %v999
    %v1040 = vpack.c.b16 %v1008, %v1004
    %v1041 = vpack.c.b16 %v1009, %v1005
    %v1042 = vpack.c.b16 %v1010, %v1006
    %v1043 = vpack.c.b16 %v1011, %v1007
    %1076 = vmatprep.subr.bf16.mxu0 %v1013
    %1077 = vmatpush1.bf16.msra.mxu0 %v1012
    %1078 = vmatprep.subr.bf16.mxu0 %v1017
    %1079 = vmatpush1.bf16.msra.mxu0 %v1016
    %1080 = vmatprep.subr.bf16.mxu0 %v1021
    %1081 = vmatpush1.bf16.msra.mxu0 %v1020
    %1082 = vmatprep.subr.bf16.mxu0 %v1025
    %1083 = vmatpush1.bf16.msra.mxu0 %v1024
    %1084 = vmatprep.subr.bf16.mxu0 %v1029
    %1085 = vmatpush1.bf16.msra.mxu0 %v1028
    %1086 = vmatprep.subr.bf16.mxu0 %v1033
    %1087 = vmatpush1.bf16.msra.mxu0 %v1032
    %1088 = vmatprep.subr.bf16.mxu0 %v1037
    %1089 = vmatpush1.bf16.msra.mxu0 %v1036
    %1090 = vmatprep.subr.bf16.mxu0 %v1041
    %1091 = vmatpush1.bf16.msra.mxu0 %v1040
    %1092 = vmatprep.subr.bf16.mxu0 0
    %1093 = vmatpush1.bf16.msra.mxu0 0
    %1094 = vmatprep.subr.bf16.mxu0 0
    %1095 = vmatpush1.bf16.msra.mxu0 0
    %1096 = vmatprep.subr.bf16.mxu0 0
    %1097 = vmatpush1.bf16.msra.mxu0 0
    %1098 = vmatprep.subr.bf16.mxu0 0
    %1099 = vmatpush1.bf16.msra.mxu0 0
    %1100 = vmatprep.subr.bf16.mxu0 0
    %1101 = vmatpush1.bf16.msra.mxu0 0
    %1102 = vmatprep.subr.bf16.mxu0 0
    %1103 = vmatpush1.bf16.msra.mxu0 0
    %1104 = vmatprep.subr.bf16.mxu0 0
    %1105 = vmatpush1.bf16.msra.mxu0 0
    %1106 = vmatprep.subr.bf16.mxu0 0
    %1107 = vmatpush1.bf16.msra.mxu0 0
    %1108 = vmatprep.mubr.bf16.mxu0 0
    %1109 = vmatmul.mubr.bf16.gmra.mrb[0].mxu0 %v883
    %v1110 = vpop.f32.mrb[0].mxu0
    %v1111 = vadd.f32 0.0, %v1110
    %v1112 = vpop.f32.mrb[0].mxu0
    %v1113 = vadd.f32 0.0, %v1112
    %v1114 = vpop.f32.mrb[0].mxu0
    %v1115 = vpop.f32.mrb[0].mxu0
    %1116 = vdwg.mxu0
    %1117 = vmatprep.subr.bf16.mxu0 %v1015
    %1118 = vmatpush1.bf16.msra.mxu0 %v1014
    %1119 = vmatprep.subr.bf16.mxu0 %v1019
    %1120 = vmatpush1.bf16.msra.mxu0 %v1018
    %1121 = vmatprep.subr.bf16.mxu0 %v1023
    %1122 = vmatpush1.bf16.msra.mxu0 %v1022
    %1123 = vmatprep.subr.bf16.mxu0 %v1027
    %1124 = vmatpush1.bf16.msra.mxu0 %v1026
    %1125 = vmatprep.subr.bf16.mxu0 %v1031
    %1126 = vmatpush1.bf16.msra.mxu0 %v1030
    %1127 = vmatprep.subr.bf16.mxu0 %v1035
    %1128 = vmatpush1.bf16.msra.mxu0 %v1034
    %1129 = vmatprep.subr.bf16.mxu0 %v1039
    %1130 = vmatpush1.bf16.msra.mxu0 %v1038
    %1131 = vmatprep.subr.bf16.mxu0 %v1043
    %1132 = vmatpush1.bf16.msra.mxu0 %v1042
    %1133 = vmatprep.subr.bf16.mxu0 0
    %1134 = vmatpush1.bf16.msra.mxu0 0
    %1135 = vmatprep.subr.bf16.mxu0 0
    %1136 = vmatpush1.bf16.msra.mxu0 0
    %1137 = vmatprep.subr.bf16.mxu0 0
    %1138 = vmatpush1.bf16.msra.mxu0 0
    %1139 = vmatprep.subr.bf16.mxu0 0
    %1140 = vmatpush1.bf16.msra.mxu0 0
    %1141 = vmatprep.subr.bf16.mxu0 0
    %1142 = vmatpush1.bf16.msra.mxu0 0
    %1143 = vmatprep.subr.bf16.mxu0 0
    %1144 = vmatpush1.bf16.msra.mxu0 0
    %1145 = vmatprep.subr.bf16.mxu0 0
    %1146 = vmatpush1.bf16.msra.mxu0 0
    %1147 = vmatprep.subr.bf16.mxu0 0
    %1148 = vmatpush1.bf16.msra.mxu0 0
    %1149 = vmatprep.mubr.bf16.mxu0 0
    %1150 = vmatmul.mubr.bf16.gmra.mrb[0].mxu0 %v883
    %v1151 = vpop.f32.mrb[0].mxu0
    %v1152 = vadd.f32 0.0, %v1151
    %v1153 = vpop.f32.mrb[0].mxu0
    %v1154 = vadd.f32 0.0, %v1153
    %v1155 = vpop.f32.mrb[0].mxu0
    %v1156 = vpop.f32.mrb[0].mxu0
    %1157 = vdwg.mxu0
    %v1158 = vadd.f32 %v181, %v1111
    %v1159 = vadd.f32 %v183, %v1113
    %v1160 = vadd.f32 %v254, %v1152
    %v1161 = vadd.f32 %v256, %v1154
    %v1162 = vmul.f32 %v1158, 0.5
    %v1163 = vmul.f32 %v1159, 0.5
    %v1164 = vmul.f32 %v1160, 0.5
    %v1165 = vtanh.pop %v1162
    %v1166 = vtanh.pop %v1163
    %v1167 = vtanh.pop %v1164
    %v1168 = vmul.f32 %v1165, 0.5
    %v1169 = vmul.f32 %v1166, 0.5
    %v1170 = vmul.f32 %v1167, 0.5
    %v1171 = vadd.f32 %v1168, 0.5
    %v1172 = vadd.f32 %v1169, 0.5
    %v1173 = vadd.f32 %v1170, 0.5
    %v1174 = vtanh.pop %v1161
    %v1175 = vmul.f32 %v1172, %v876
    %v1176 = vmul.f32 %v1171, %v1174
    %v1177 = vadd.f32 %v1175, %v1176
    %v1178 = vtanh.pop %v1177
    %v1179 = vmul.f32 %v1173, %v1178
    %1180 = vrot.lane.b32.xlu0 %v1179, 127
    %v1181 = vpop.permute.xlu0 %1180
    %v1182 = vmax.f32 %v1179, %v1181
    %1183 = vst [vmem:[#allocation2 + $0x10] sm:$0xff] %v1182
    %v1184 = vpack.c.bf16 %v1179, %v1179
    %v1185 = vld [vmem:[%s2] sm:$0xff]
    %v1186 = vld [vmem:[%s2 + $0x8] sm:$0xff]
    %v1187 = vld [vmem:[%s2 + $0x10] sm:$0xff]
    %v1188 = vld [vmem:[%s2 + $0x18] sm:$0xff]
    %v1189 = vld [vmem:[%s2 + $0x20] sm:$0xff]
    %v1190 = vld [vmem:[%s2 + $0x28] sm:$0xff]
    %v1191 = vld [vmem:[%s2 + $0x30] sm:$0xff]
    %v1192 = vld [vmem:[%s2 + $0x38] sm:$0xff]
    %v1193 = vld [vmem:[%s2 + $0x40] sm:$0xff]
    %v1194 = vld [vmem:[%s2 + $0x48] sm:$0xff]
    %v1195 = vld [vmem:[%s2 + $0x50] sm:$0xff]
    %v1196 = vld [vmem:[%s2 + $0x58] sm:$0xff]
    %v1197 = vld [vmem:[%s2 + $0x60] sm:$0xff]
    %v1198 = vld [vmem:[%s2 + $0x68] sm:$0xff]
    %v1199 = vld [vmem:[%s2 + $0x70] sm:$0xff]
    %v1200 = vld [vmem:[%s2 + $0x78] sm:$0xff]
    %v1201 = vld [vmem:[%s2 + $0x80] sm:$0xff]
    %v1202 = vld [vmem:[%s2 + $0x88] sm:$0xff]
    %v1203 = vld [vmem:[%s2 + $0x90] sm:$0xff]
    %v1204 = vld [vmem:[%s2 + $0x98] sm:$0xff]
    %v1205 = vld [vmem:[%s2 + $0xa0] sm:$0xff]
    %v1206 = vld [vmem:[%s2 + $0xa8] sm:$0xff]
    %v1207 = vld [vmem:[%s2 + $0xb0] sm:$0xff]
    %v1208 = vld [vmem:[%s2 + $0xb8] sm:$0xff]
    %v1209 = vld [vmem:[%s2 + $0xc0] sm:$0xff]
    %v1210 = vld [vmem:[%s2 + $0xc8] sm:$0xff]
    %v1211 = vld [vmem:[%s2 + $0xd0] sm:$0xff]
    %v1212 = vld [vmem:[%s2 + $0xd8] sm:$0xff]
    %v1213 = vld [vmem:[%s2 + $0xe0] sm:$0xff]
    %v1214 = vld [vmem:[%s2 + $0xe8] sm:$0xff]
    %v1215 = vld [vmem:[%s2 + $0xf0] sm:$0xff]
    %v1216 = vld [vmem:[%s2 + $0xf8] sm:$0xff]
    %v1249 = vunpack.c.l.b16 %v1185
    %v1250 = vunpack.c.h.b16 %v1185
    %v1251 = vunpack.c.l.b16 %v1186
    %v1252 = vunpack.c.h.b16 %v1186
    %v1253 = vunpack.c.l.b16 %v1187
    %v1254 = vunpack.c.h.b16 %v1187
    %v1255 = vunpack.c.l.b16 %v1188
    %v1256 = vunpack.c.h.b16 %v1188
    %v1257 = vunpack.c.l.b16 %v1189
    %v1258 = vunpack.c.h.b16 %v1189
    %v1259 = vunpack.c.l.b16 %v1190
    %v1260 = vunpack.c.h.b16 %v1190
    %v1261 = vunpack.c.l.b16 %v1191
    %v1262 = vunpack.c.h.b16 %v1191
    %v1263 = vunpack.c.l.b16 %v1192
    %v1264 = vunpack.c.h.b16 %v1192
    %v1265 = vunpack.c.l.b16 %v1193
    %v1266 = vunpack.c.h.b16 %v1193
    %v1267 = vunpack.c.l.b16 %v1194
    %v1268 = vunpack.c.h.b16 %v1194
    %v1269 = vunpack.c.l.b16 %v1195
    %v1270 = vunpack.c.h.b16 %v1195
    %v1271 = vunpack.c.l.b16 %v1196
    %v1272 = vunpack.c.h.b16 %v1196
    %v1273 = vunpack.c.l.b16 %v1197
    %v1274 = vunpack.c.h.b16 %v1197
    %v1275 = vunpack.c.l.b16 %v1198
    %v1276 = vunpack.c.h.b16 %v1198
    %v1277 = vunpack.c.l.b16 %v1199
    %v1278 = vunpack.c.h.b16 %v1199
    %v1279 = vunpack.c.l.b16 %v1200
    %v1280 = vunpack.c.h.b16 %v1200
    %v1281 = vunpack.c.l.b16 %v1201
    %v1282 = vunpack.c.h.b16 %v1201
    %v1283 = vunpack.c.l.b16 %v1202
    %v1284 = vunpack.c.h.b16 %v1202
    %v1285 = vunpack.c.l.b16 %v1203
    %v1286 = vunpack.c.h.b16 %v1203
    %v1287 = vunpack.c.l.b16 %v1204
    %v1288 = vunpack.c.h.b16 %v1204
    %v1289 = vunpack.c.l.b16 %v1205
    %v1290 = vunpack.c.h.b16 %v1205
    %v1291 = vunpack.c.l.b16 %v1206
    %v1292 = vunpack.c.h.b16 %v1206
    %v1293 = vunpack.c.l.b16 %v1207
    %v1294 = vunpack.c.h.b16 %v1207
    %v1295 = vunpack.c.l.b16 %v1208
    %v1296 = vunpack.c.h.b16 %v1208
    %v1297 = vunpack.c.l.b16 %v1209
    %v1298 = vunpack.c.h.b16 %v1209
    %v1299 = vunpack.c.l.b16 %v1210
    %v1300 = vunpack.c.h.b16 %v1210
    %v1301 = vunpack.c.l.b16 %v1211
    %v1302 = vunpack.c.h.b16 %v1211
    %v1303 = vunpack.c.l.b16 %v1212
    %v1304 = vunpack.c.h.b16 %v1212
    %v1305 = vunpack.c.l.b16 %v1213
    %v1306 = vunpack.c.h.b16 %v1213
    %v1307 = vunpack.c.l.b16 %v1214
    %v1308 = vunpack.c.h.b16 %v1214
    %v1309 = vunpack.c.l.b16 %v1215
    %v1310 = vunpack.c.h.b16 %v1215
    %v1311 = vunpack.c.l.b16 %v1216
    %v1312 = vunpack.c.h.b16 %v1216
    %v1313 = vpack.c.b16 %v1253, %v1249
    %v1314 = vpack.c.b16 %v1254, %v1250
    %v1315 = vpack.c.b16 %v1255, %v1251
    %v1316 = vpack.c.b16 %v1256, %v1252
    %v1317 = vpack.c.b16 %v1261, %v1257
    %v1318 = vpack.c.b16 %v1262, %v1258
    %v1319 = vpack.c.b16 %v1263, %v1259
    %v1320 = vpack.c.b16 %v1264, %v1260
    %v1321 = vpack.c.b16 %v1269, %v1265
    %v1322 = vpack.c.b16 %v1270, %v1266
    %v1323 = vpack.c.b16 %v1271, %v1267
    %v1324 = vpack.c.b16 %v1272, %v1268
    %v1325 = vpack.c.b16 %v1277, %v1273
    %v1326 = vpack.c.b16 %v1278, %v1274
    %v1327 = vpack.c.b16 %v1279, %v1275
    %v1328 = vpack.c.b16 %v1280, %v1276
    %v1329 = vpack.c.b16 %v1285, %v1281
    %v1330 = vpack.c.b16 %v1286, %v1282
    %v1331 = vpack.c.b16 %v1287, %v1283
    %v1332 = vpack.c.b16 %v1288, %v1284
    %v1333 = vpack.c.b16 %v1293, %v1289
    %v1334 = vpack.c.b16 %v1294, %v1290
    %v1335 = vpack.c.b16 %v1295, %v1291
    %v1336 = vpack.c.b16 %v1296, %v1292
    %v1337 = vpack.c.b16 %v1301, %v1297
    %v1338 = vpack.c.b16 %v1302, %v1298
    %v1339 = vpack.c.b16 %v1303, %v1299
    %v1340 = vpack.c.b16 %v1304, %v1300
    %v1341 = vpack.c.b16 %v1309, %v1305
    %v1342 = vpack.c.b16 %v1310, %v1306
    %v1343 = vpack.c.b16 %v1311, %v1307
    %v1344 = vpack.c.b16 %v1312, %v1308
    %1377 = vmatprep.subr.bf16.mxu0 %v1314
    %1378 = vmatpush1.bf16.msra.mxu0 %v1313
    %1379 = vmatprep.subr.bf16.mxu0 %v1318
    %1380 = vmatpush1.bf16.msra.mxu0 %v1317
    %1381 = vmatprep.subr.bf16.mxu0 %v1322
    %1382 = vmatpush1.bf16.msra.mxu0 %v1321
    %1383 = vmatprep.subr.bf16.mxu0 %v1326
    %1384 = vmatpush1.bf16.msra.mxu0 %v1325
    %1385 = vmatprep.subr.bf16.mxu0 %v1330
    %1386 = vmatpush1.bf16.msra.mxu0 %v1329
    %1387 = vmatprep.subr.bf16.mxu0 %v1334
    %1388 = vmatpush1.bf16.msra.mxu0 %v1333
    %1389 = vmatprep.subr.bf16.mxu0 %v1338
    %1390 = vmatpush1.bf16.msra.mxu0 %v1337
    %1391 = vmatprep.subr.bf16.mxu0 %v1342
    %1392 = vmatpush1.bf16.msra.mxu0 %v1341
    %1393 = vmatprep.subr.bf16.mxu0 0
    %1394 = vmatpush1.bf16.msra.mxu0 0
    %1395 = vmatprep.subr.bf16.mxu0 0
    %1396 = vmatpush1.bf16.msra.mxu0 0
    %1397 = vmatprep.subr.bf16.mxu0 0
    %1398 = vmatpush1.bf16.msra.mxu0 0
    %1399 = vmatprep.subr.bf16.mxu0 0
    %1400 = vmatpush1.bf16.msra.mxu0 0
    %1401 = vmatprep.subr.bf16.mxu0 0
    %1402 = vmatpush1.bf16.msra.mxu0 0
    %1403 = vmatprep.subr.bf16.mxu0 0
    %1404 = vmatpush1.bf16.msra.mxu0 0
    %1405 = vmatprep.subr.bf16.mxu0 0
    %1406 = vmatpush1.bf16.msra.mxu0 0
    %1407 = vmatprep.subr.bf16.mxu0 0
    %1408 = vmatpush1.bf16.msra.mxu0 0
    %1409 = vmatprep.mubr.bf16.mxu0 0
    %1410 = vmatmul.mubr.bf16.gmra.mrb[0].mxu0 %v1184
    %v1411 = vpop.f32.mrb[0].mxu0
    %v1412 = vadd.f32 0.0, %v1411
    %v1413 = vpop.f32.mrb[0].mxu0
    %v1414 = vadd.f32 0.0, %v1413
    %v1415 = vpop.f32.mrb[0].mxu0
    %v1416 = vpop.f32.mrb[0].mxu0
    %1417 = vdwg.mxu0
    %1418 = vmatprep.subr.bf16.mxu0 %v1316
    %1419 = vmatpush1.bf16.msra.mxu0 %v1315
    %1420 = vmatprep.subr.bf16.mxu0 %v1320
    %1421 = vmatpush1.bf16.msra.mxu0 %v1319
    %1422 = vmatprep.subr.bf16.mxu0 %v1324
    %1423 = vmatpush1.bf16.msra.mxu0 %v1323
    %1424 = vmatprep.subr.bf16.mxu0 %v1328
    %1425 = vmatpush1.bf16.msra.mxu0 %v1327
    %1426 = vmatprep.subr.bf16.mxu0 %v1332
    %1427 = vmatpush1.bf16.msra.mxu0 %v1331
    %1428 = vmatprep.subr.bf16.mxu0 %v1336
    %1429 = vmatpush1.bf16.msra.mxu0 %v1335
    %1430 = vmatprep.subr.bf16.mxu0 %v1340
    %1431 = vmatpush1.bf16.msra.mxu0 %v1339
    %1432 = vmatprep.subr.bf16.mxu0 %v1344
    %1433 = vmatpush1.bf16.msra.mxu0 %v1343
    %1434 = vmatprep.subr.bf16.mxu0 0
    %1435 = vmatpush1.bf16.msra.mxu0 0
    %1436 = vmatprep.subr.bf16.mxu0 0
    %1437 = vmatpush1.bf16.msra.mxu0 0
    %1438 = vmatprep.subr.bf16.mxu0 0
    %1439 = vmatpush1.bf16.msra.mxu0 0
    %1440 = vmatprep.subr.bf16.mxu0 0
    %1441 = vmatpush1.bf16.msra.mxu0 0
    %1442 = vmatprep.subr.bf16.mxu0 0
    %1443 = vmatpush1.bf16.msra.mxu0 0
    %1444 = vmatprep.subr.bf16.mxu0 0
    %1445 = vmatpush1.bf16.msra.mxu0 0
    %1446 = vmatprep.subr.bf16.mxu0 0
    %1447 = vmatpush1.bf16.msra.mxu0 0
    %1448 = vmatprep.subr.bf16.mxu0 0
    %1449 = vmatpush1.bf16.msra.mxu0 0
    %1450 = vmatprep.mubr.bf16.mxu0 0
    %1451 = vmatmul.mubr.bf16.gmra.mrb[0].mxu0 %v1184
    %v1452 = vpop.f32.mrb[0].mxu0
    %v1453 = vadd.f32 0.0, %v1452
    %v1454 = vpop.f32.mrb[0].mxu0
    %v1455 = vadd.f32 0.0, %v1454
    %v1456 = vpop.f32.mrb[0].mxu0
    %v1457 = vpop.f32.mrb[0].mxu0
    %1458 = vdwg.mxu0
    %v1459 = vadd.f32 %v185, %v1412
    %v1460 = vadd.f32 %v187, %v1414
    %v1461 = vadd.f32 %v258, %v1453
    %v1462 = vadd.f32 %v260, %v1455
    %v1463 = vmul.f32 %v1459, 0.5
    %v1464 = vmul.f32 %v1460, 0.5
    %v1465 = vmul.f32 %v1461, 0.5
    %v1466 = vtanh.pop %v1463
    %v1467 = vtanh.pop %v1464
    %v1468 = vtanh.pop %v1465
    %v1469 = vmul.f32 %v1466, 0.5
    %v1470 = vmul.f32 %v1467, 0.5
    %v1471 = vmul.f32 %v1468, 0.5
    %v1472 = vadd.f32 %v1469, 0.5
    %v1473 = vadd.f32 %v1470, 0.5
    %v1474 = vadd.f32 %v1471, 0.5
    %v1475 = vtanh.pop %v1462
    %v1476 = vmul.f32 %v1473, %v1177
    %v1477 = vmul.f32 %v1472, %v1475
    %v1478 = vadd.f32 %v1476, %v1477
    %v1479 = vtanh.pop %v1478
    %v1480 = vmul.f32 %v1474, %v1479
    %1481 = vrot.lane.b32.xlu0 %v1480, 127
    %v1482 = vpop.permute.xlu0 %1481
    %v1483 = vmax.f32 %v1480, %v1482
    %1484 = vst [vmem:[#allocation2 + $0x18] sm:$0xff] %v1483
    %v1485 = vpack.c.bf16 %v1480, %v1480
    %v1486 = vld [vmem:[%s2] sm:$0xff]
    %v1487 = vld [vmem:[%s2 + $0x8] sm:$0xff]
    %v1488 = vld [vmem:[%s2 + $0x10] sm:$0xff]
    %v1489 = vld [vmem:[%s2 + $0x18] sm:$0xff]
    %v1490 = vld [vmem:[%s2 + $0x20] sm:$0xff]
    %v1491 = vld [vmem:[%s2 + $0x28] sm:$0xff]
    %v1492 = vld [vmem:[%s2 + $0x30] sm:$0xff]
    %v1493 = vld [vmem:[%s2 + $0x38] sm:$0xff]
    %v1494 = vld [vmem:[%s2 + $0x40] sm:$0xff]
    %v1495 = vld [vmem:[%s2 + $0x48] sm:$0xff]
    %v1496 = vld [vmem:[%s2 + $0x50] sm:$0xff]
    %v1497 = vld [vmem:[%s2 + $0x58] sm:$0xff]
    %v1498 = vld [vmem:[%s2 + $0x60] sm:$0xff]
    %v1499 = vld [vmem:[%s2 + $0x68] sm:$0xff]
    %v1500 = vld [vmem:[%s2 + $0x70] sm:$0xff]
    %v1501 = vld [vmem:[%s2 + $0x78] sm:$0xff]
    %v1502 = vld [vmem:[%s2 + $0x80] sm:$0xff]
    %v1503 = vld [vmem:[%s2 + $0x88] sm:$0xff]
    %v1504 = vld [vmem:[%s2 + $0x90] sm:$0xff]
    %v1505 = vld [vmem:[%s2 + $0x98] sm:$0xff]
    %v1506 = vld [vmem:[%s2 + $0xa0] sm:$0xff]
    %v1507 = vld [vmem:[%s2 + $0xa8] sm:$0xff]
    %v1508 = vld [vmem:[%s2 + $0xb0] sm:$0xff]
    %v1509 = vld [vmem:[%s2 + $0xb8] sm:$0xff]
    %v1510 = vld [vmem:[%s2 + $0xc0] sm:$0xff]
    %v1511 = vld [vmem:[%s2 + $0xc8] sm:$0xff]
    %v1512 = vld [vmem:[%s2 + $0xd0] sm:$0xff]
    %v1513 = vld [vmem:[%s2 + $0xd8] sm:$0xff]
    %v1514 = vld [vmem:[%s2 + $0xe0] sm:$0xff]
    %v1515 = vld [vmem:[%s2 + $0xe8] sm:$0xff]
    %v1516 = vld [vmem:[%s2 + $0xf0] sm:$0xff]
    %v1517 = vld [vmem:[%s2 + $0xf8] sm:$0xff]
    %v1550 = vunpack.c.l.b16 %v1486
    %v1551 = vunpack.c.h.b16 %v1486
    %v1552 = vunpack.c.l.b16 %v1487
    %v1553 = vunpack.c.h.b16 %v1487
    %v1554 = vunpack.c.l.b16 %v1488
    %v1555 = vunpack.c.h.b16 %v1488
    %v1556 = vunpack.c.l.b16 %v1489
    %v1557 = vunpack.c.h.b16 %v1489
    %v1558 = vunpack.c.l.b16 %v1490
    %v1559 = vunpack.c.h.b16 %v1490
    %v1560 = vunpack.c.l.b16 %v1491
    %v1561 = vunpack.c.h.b16 %v1491
    %v1562 = vunpack.c.l.b16 %v1492
    %v1563 = vunpack.c.h.b16 %v1492
    %v1564 = vunpack.c.l.b16 %v1493
    %v1565 = vunpack.c.h.b16 %v1493
    %v1566 = vunpack.c.l.b16 %v1494
    %v1567 = vunpack.c.h.b16 %v1494
    %v1568 = vunpack.c.l.b16 %v1495
    %v1569 = vunpack.c.h.b16 %v1495
    %v1570 = vunpack.c.l.b16 %v1496
    %v1571 = vunpack.c.h.b16 %v1496
    %v1572 = vunpack.c.l.b16 %v1497
    %v1573 = vunpack.c.h.b16 %v1497
    %v1574 = vunpack.c.l.b16 %v1498
    %v1575 = vunpack.c.h.b16 %v1498
    %v1576 = vunpack.c.l.b16 %v1499
    %v1577 = vunpack.c.h.b16 %v1499
    %v1578 = vunpack.c.l.b16 %v1500
    %v1579 = vunpack.c.h.b16 %v1500
    %v1580 = vunpack.c.l.b16 %v1501
    %v1581 = vunpack.c.h.b16 %v1501
    %v1582 = vunpack.c.l.b16 %v1502
    %v1583 = vunpack.c.h.b16 %v1502
    %v1584 = vunpack.c.l.b16 %v1503
    %v1585 = vunpack.c.h.b16 %v1503
    %v1586 = vunpack.c.l.b16 %v1504
    %v1587 = vunpack.c.h.b16 %v1504
    %v1588 = vunpack.c.l.b16 %v1505
    %v1589 = vunpack.c.h.b16 %v1505
    %v1590 = vunpack.c.l.b16 %v1506
    %v1591 = vunpack.c.h.b16 %v1506
    %v1592 = vunpack.c.l.b16 %v1507
    %v1593 = vunpack.c.h.b16 %v1507
    %v1594 = vunpack.c.l.b16 %v1508
    %v1595 = vunpack.c.h.b16 %v1508
    %v1596 = vunpack.c.l.b16 %v1509
    %v1597 = vunpack.c.h.b16 %v1509
    %v1598 = vunpack.c.l.b16 %v1510
    %v1599 = vunpack.c.h.b16 %v1510
    %v1600 = vunpack.c.l.b16 %v1511
    %v1601 = vunpack.c.h.b16 %v1511
    %v1602 = vunpack.c.l.b16 %v1512
    %v1603 = vunpack.c.h.b16 %v1512
    %v1604 = vunpack.c.l.b16 %v1513
    %v1605 = vunpack.c.h.b16 %v1513
    %v1606 = vunpack.c.l.b16 %v1514
    %v1607 = vunpack.c.h.b16 %v1514
    %v1608 = vunpack.c.l.b16 %v1515
    %v1609 = vunpack.c.h.b16 %v1515
    %v1610 = vunpack.c.l.b16 %v1516
    %v1611 = vunpack.c.h.b16 %v1516
    %v1612 = vunpack.c.l.b16 %v1517
    %v1613 = vunpack.c.h.b16 %v1517
    %v1614 = vpack.c.b16 %v1554, %v1550
    %v1615 = vpack.c.b16 %v1555, %v1551
    %v1616 = vpack.c.b16 %v1556, %v1552
    %v1617 = vpack.c.b16 %v1557, %v1553
    %v1618 = vpack.c.b16 %v1562, %v1558
    %v1619 = vpack.c.b16 %v1563, %v1559
    %v1620 = vpack.c.b16 %v1564, %v1560
    %v1621 = vpack.c.b16 %v1565, %v1561
    %v1622 = vpack.c.b16 %v1570, %v1566
    %v1623 = vpack.c.b16 %v1571, %v1567
    %v1624 = vpack.c.b16 %v1572, %v1568
    %v1625 = vpack.c.b16 %v1573, %v1569
    %v1626 = vpack.c.b16 %v1578, %v1574
    %v1627 = vpack.c.b16 %v1579, %v1575
    %v1628 = vpack.c.b16 %v1580, %v1576
    %v1629 = vpack.c.b16 %v1581, %v1577
    %v1630 = vpack.c.b16 %v1586, %v1582
    %v1631 = vpack.c.b16 %v1587, %v1583
    %v1632 = vpack.c.b16 %v1588, %v1584
    %v1633 = vpack.c.b16 %v1589, %v1585
    %v1634 = vpack.c.b16 %v1594, %v1590
    %v1635 = vpack.c.b16 %v1595, %v1591
    %v1636 = vpack.c.b16 %v1596, %v1592
    %v1637 = vpack.c.b16 %v1597, %v1593
    %v1638 = vpack.c.b16 %v1602, %v1598
    %v1639 = vpack.c.b16 %v1603, %v1599
    %v1640 = vpack.c.b16 %v1604, %v1600
    %v1641 = vpack.c.b16 %v1605, %v1601
    %v1642 = vpack.c.b16 %v1610, %v1606
    %v1643 = vpack.c.b16 %v1611, %v1607
    %v1644 = vpack.c.b16 %v1612, %v1608
    %v1645 = vpack.c.b16 %v1613, %v1609
    %1678 = vmatprep.subr.bf16.mxu0 %v1615
    %1679 = vmatpush1.bf16.msra.mxu0 %v1614
    %1680 = vmatprep.subr.bf16.mxu0 %v1619
    %1681 = vmatpush1.bf16.msra.mxu0 %v1618
    %1682 = vmatprep.subr.bf16.mxu0 %v1623
    %1683 = vmatpush1.bf16.msra.mxu0 %v1622
    %1684 = vmatprep.subr.bf16.mxu0 %v1627
    %1685 = vmatpush1.bf16.msra.mxu0 %v1626
    %1686 = vmatprep.subr.bf16.mxu0 %v1631
    %1687 = vmatpush1.bf16.msra.mxu0 %v1630
    %1688 = vmatprep.subr.bf16.mxu0 %v1635
    %1689 = vmatpush1.bf16.msra.mxu0 %v1634
    %1690 = vmatprep.subr.bf16.mxu0 %v1639
    %1691 = vmatpush1.bf16.msra.mxu0 %v1638
    %1692 = vmatprep.subr.bf16.mxu0 %v1643
    %1693 = vmatpush1.bf16.msra.mxu0 %v1642
    %1694 = vmatprep.subr.bf16.mxu0 0
    %1695 = vmatpush1.bf16.msra.mxu0 0
    %1696 = vmatprep.subr.bf16.mxu0 0
    %1697 = vmatpush1.bf16.msra.mxu0 0
    %1698 = vmatprep.subr.bf16.mxu0 0
    %1699 = vmatpush1.bf16.msra.mxu0 0
    %1700 = vmatprep.subr.bf16.mxu0 0
    %1701 = vmatpush1.bf16.msra.mxu0 0
    %1702 = vmatprep.subr.bf16.mxu0 0
    %1703 = vmatpush1.bf16.msra.mxu0 0
    %1704 = vmatprep.subr.bf16.mxu0 0
    %1705 = vmatpush1.bf16.msra.mxu0 0
    %1706 = vmatprep.subr.bf16.mxu0 0
    %1707 = vmatpush1.bf16.msra.mxu0 0
    %1708 = vmatprep.subr.bf16.mxu0 0
    %1709 = vmatpush1.bf16.msra.mxu0 0
    %1710 = vmatprep.mubr.bf16.mxu0 0
    %1711 = vmatmul.mubr.bf16.gmra.mrb[0].mxu0 %v1485
    %v1712 = vpop.f32.mrb[0].mxu0
    %v1713 = vadd.f32 0.0, %v1712
    %v1714 = vpop.f32.mrb[0].mxu0
    %v1715 = vadd.f32 0.0, %v1714
    %v1716 = vpop.f32.mrb[0].mxu0
    %v1717 = vpop.f32.mrb[0].mxu0
    %1718 = vdwg.mxu0
    %1719 = vmatprep.subr.bf16.mxu0 %v1617
    %1720 = vmatpush1.bf16.msra.mxu0 %v1616
    %1721 = vmatprep.subr.bf16.mxu0 %v1621
    %1722 = vmatpush1.bf16.msra.mxu0 %v1620
    %1723 = vmatprep.subr.bf16.mxu0 %v1625
    %1724 = vmatpush1.bf16.msra.mxu0 %v1624
    %1725 = vmatprep.subr.bf16.mxu0 %v1629
    %1726 = vmatpush1.bf16.msra.mxu0 %v1628
    %1727 = vmatprep.subr.bf16.mxu0 %v1633
    %1728 = vmatpush1.bf16.msra.mxu0 %v1632
    %1729 = vmatprep.subr.bf16.mxu0 %v1637
    %1730 = vmatpush1.bf16.msra.mxu0 %v1636
    %1731 = vmatprep.subr.bf16.mxu0 %v1641
    %1732 = vmatpush1.bf16.msra.mxu0 %v1640
    %1733 = vmatprep.subr.bf16.mxu0 %v1645
    %1734 = vmatpush1.bf16.msra.mxu0 %v1644
    %1735 = vmatprep.subr.bf16.mxu0 0
    %1736 = vmatpush1.bf16.msra.mxu0 0
    %1737 = vmatprep.subr.bf16.mxu0 0
    %1738 = vmatpush1.bf16.msra.mxu0 0
    %1739 = vmatprep.subr.bf16.mxu0 0
    %1740 = vmatpush1.bf16.msra.mxu0 0
    %1741 = vmatprep.subr.bf16.mxu0 0
    %1742 = vmatpush1.bf16.msra.mxu0 0
    %1743 = vmatprep.subr.bf16.mxu0 0
    %1744 = vmatpush1.bf16.msra.mxu0 0
    %1745 = vmatprep.subr.bf16.mxu0 0
    %1746 = vmatpush1.bf16.msra.mxu0 0
    %1747 = vmatprep.subr.bf16.mxu0 0
    %1748 = vmatpush1.bf16.msra.mxu0 0
    %1749 = vmatprep.subr.bf16.mxu0 0
    %1750 = vmatpush1.bf16.msra.mxu0 0
    %1751 = vmatprep.mubr.bf16.mxu0 0
    %1752 = vmatmul.mubr.bf16.gmra.mrb[0].mxu0 %v1485
    %v1753 = vpop.f32.mrb[0].mxu0
    %v1754 = vadd.f32 0.0, %v1753
    %v1755 = vpop.f32.mrb[0].mxu0
    %v1756 = vadd.f32 0.0, %v1755
    %v1757 = vpop.f32.mrb[0].mxu0
    %v1758 = vpop.f32.mrb[0].mxu0
    %1759 = vdwg.mxu0
    %v1760 = vadd.f32 %v191, %v1713
    %v1761 = vadd.f32 %v193, %v1715
    %v1762 = vadd.f32 %v264, %v1754
    %v1763 = vadd.f32 %v266, %v1756
    %v1764 = vmul.f32 %v1760, 0.5
    %v1765 = vmul.f32 %v1761, 0.5
    %v1766 = vmul.f32 %v1762, 0.5
    %v1767 = vtanh.pop %v1764
    %v1768 = vtanh.pop %v1765
    %v1769 = vtanh.pop %v1766
    %v1770 = vmul.f32 %v1767, 0.5
    %v1771 = vmul.f32 %v1768, 0.5
    %v1772 = vmul.f32 %v1769, 0.5
    %v1773 = vadd.f32 %v1770, 0.5
    %v1774 = vadd.f32 %v1771, 0.5
    %v1775 = vadd.f32 %v1772, 0.5
    %v1776 = vtanh.pop %v1763
    %v1777 = vmul.f32 %v1774, %v1478
    %v1778 = vmul.f32 %v1773, %v1776
    %v1779 = vadd.f32 %v1777, %v1778
    %v1780 = vtanh.pop %v1779
    %v1781 = vmul.f32 %v1775, %v1780
    %1782 = vrot.lane.b32.xlu0 %v1781, 127
    %v1783 = vpop.permute.xlu0 %1782
    %v1784 = vmax.f32 %v1781, %v1783
    %1785 = vst [vmem:[#allocation2 + $0x20] sm:$0xff] %v1784
    %v1786 = vpack.c.bf16 %v1781, %v1781
    %v1787 = vld [vmem:[%s2] sm:$0xff]
    %v1788 = vld [vmem:[%s2 + $0x8] sm:$0xff]
    %v1789 = vld [vmem:[%s2 + $0x10] sm:$0xff]
    %v1790 = vld [vmem:[%s2 + $0x18] sm:$0xff]
    %v1791 = vld [vmem:[%s2 + $0x20] sm:$0xff]
    %v1792 = vld [vmem:[%s2 + $0x28] sm:$0xff]
    %v1793 = vld [vmem:[%s2 + $0x30] sm:$0xff]
    %v1794 = vld [vmem:[%s2 + $0x38] sm:$0xff]
    %v1795 = vld [vmem:[%s2 + $0x40] sm:$0xff]
    %v1796 = vld [vmem:[%s2 + $0x48] sm:$0xff]
    %v1797 = vld [vmem:[%s2 + $0x50] sm:$0xff]
    %v1798 = vld [vmem:[%s2 + $0x58] sm:$0xff]
    %v1799 = vld [vmem:[%s2 + $0x60] sm:$0xff]
    %v1800 = vld [vmem:[%s2 + $0x68] sm:$0xff]
    %v1801 = vld [vmem:[%s2 + $0x70] sm:$0xff]
    %v1802 = vld [vmem:[%s2 + $0x78] sm:$0xff]
    %v1803 = vld [vmem:[%s2 + $0x80] sm:$0xff]
    %v1804 = vld [vmem:[%s2 + $0x88] sm:$0xff]
    %v1805 = vld [vmem:[%s2 + $0x90] sm:$0xff]
    %v1806 = vld [vmem:[%s2 + $0x98] sm:$0xff]
    %v1807 = vld [vmem:[%s2 + $0xa0] sm:$0xff]
    %v1808 = vld [vmem:[%s2 + $0xa8] sm:$0xff]
    %v1809 = vld [vmem:[%s2 + $0xb0] sm:$0xff]
    %v1810 = vld [vmem:[%s2 + $0xb8] sm:$0xff]
    %v1811 = vld [vmem:[%s2 + $0xc0] sm:$0xff]
    %v1812 = vld [vmem:[%s2 + $0xc8] sm:$0xff]
    %v1813 = vld [vmem:[%s2 + $0xd0] sm:$0xff]
    %v1814 = vld [vmem:[%s2 + $0xd8] sm:$0xff]
    %v1815 = vld [vmem:[%s2 + $0xe0] sm:$0xff]
    %v1816 = vld [vmem:[%s2 + $0xe8] sm:$0xff]
    %v1817 = vld [vmem:[%s2 + $0xf0] sm:$0xff]
    %v1818 = vld [vmem:[%s2 + $0xf8] sm:$0xff]
    %v1851 = vunpack.c.l.b16 %v1787
    %v1852 = vunpack.c.h.b16 %v1787
    %v1853 = vunpack.c.l.b16 %v1788
    %v1854 = vunpack.c.h.b16 %v1788
    %v1855 = vunpack.c.l.b16 %v1789
    %v1856 = vunpack.c.h.b16 %v1789
    %v1857 = vunpack.c.l.b16 %v1790
    %v1858 = vunpack.c.h.b16 %v1790
    %v1859 = vunpack.c.l.b16 %v1791
    %v1860 = vunpack.c.h.b16 %v1791
    %v1861 = vunpack.c.l.b16 %v1792
    %v1862 = vunpack.c.h.b16 %v1792
    %v1863 = vunpack.c.l.b16 %v1793
    %v1864 = vunpack.c.h.b16 %v1793
    %v1865 = vunpack.c.l.b16 %v1794
    %v1866 = vunpack.c.h.b16 %v1794
    %v1867 = vunpack.c.l.b16 %v1795
    %v1868 = vunpack.c.h.b16 %v1795
    %v1869 = vunpack.c.l.b16 %v1796
    %v1870 = vunpack.c.h.b16 %v1796
    %v1871 = vunpack.c.l.b16 %v1797
    %v1872 = vunpack.c.h.b16 %v1797
    %v1873 = vunpack.c.l.b16 %v1798
    %v1874 = vunpack.c.h.b16 %v1798
    %v1875 = vunpack.c.l.b16 %v1799
    %v1876 = vunpack.c.h.b16 %v1799
    %v1877 = vunpack.c.l.b16 %v1800
    %v1878 = vunpack.c.h.b16 %v1800
    %v1879 = vunpack.c.l.b16 %v1801
    %v1880 = vunpack.c.h.b16 %v1801
    %v1881 = vunpack.c.l.b16 %v1802
    %v1882 = vunpack.c.h.b16 %v1802
    %v1883 = vunpack.c.l.b16 %v1803
    %v1884 = vunpack.c.h.b16 %v1803
    %v1885 = vunpack.c.l.b16 %v1804
    %v1886 = vunpack.c.h.b16 %v1804
    %v1887 = vunpack.c.l.b16 %v1805
    %v1888 = vunpack.c.h.b16 %v1805
    %v1889 = vunpack.c.l.b16 %v1806
    %v1890 = vunpack.c.h.b16 %v1806
    %v1891 = vunpack.c.l.b16 %v1807
    %v1892 = vunpack.c.h.b16 %v1807
    %v1893 = vunpack.c.l.b16 %v1808
    %v1894 = vunpack.c.h.b16 %v1808
    %v1895 = vunpack.c.l.b16 %v1809
    %v1896 = vunpack.c.h.b16 %v1809
    %v1897 = vunpack.c.l.b16 %v1810
    %v1898 = vunpack.c.h.b16 %v1810
    %v1899 = vunpack.c.l.b16 %v1811
    %v1900 = vunpack.c.h.b16 %v1811
    %v1901 = vunpack.c.l.b16 %v1812
    %v1902 = vunpack.c.h.b16 %v1812
    %v1903 = vunpack.c.l.b16 %v1813
    %v1904 = vunpack.c.h.b16 %v1813
    %v1905 = vunpack.c.l.b16 %v1814
    %v1906 = vunpack.c.h.b16 %v1814
    %v1907 = vunpack.c.l.b16 %v1815
    %v1908 = vunpack.c.h.b16 %v1815
    %v1909 = vunpack.c.l.b16 %v1816
    %v1910 = vunpack.c.h.b16 %v1816
    %v1911 = vunpack.c.l.b16 %v1817
    %v1912 = vunpack.c.h.b16 %v1817
    %v1913 = vunpack.c.l.b16 %v1818
    %v1914 = vunpack.c.h.b16 %v1818
    %v1915 = vpack.c.b16 %v1855, %v1851
    %v1916 = vpack.c.b16 %v1856, %v1852
    %v1917 = vpack.c.b16 %v1857, %v1853
    %v1918 = vpack.c.b16 %v1858, %v1854
    %v1919 = vpack.c.b16 %v1863, %v1859
    %v1920 = vpack.c.b16 %v1864, %v1860
    %v1921 = vpack.c.b16 %v1865, %v1861
    %v1922 = vpack.c.b16 %v1866, %v1862
    %v1923 = vpack.c.b16 %v1871, %v1867
    %v1924 = vpack.c.b16 %v1872, %v1868
    %v1925 = vpack.c.b16 %v1873, %v1869
    %v1926 = vpack.c.b16 %v1874, %v1870
    %v1927 = vpack.c.b16 %v1879, %v1875
    %v1928 = vpack.c.b16 %v1880, %v1876
    %v1929 = vpack.c.b16 %v1881, %v1877
    %v1930 = vpack.c.b16 %v1882, %v1878
    %v1931 = vpack.c.b16 %v1887, %v1883
    %v1932 = vpack.c.b16 %v1888, %v1884
    %v1933 = vpack.c.b16 %v1889, %v1885
    %v1934 = vpack.c.b16 %v1890, %v1886
    %v1935 = vpack.c.b16 %v1895, %v1891
    %v1936 = vpack.c.b16 %v1896, %v1892
    %v1937 = vpack.c.b16 %v1897, %v1893
    %v1938 = vpack.c.b16 %v1898, %v1894
    %v1939 = vpack.c.b16 %v1903, %v1899
    %v1940 = vpack.c.b16 %v1904, %v1900
    %v1941 = vpack.c.b16 %v1905, %v1901
    %v1942 = vpack.c.b16 %v1906, %v1902
    %v1943 = vpack.c.b16 %v1911, %v1907
    %v1944 = vpack.c.b16 %v1912, %v1908
    %v1945 = vpack.c.b16 %v1913, %v1909
    %v1946 = vpack.c.b16 %v1914, %v1910
    %1979 = vmatprep.subr.bf16.mxu0 %v1916
    %1980 = vmatpush1.bf16.msra.mxu0 %v1915
    %1981 = vmatprep.subr.bf16.mxu0 %v1920
    %1982 = vmatpush1.bf16.msra.mxu0 %v1919
    %1983 = vmatprep.subr.bf16.mxu0 %v1924
    %1984 = vmatpush1.bf16.msra.mxu0 %v1923
    %1985 = vmatprep.subr.bf16.mxu0 %v1928
    %1986 = vmatpush1.bf16.msra.mxu0 %v1927
    %1987 = vmatprep.subr.bf16.mxu0 %v1932
    %1988 = vmatpush1.bf16.msra.mxu0 %v1931
    %1989 = vmatprep.subr.bf16.mxu0 %v1936
    %1990 = vmatpush1.bf16.msra.mxu0 %v1935
    %1991 = vmatprep.subr.bf16.mxu0 %v1940
    %1992 = vmatpush1.bf16.msra.mxu0 %v1939
    %1993 = vmatprep.subr.bf16.mxu0 %v1944
    %1994 = vmatpush1.bf16.msra.mxu0 %v1943
    %1995 = vmatprep.subr.bf16.mxu0 0
    %1996 = vmatpush1.bf16.msra.mxu0 0
    %1997 = vmatprep.subr.bf16.mxu0 0
    %1998 = vmatpush1.bf16.msra.mxu0 0
    %1999 = vmatprep.subr.bf16.mxu0 0
    %2000 = vmatpush1.bf16.msra.mxu0 0
    %2001 = vmatprep.subr.bf16.mxu0 0
    %2002 = vmatpush1.bf16.msra.mxu0 0
    %2003 = vmatprep.subr.bf16.mxu0 0
    %2004 = vmatpush1.bf16.msra.mxu0 0
    %2005 = vmatprep.subr.bf16.mxu0 0
    %2006 = vmatpush1.bf16.msra.mxu0 0
    %2007 = vmatprep.subr.bf16.mxu0 0
    %2008 = vmatpush1.bf16.msra.mxu0 0
    %2009 = vmatprep.subr.bf16.mxu0 0
    %2010 = vmatpush1.bf16.msra.mxu0 0
    %2011 = vmatprep.mubr.bf16.mxu0 0
    %2012 = vmatmul.mubr.bf16.gmra.mrb[0].mxu0 %v1786
    %v2013 = vpop.f32.mrb[0].mxu0
    %v2014 = vadd.f32 0.0, %v2013
    %v2015 = vpop.f32.mrb[0].mxu0
    %v2016 = vadd.f32 0.0, %v2015
    %v2017 = vpop.f32.mrb[0].mxu0
    %v2018 = vpop.f32.mrb[0].mxu0
    %2019 = vdwg.mxu0
    %2020 = vmatprep.subr.bf16.mxu0 %v1918
    %2021 = vmatpush1.bf16.msra.mxu0 %v1917
    %2022 = vmatprep.subr.bf16.mxu0 %v1922
    %2023 = vmatpush1.bf16.msra.mxu0 %v1921
    %2024 = vmatprep.subr.bf16.mxu0 %v1926
    %2025 = vmatpush1.bf16.msra.mxu0 %v1925
    %2026 = vmatprep.subr.bf16.mxu0 %v1930
    %2027 = vmatpush1.bf16.msra.mxu0 %v1929
    %2028 = vmatprep.subr.bf16.mxu0 %v1934
    %2029 = vmatpush1.bf16.msra.mxu0 %v1933
    %2030 = vmatprep.subr.bf16.mxu0 %v1938
    %2031 = vmatpush1.bf16.msra.mxu0 %v1937
    %2032 = vmatprep.subr.bf16.mxu0 %v1942
    %2033 = vmatpush1.bf16.msra.mxu0 %v1941
    %2034 = vmatprep.subr.bf16.mxu0 %v1946
    %2035 = vmatpush1.bf16.msra.mxu0 %v1945
    %2036 = vmatprep.subr.bf16.mxu0 0
    %2037 = vmatpush1.bf16.msra.mxu0 0
    %2038 = vmatprep.subr.bf16.mxu0 0
    %2039 = vmatpush1.bf16.msra.mxu0 0
    %2040 = vmatprep.subr.bf16.mxu0 0
    %2041 = vmatpush1.bf16.msra.mxu0 0
    %2042 = vmatprep.subr.bf16.mxu0 0
    %2043 = vmatpush1.bf16.msra.mxu0 0
    %2044 = vmatprep.subr.bf16.mxu0 0
    %2045 = vmatpush1.bf16.msra.mxu0 0
    %2046 = vmatprep.subr.bf16.mxu0 0
    %2047 = vmatpush1.bf16.msra.mxu0 0
    %2048 = vmatprep.subr.bf16.mxu0 0
    %2049 = vmatpush1.bf16.msra.mxu0 0
    %2050 = vmatprep.subr.bf16.mxu0 0
    %2051 = vmatpush1.bf16.msra.mxu0 0
    %2052 = vmatprep.mubr.bf16.mxu0 0
    %2053 = vmatmul.mubr.bf16.gmra.mrb[0].mxu0 %v1786
    %v2054 = vpop.f32.mrb[0].mxu0
    %v2055 = vadd.f32 0.0, %v2054
    %v2056 = vpop.f32.mrb[0].mxu0
    %v2057 = vadd.f32 0.0, %v2056
    %v2058 = vpop.f32.mrb[0].mxu0
    %v2059 = vpop.f32.mrb[0].mxu0
    %2060 = vdwg.mxu0
    %v2061 = vadd.f32 %v195, %v2014
    %v2062 = vadd.f32 %v197, %v2016
    %v2063 = vadd.f32 %v268, %v2055
    %v2064 = vadd.f32 %v270, %v2057
    %v2065 = vmul.f32 %v2061, 0.5
    %v2066 = vmul.f32 %v2062, 0.5
    %v2067 = vmul.f32 %v2063, 0.5
    %v2068 = vtanh.pop %v2065
    %v2069 = vtanh.pop %v2066
    %v2070 = vtanh.pop %v2067
    %v2071 = vmul.f32 %v2068, 0.5
    %v2072 = vmul.f32 %v2069, 0.5
    %v2073 = vmul.f32 %v2070, 0.5
    %v2074 = vadd.f32 %v2071, 0.5
    %v2075 = vadd.f32 %v2072, 0.5
    %v2076 = vadd.f32 %v2073, 0.5
    %v2077 = vtanh.pop %v2064
    %v2078 = vmul.f32 %v2075, %v1779
    %v2079 = vmul.f32 %v2074, %v2077
    %v2080 = vadd.f32 %v2078, %v2079
    %v2081 = vtanh.pop %v2080
    %v2082 = vmul.f32 %v2076, %v2081
    %2083 = vrot.lane.b32.xlu0 %v2082, 127
    %v2084 = vpop.permute.xlu0 %2083
    %v2085 = vmax.f32 %v2082, %v2084
    %2086 = vst [vmem:[#allocation2 + $0x28] sm:$0xff] %v2085
    %v2087 = vpack.c.bf16 %v2082, %v2082
    %v2088 = vld [vmem:[%s2] sm:$0xff]
    %v2089 = vld [vmem:[%s2 + $0x8] sm:$0xff]
    %v2090 = vld [vmem:[%s2 + $0x10] sm:$0xff]
    %v2091 = vld [vmem:[%s2 + $0x18] sm:$0xff]
    %v2092 = vld [vmem:[%s2 + $0x20] sm:$0xff]
    %v2093 = vld [vmem:[%s2 + $0x28] sm:$0xff]
    %v2094 = vld [vmem:[%s2 + $0x30] sm:$0xff]
    %v2095 = vld [vmem:[%s2 + $0x38] sm:$0xff]
    %v2096 = vld [vmem:[%s2 + $0x40] sm:$0xff]
    %v2097 = vld [vmem:[%s2 + $0x48] sm:$0xff]
    %v2098 = vld [vmem:[%s2 + $0x50] sm:$0xff]
    %v2099 = vld [vmem:[%s2 + $0x58] sm:$0xff]
    %v2100 = vld [vmem:[%s2 + $0x60] sm:$0xff]
    %v2101 = vld [vmem:[%s2 + $0x68] sm:$0xff]
    %v2102 = vld [vmem:[%s2 + $0x70] sm:$0xff]
    %v2103 = vld [vmem:[%s2 + $0x78] sm:$0xff]
    %v2104 = vld [vmem:[%s2 + $0x80] sm:$0xff]
    %v2105 = vld [vmem:[%s2 + $0x88] sm:$0xff]
    %v2106 = vld [vmem:[%s2 + $0x90] sm:$0xff]
    %v2107 = vld [vmem:[%s2 + $0x98] sm:$0xff]
    %v2108 = vld [vmem:[%s2 + $0xa0] sm:$0xff]
    %v2109 = vld [vmem:[%s2 + $0xa8] sm:$0xff]
    %v2110 = vld [vmem:[%s2 + $0xb0] sm:$0xff]
    %v2111 = vld [vmem:[%s2 + $0xb8] sm:$0xff]
    %v2112 = vld [vmem:[%s2 + $0xc0] sm:$0xff]
    %v2113 = vld [vmem:[%s2 + $0xc8] sm:$0xff]
    %v2114 = vld [vmem:[%s2 + $0xd0] sm:$0xff]
    %v2115 = vld [vmem:[%s2 + $0xd8] sm:$0xff]
    %v2116 = vld [vmem:[%s2 + $0xe0] sm:$0xff]
    %v2117 = vld [vmem:[%s2 + $0xe8] sm:$0xff]
    %v2118 = vld [vmem:[%s2 + $0xf0] sm:$0xff]
    %v2119 = vld [vmem:[%s2 + $0xf8] sm:$0xff]
    %v2152 = vunpack.c.l.b16 %v2088
    %v2153 = vunpack.c.h.b16 %v2088
    %v2154 = vunpack.c.l.b16 %v2089
    %v2155 = vunpack.c.h.b16 %v2089
    %v2156 = vunpack.c.l.b16 %v2090
    %v2157 = vunpack.c.h.b16 %v2090
    %v2158 = vunpack.c.l.b16 %v2091
    %v2159 = vunpack.c.h.b16 %v2091
    %v2160 = vunpack.c.l.b16 %v2092
    %v2161 = vunpack.c.h.b16 %v2092
    %v2162 = vunpack.c.l.b16 %v2093
    %v2163 = vunpack.c.h.b16 %v2093
    %v2164 = vunpack.c.l.b16 %v2094
    %v2165 = vunpack.c.h.b16 %v2094
    %v2166 = vunpack.c.l.b16 %v2095
    %v2167 = vunpack.c.h.b16 %v2095
    %v2168 = vunpack.c.l.b16 %v2096
    %v2169 = vunpack.c.h.b16 %v2096
    %v2170 = vunpack.c.l.b16 %v2097
    %v2171 = vunpack.c.h.b16 %v2097
    %v2172 = vunpack.c.l.b16 %v2098
    %v2173 = vunpack.c.h.b16 %v2098
    %v2174 = vunpack.c.l.b16 %v2099
    %v2175 = vunpack.c.h.b16 %v2099
    %v2176 = vunpack.c.l.b16 %v2100
    %v2177 = vunpack.c.h.b16 %v2100
    %v2178 = vunpack.c.l.b16 %v2101
    %v2179 = vunpack.c.h.b16 %v2101
    %v2180 = vunpack.c.l.b16 %v2102
    %v2181 = vunpack.c.h.b16 %v2102
    %v2182 = vunpack.c.l.b16 %v2103
    %v2183 = vunpack.c.h.b16 %v2103
    %v2184 = vunpack.c.l.b16 %v2104
    %v2185 = vunpack.c.h.b16 %v2104
    %v2186 = vunpack.c.l.b16 %v2105
    %v2187 = vunpack.c.h.b16 %v2105
    %v2188 = vunpack.c.l.b16 %v2106
    %v2189 = vunpack.c.h.b16 %v2106
    %v2190 = vunpack.c.l.b16 %v2107
    %v2191 = vunpack.c.h.b16 %v2107
    %v2192 = vunpack.c.l.b16 %v2108
    %v2193 = vunpack.c.h.b16 %v2108
    %v2194 = vunpack.c.l.b16 %v2109
    %v2195 = vunpack.c.h.b16 %v2109
    %v2196 = vunpack.c.l.b16 %v2110
    %v2197 = vunpack.c.h.b16 %v2110
    %v2198 = vunpack.c.l.b16 %v2111
    %v2199 = vunpack.c.h.b16 %v2111
    %v2200 = vunpack.c.l.b16 %v2112
    %v2201 = vunpack.c.h.b16 %v2112
    %v2202 = vunpack.c.l.b16 %v2113
    %v2203 = vunpack.c.h.b16 %v2113
    %v2204 = vunpack.c.l.b16 %v2114
    %v2205 = vunpack.c.h.b16 %v2114
    %v2206 = vunpack.c.l.b16 %v2115
    %v2207 = vunpack.c.h.b16 %v2115
    %v2208 = vunpack.c.l.b16 %v2116
    %v2209 = vunpack.c.h.b16 %v2116
    %v2210 = vunpack.c.l.b16 %v2117
    %v2211 = vunpack.c.h.b16 %v2117
    %v2212 = vunpack.c.l.b16 %v2118
    %v2213 = vunpack.c.h.b16 %v2118
    %v2214 = vunpack.c.l.b16 %v2119
    %v2215 = vunpack.c.h.b16 %v2119
    %v2216 = vpack.c.b16 %v2156, %v2152
    %v2217 = vpack.c.b16 %v2157, %v2153
    %v2218 = vpack.c.b16 %v2158, %v2154
    %v2219 = vpack.c.b16 %v2159, %v2155
    %v2220 = vpack.c.b16 %v2164, %v2160
    %v2221 = vpack.c.b16 %v2165, %v2161
    %v2222 = vpack.c.b16 %v2166, %v2162
    %v2223 = vpack.c.b16 %v2167, %v2163
    %v2224 = vpack.c.b16 %v2172, %v2168
    %v2225 = vpack.c.b16 %v2173, %v2169
    %v2226 = vpack.c.b16 %v2174, %v2170
    %v2227 = vpack.c.b16 %v2175, %v2171
    %v2228 = vpack.c.b16 %v2180, %v2176
    %v2229 = vpack.c.b16 %v2181, %v2177
    %v2230 = vpack.c.b16 %v2182, %v2178
    %v2231 = vpack.c.b16 %v2183, %v2179
    %v2232 = vpack.c.b16 %v2188, %v2184
    %v2233 = vpack.c.b16 %v2189, %v2185
    %v2234 = vpack.c.b16 %v2190, %v2186
    %v2235 = vpack.c.b16 %v2191, %v2187
    %v2236 = vpack.c.b16 %v2196, %v2192
    %v2237 = vpack.c.b16 %v2197, %v2193
    %v2238 = vpack.c.b16 %v2198, %v2194
    %v2239 = vpack.c.b16 %v2199, %v2195
    %v2240 = vpack.c.b16 %v2204, %v2200
    %v2241 = vpack.c.b16 %v2205, %v2201
    %v2242 = vpack.c.b16 %v2206, %v2202
    %v2243 = vpack.c.b16 %v2207, %v2203
    %v2244 = vpack.c.b16 %v2212, %v2208
    %v2245 = vpack.c.b16 %v2213, %v2209
    %v2246 = vpack.c.b16 %v2214, %v2210
    %v2247 = vpack.c.b16 %v2215, %v2211
    %2280 = vmatprep.subr.bf16.mxu0 %v2217
    %2281 = vmatpush1.bf16.msra.mxu0 %v2216
    %2282 = vmatprep.subr.bf16.mxu0 %v2221
    %2283 = vmatpush1.bf16.msra.mxu0 %v2220
    %2284 = vmatprep.subr.bf16.mxu0 %v2225
    %2285 = vmatpush1.bf16.msra.mxu0 %v2224
    %2286 = vmatprep.subr.bf16.mxu0 %v2229
    %2287 = vmatpush1.bf16.msra.mxu0 %v2228
    %2288 = vmatprep.subr.bf16.mxu0 %v2233
    %2289 = vmatpush1.bf16.msra.mxu0 %v2232
    %2290 = vmatprep.subr.bf16.mxu0 %v2237
    %2291 = vmatpush1.bf16.msra.mxu0 %v2236
    %2292 = vmatprep.subr.bf16.mxu0 %v2241
    %2293 = vmatpush1.bf16.msra.mxu0 %v2240
    %2294 = vmatprep.subr.bf16.mxu0 %v2245
    %2295 = vmatpush1.bf16.msra.mxu0 %v2244
    %2296 = vmatprep.subr.bf16.mxu0 0
    %2297 = vmatpush1.bf16.msra.mxu0 0
    %2298 = vmatprep.subr.bf16.mxu0 0
    %2299 = vmatpush1.bf16.msra.mxu0 0
    %2300 = vmatprep.subr.bf16.mxu0 0
    %2301 = vmatpush1.bf16.msra.mxu0 0
    %2302 = vmatprep.subr.bf16.mxu0 0
    %2303 = vmatpush1.bf16.msra.mxu0 0
    %2304 = vmatprep.subr.bf16.mxu0 0
    %2305 = vmatpush1.bf16.msra.mxu0 0
    %2306 = vmatprep.subr.bf16.mxu0 0
    %2307 = vmatpush1.bf16.msra.mxu0 0
    %2308 = vmatprep.subr.bf16.mxu0 0
    %2309 = vmatpush1.bf16.msra.mxu0 0
    %2310 = vmatprep.subr.bf16.mxu0 0
    %2311 = vmatpush1.bf16.msra.mxu0 0
    %2312 = vmatprep.mubr.bf16.mxu0 0
    %2313 = vmatmul.mubr.bf16.gmra.mrb[0].mxu0 %v2087
    %v2314 = vpop.f32.mrb[0].mxu0
    %v2315 = vadd.f32 0.0, %v2314
    %v2316 = vpop.f32.mrb[0].mxu0
    %v2317 = vadd.f32 0.0, %v2316
    %v2318 = vpop.f32.mrb[0].mxu0
    %v2319 = vpop.f32.mrb[0].mxu0
    %2320 = vdwg.mxu0
    %2321 = vmatprep.subr.bf16.mxu0 %v2219
    %2322 = vmatpush1.bf16.msra.mxu0 %v2218
    %2323 = vmatprep.subr.bf16.mxu0 %v2223
    %2324 = vmatpush1.bf16.msra.mxu0 %v2222
    %2325 = vmatprep.subr.bf16.mxu0 %v2227
    %2326 = vmatpush1.bf16.msra.mxu0 %v2226
    %2327 = vmatprep.subr.bf16.mxu0 %v2231
    %2328 = vmatpush1.bf16.msra.mxu0 %v2230
    %2329 = vmatprep.subr.bf16.mxu0 %v2235
    %2330 = vmatpush1.bf16.msra.mxu0 %v2234
    %2331 = vmatprep.subr.bf16.mxu0 %v2239
    %2332 = vmatpush1.bf16.msra.mxu0 %v2238
    %2333 = vmatprep.subr.bf16.mxu0 %v2243
    %2334 = vmatpush1.bf16.msra.mxu0 %v2242
    %2335 = vmatprep.subr.bf16.mxu0 %v2247
    %2336 = vmatpush1.bf16.msra.mxu0 %v2246
    %2337 = vmatprep.subr.bf16.mxu0 0
    %2338 = vmatpush1.bf16.msra.mxu0 0
    %2339 = vmatprep.subr.bf16.mxu0 0
    %2340 = vmatpush1.bf16.msra.mxu0 0
    %2341 = vmatprep.subr.bf16.mxu0 0
    %2342 = vmatpush1.bf16.msra.mxu0 0
    %2343 = vmatprep.subr.bf16.mxu0 0
    %2344 = vmatpush1.bf16.msra.mxu0 0
    %2345 = vmatprep.subr.bf16.mxu0 0
    %2346 = vmatpush1.bf16.msra.mxu0 0
    %2347 = vmatprep.subr.bf16.mxu0 0
    %2348 = vmatpush1.bf16.msra.mxu0 0
    %2349 = vmatprep.subr.bf16.mxu0 0
    %2350 = vmatpush1.bf16.msra.mxu0 0
    %2351 = vmatprep.subr.bf16.mxu0 0
    %2352 = vmatpush1.bf16.msra.mxu0 0
    %2353 = vmatprep.mubr.bf16.mxu0 0
    %2354 = vmatmul.mubr.bf16.gmra.mrb[0].mxu0 %v2087
    %v2355 = vpop.f32.mrb[0].mxu0
    %v2356 = vadd.f32 0.0, %v2355
    %v2357 = vpop.f32.mrb[0].mxu0
    %v2358 = vadd.f32 0.0, %v2357
    %v2359 = vpop.f32.mrb[0].mxu0
    %v2360 = vpop.f32.mrb[0].mxu0
    %2361 = vdwg.mxu0
    %v2362 = vadd.f32 %v201, %v2315
    %v2363 = vadd.f32 %v203, %v2317
    %v2364 = vadd.f32 %v274, %v2356
    %v2365 = vadd.f32 %v276, %v2358
    %v2366 = vmul.f32 %v2362, 0.5
    %v2367 = vmul.f32 %v2363, 0.5
    %v2368 = vmul.f32 %v2364, 0.5
    %v2369 = vtanh.pop %v2366
    %v2370 = vtanh.pop %v2367
    %v2371 = vtanh.pop %v2368
    %v2372 = vmul.f32 %v2369, 0.5
    %v2373 = vmul.f32 %v2370, 0.5
    %v2374 = vmul.f32 %v2371, 0.5
    %v2375 = vadd.f32 %v2372, 0.5
    %v2376 = vadd.f32 %v2373, 0.5
    %v2377 = vadd.f32 %v2374, 0.5
    %v2378 = vtanh.pop %v2365
    %v2379 = vmul.f32 %v2376, %v2080
    %v2380 = vmul.f32 %v2375, %v2378
    %v2381 = vadd.f32 %v2379, %v2380
    %v2382 = vtanh.pop %v2381
    %v2383 = vmul.f32 %v2377, %v2382
    %2384 = vrot.lane.b32.xlu0 %v2383, 127
    %v2385 = vpop.permute.xlu0 %2384
    %v2386 = vmax.f32 %v2383, %v2385
    %2387 = vst [vmem:[#allocation2 + $0x30] sm:$0xff] %v2386
    %v2388 = vpack.c.bf16 %v2383, %v2383
    %v2389 = vld [vmem:[%s2] sm:$0xff]
    %v2390 = vld [vmem:[%s2 + $0x8] sm:$0xff]
    %v2391 = vld [vmem:[%s2 + $0x10] sm:$0xff]
    %v2392 = vld [vmem:[%s2 + $0x18] sm:$0xff]
    %v2393 = vld [vmem:[%s2 + $0x20] sm:$0xff]
    %v2394 = vld [vmem:[%s2 + $0x28] sm:$0xff]
    %v2395 = vld [vmem:[%s2 + $0x30] sm:$0xff]
    %v2396 = vld [vmem:[%s2 + $0x38] sm:$0xff]
    %v2397 = vld [vmem:[%s2 + $0x40] sm:$0xff]
    %v2398 = vld [vmem:[%s2 + $0x48] sm:$0xff]
    %v2399 = vld [vmem:[%s2 + $0x50] sm:$0xff]
    %v2400 = vld [vmem:[%s2 + $0x58] sm:$0xff]
    %v2401 = vld [vmem:[%s2 + $0x60] sm:$0xff]
    %v2402 = vld [vmem:[%s2 + $0x68] sm:$0xff]
    %v2403 = vld [vmem:[%s2 + $0x70] sm:$0xff]
    %v2404 = vld [vmem:[%s2 + $0x78] sm:$0xff]
    %v2405 = vld [vmem:[%s2 + $0x80] sm:$0xff]
    %v2406 = vld [vmem:[%s2 + $0x88] sm:$0xff]
    %v2407 = vld [vmem:[%s2 + $0x90] sm:$0xff]
    %v2408 = vld [vmem:[%s2 + $0x98] sm:$0xff]
    %v2409 = vld [vmem:[%s2 + $0xa0] sm:$0xff]
    %v2410 = vld [vmem:[%s2 + $0xa8] sm:$0xff]
    %v2411 = vld [vmem:[%s2 + $0xb0] sm:$0xff]
    %v2412 = vld [vmem:[%s2 + $0xb8] sm:$0xff]
    %v2413 = vld [vmem:[%s2 + $0xc0] sm:$0xff]
    %v2414 = vld [vmem:[%s2 + $0xc8] sm:$0xff]
    %v2415 = vld [vmem:[%s2 + $0xd0] sm:$0xff]
    %v2416 = vld [vmem:[%s2 + $0xd8] sm:$0xff]
    %v2417 = vld [vmem:[%s2 + $0xe0] sm:$0xff]
    %v2418 = vld [vmem:[%s2 + $0xe8] sm:$0xff]
    %v2419 = vld [vmem:[%s2 + $0xf0] sm:$0xff]
    %v2420 = vld [vmem:[%s2 + $0xf8] sm:$0xff]
    %v2453 = vunpack.c.l.b16 %v2389
    %v2454 = vunpack.c.h.b16 %v2389
    %v2455 = vunpack.c.l.b16 %v2390
    %v2456 = vunpack.c.h.b16 %v2390
    %v2457 = vunpack.c.l.b16 %v2391
    %v2458 = vunpack.c.h.b16 %v2391
    %v2459 = vunpack.c.l.b16 %v2392
    %v2460 = vunpack.c.h.b16 %v2392
    %v2461 = vunpack.c.l.b16 %v2393
    %v2462 = vunpack.c.h.b16 %v2393
    %v2463 = vunpack.c.l.b16 %v2394
    %v2464 = vunpack.c.h.b16 %v2394
    %v2465 = vunpack.c.l.b16 %v2395
    %v2466 = vunpack.c.h.b16 %v2395
    %v2467 = vunpack.c.l.b16 %v2396
    %v2468 = vunpack.c.h.b16 %v2396
    %v2469 = vunpack.c.l.b16 %v2397
    %v2470 = vunpack.c.h.b16 %v2397
    %v2471 = vunpack.c.l.b16 %v2398
    %v2472 = vunpack.c.h.b16 %v2398
    %v2473 = vunpack.c.l.b16 %v2399
    %v2474 = vunpack.c.h.b16 %v2399
    %v2475 = vunpack.c.l.b16 %v2400
    %v2476 = vunpack.c.h.b16 %v2400
    %v2477 = vunpack.c.l.b16 %v2401
    %v2478 = vunpack.c.h.b16 %v2401
    %v2479 = vunpack.c.l.b16 %v2402
    %v2480 = vunpack.c.h.b16 %v2402
    %v2481 = vunpack.c.l.b16 %v2403
    %v2482 = vunpack.c.h.b16 %v2403
    %v2483 = vunpack.c.l.b16 %v2404
    %v2484 = vunpack.c.h.b16 %v2404
    %v2485 = vunpack.c.l.b16 %v2405
    %v2486 = vunpack.c.h.b16 %v2405
    %v2487 = vunpack.c.l.b16 %v2406
    %v2488 = vunpack.c.h.b16 %v2406
    %v2489 = vunpack.c.l.b16 %v2407
    %v2490 = vunpack.c.h.b16 %v2407
    %v2491 = vunpack.c.l.b16 %v2408
    %v2492 = vunpack.c.h.b16 %v2408
    %v2493 = vunpack.c.l.b16 %v2409
    %v2494 = vunpack.c.h.b16 %v2409
    %v2495 = vunpack.c.l.b16 %v2410
    %v2496 = vunpack.c.h.b16 %v2410
    %v2497 = vunpack.c.l.b16 %v2411
    %v2498 = vunpack.c.h.b16 %v2411
    %v2499 = vunpack.c.l.b16 %v2412
    %v2500 = vunpack.c.h.b16 %v2412
    %v2501 = vunpack.c.l.b16 %v2413
    %v2502 = vunpack.c.h.b16 %v2413
    %v2503 = vunpack.c.l.b16 %v2414
    %v2504 = vunpack.c.h.b16 %v2414
    %v2505 = vunpack.c.l.b16 %v2415
    %v2506 = vunpack.c.h.b16 %v2415
    %v2507 = vunpack.c.l.b16 %v2416
    %v2508 = vunpack.c.h.b16 %v2416
    %v2509 = vunpack.c.l.b16 %v2417
    %v2510 = vunpack.c.h.b16 %v2417
    %v2511 = vunpack.c.l.b16 %v2418
    %v2512 = vunpack.c.h.b16 %v2418
    %v2513 = vunpack.c.l.b16 %v2419
    %v2514 = vunpack.c.h.b16 %v2419
    %v2515 = vunpack.c.l.b16 %v2420
    %v2516 = vunpack.c.h.b16 %v2420
    %v2517 = vpack.c.b16 %v2457, %v2453
    %v2518 = vpack.c.b16 %v2458, %v2454
    %v2519 = vpack.c.b16 %v2459, %v2455
    %v2520 = vpack.c.b16 %v2460, %v2456
    %v2521 = vpack.c.b16 %v2465, %v2461
    %v2522 = vpack.c.b16 %v2466, %v2462
    %v2523 = vpack.c.b16 %v2467, %v2463
    %v2524 = vpack.c.b16 %v2468, %v2464
    %v2525 = vpack.c.b16 %v2473, %v2469
    %v2526 = vpack.c.b16 %v2474, %v2470
    %v2527 = vpack.c.b16 %v2475, %v2471
    %v2528 = vpack.c.b16 %v2476, %v2472
    %v2529 = vpack.c.b16 %v2481, %v2477
    %v2530 = vpack.c.b16 %v2482, %v2478
    %v2531 = vpack.c.b16 %v2483, %v2479
    %v2532 = vpack.c.b16 %v2484, %v2480
    %v2533 = vpack.c.b16 %v2489, %v2485
    %v2534 = vpack.c.b16 %v2490, %v2486
    %v2535 = vpack.c.b16 %v2491, %v2487
    %v2536 = vpack.c.b16 %v2492, %v2488
    %v2537 = vpack.c.b16 %v2497, %v2493
    %v2538 = vpack.c.b16 %v2498, %v2494
    %v2539 = vpack.c.b16 %v2499, %v2495
    %v2540 = vpack.c.b16 %v2500, %v2496
    %v2541 = vpack.c.b16 %v2505, %v2501
    %v2542 = vpack.c.b16 %v2506, %v2502
    %v2543 = vpack.c.b16 %v2507, %v2503
    %v2544 = vpack.c.b16 %v2508, %v2504
    %v2545 = vpack.c.b16 %v2513, %v2509
    %v2546 = vpack.c.b16 %v2514, %v2510
    %v2547 = vpack.c.b16 %v2515, %v2511
    %v2548 = vpack.c.b16 %v2516, %v2512
    %2581 = vmatprep.subr.bf16.mxu0 %v2518
    %2582 = vmatpush1.bf16.msra.mxu0 %v2517
    %2583 = vmatprep.subr.bf16.mxu0 %v2522
    %2584 = vmatpush1.bf16.msra.mxu0 %v2521
    %2585 = vmatprep.subr.bf16.mxu0 %v2526
    %2586 = vmatpush1.bf16.msra.mxu0 %v2525
    %2587 = vmatprep.subr.bf16.mxu0 %v2530
    %2588 = vmatpush1.bf16.msra.mxu0 %v2529
    %2589 = vmatprep.subr.bf16.mxu0 %v2534
    %2590 = vmatpush1.bf16.msra.mxu0 %v2533
    %2591 = vmatprep.subr.bf16.mxu0 %v2538
    %2592 = vmatpush1.bf16.msra.mxu0 %v2537
    %2593 = vmatprep.subr.bf16.mxu0 %v2542
    %2594 = vmatpush1.bf16.msra.mxu0 %v2541
    %2595 = vmatprep.subr.bf16.mxu0 %v2546
    %2596 = vmatpush1.bf16.msra.mxu0 %v2545
    %2597 = vmatprep.subr.bf16.mxu0 0
    %2598 = vmatpush1.bf16.msra.mxu0 0
    %2599 = vmatprep.subr.bf16.mxu0 0
    %2600 = vmatpush1.bf16.msra.mxu0 0
    %2601 = vmatprep.subr.bf16.mxu0 0
    %2602 = vmatpush1.bf16.msra.mxu0 0
    %2603 = vmatprep.subr.bf16.mxu0 0
    %2604 = vmatpush1.bf16.msra.mxu0 0
    %2605 = vmatprep.subr.bf16.mxu0 0
    %2606 = vmatpush1.bf16.msra.mxu0 0
    %2607 = vmatprep.subr.bf16.mxu0 0
    %2608 = vmatpush1.bf16.msra.mxu0 0
    %2609 = vmatprep.subr.bf16.mxu0 0
    %2610 = vmatpush1.bf16.msra.mxu0 0
    %2611 = vmatprep.subr.bf16.mxu0 0
    %2612 = vmatpush1.bf16.msra.mxu0 0
    %2613 = vmatprep.mubr.bf16.mxu0 0
    %2614 = vmatmul.mubr.bf16.gmra.mrb[0].mxu0 %v2388
    %v2615 = vpop.f32.mrb[0].mxu0
    %v2616 = vadd.f32 0.0, %v2615
    %v2617 = vpop.f32.mrb[0].mxu0
    %v2618 = vadd.f32 0.0, %v2617
    %v2619 = vpop.f32.mrb[0].mxu0
    %v2620 = vpop.f32.mrb[0].mxu0
    %2621 = vdwg.mxu0
    %2622 = vmatprep.subr.bf16.mxu0 %v2520
    %2623 = vmatpush1.bf16.msra.mxu0 %v2519
    %2624 = vmatprep.subr.bf16.mxu0 %v2524
    %2625 = vmatpush1.bf16.msra.mxu0 %v2523
    %2626 = vmatprep.subr.bf16.mxu0 %v2528
    %2627 = vmatpush1.bf16.msra.mxu0 %v2527
    %2628 = vmatprep.subr.bf16.mxu0 %v2532
    %2629 = vmatpush1.bf16.msra.mxu0 %v2531
    %2630 = vmatprep.subr.bf16.mxu0 %v2536
    %2631 = vmatpush1.bf16.msra.mxu0 %v2535
    %2632 = vmatprep.subr.bf16.mxu0 %v2540
    %2633 = vmatpush1.bf16.msra.mxu0 %v2539
    %2634 = vmatprep.subr.bf16.mxu0 %v2544
    %2635 = vmatpush1.bf16.msra.mxu0 %v2543
    %2636 = vmatprep.subr.bf16.mxu0 %v2548
    %2637 = vmatpush1.bf16.msra.mxu0 %v2547
    %2638 = vmatprep.subr.bf16.mxu0 0
    %2639 = vmatpush1.bf16.msra.mxu0 0
    %2640 = vmatprep.subr.bf16.mxu0 0
    %2641 = vmatpush1.bf16.msra.mxu0 0
    %2642 = vmatprep.subr.bf16.mxu0 0
    %2643 = vmatpush1.bf16.msra.mxu0 0
    %2644 = vmatprep.subr.bf16.mxu0 0
    %2645 = vmatpush1.bf16.msra.mxu0 0
    %2646 = vmatprep.subr.bf16.mxu0 0
    %2647 = vmatpush1.bf16.msra.mxu0 0
    %2648 = vmatprep.subr.bf16.mxu0 0
    %2649 = vmatpush1.bf16.msra.mxu0 0
    %2650 = vmatprep.subr.bf16.mxu0 0
    %2651 = vmatpush1.bf16.msra.mxu0 0
    %2652 = vmatprep.subr.bf16.mxu0 0
    %2653 = vmatpush1.bf16.msra.mxu0 0
    %2654 = vmatprep.mubr.bf16.mxu0 0
    %2655 = vmatmul.mubr.bf16.gmra.mrb[0].mxu0 %v2388
    %v2656 = vpop.f32.mrb[0].mxu0
    %v2657 = vadd.f32 0.0, %v2656
    %v2658 = vpop.f32.mrb[0].mxu0
    %v2659 = vadd.f32 0.0, %v2658
    %v2660 = vpop.f32.mrb[0].mxu0
    %v2661 = vpop.f32.mrb[0].mxu0
    %2662 = vdwg.mxu0
    %v2663 = vadd.f32 %v205, %v2616
    %v2664 = vadd.f32 %v207, %v2618
    %v2665 = vadd.f32 %v278, %v2657
    %v2666 = vadd.f32 %v280, %v2659
    %v2667 = vmul.f32 %v2663, 0.5
    %v2668 = vmul.f32 %v2664, 0.5
    %v2669 = vmul.f32 %v2665, 0.5
    %v2670 = vtanh.pop %v2667
    %v2671 = vtanh.pop %v2668
    %v2672 = vtanh.pop %v2669
    %v2673 = vmul.f32 %v2670, 0.5
    %v2674 = vmul.f32 %v2671, 0.5
    %v2675 = vmul.f32 %v2672, 0.5
    %v2676 = vadd.f32 %v2673, 0.5
    %v2677 = vadd.f32 %v2674, 0.5
    %v2678 = vadd.f32 %v2675, 0.5
    %v2679 = vtanh.pop %v2666
    %v2680 = vmul.f32 %v2677, %v2381
    %v2681 = vmul.f32 %v2676, %v2679
    %v2682 = vadd.f32 %v2680, %v2681
    %v2683 = vtanh.pop %v2682
    %v2684 = vmul.f32 %v2678, %v2683
    %2685 = vrot.lane.b32.xlu0 %v2684, 127
    %v2686 = vpop.permute.xlu0 %2685
    %v2687 = vmax.f32 %v2684, %v2686
    %2688 = vst [vmem:[#allocation2 + $0x38] sm:$0xff] %v2687
    %v2689 = vld [vmem:[#allocation2] sm:$0xff]
    %v2690 = vld [vmem:[#allocation2 + $0x8] sm:$0xff]
    %v2691 = vld [vmem:[#allocation2 + $0x10] sm:$0xff]
    %v2692 = vld [vmem:[#allocation2 + $0x18] sm:$0xff]
    %v2693 = vld [vmem:[#allocation2 + $0x20] sm:$0xff]
    %v2694 = vld [vmem:[#allocation2 + $0x28] sm:$0xff]
    %v2695 = vld [vmem:[#allocation2 + $0x30] sm:$0xff]
    %v2696 = vld [vmem:[#allocation2 + $0x38] sm:$0xff]
    %v2697 = vpack.c.bf16 %v2689, %v2689
    %v2698 = vpack.c.bf16 %v2690, %v2690
    %v2699 = vpack.c.bf16 %v2691, %v2691
    %v2700 = vpack.c.bf16 %v2692, %v2692
    %v2701 = vpack.c.bf16 %v2693, %v2693
    %v2702 = vpack.c.bf16 %v2694, %v2694
    %v2703 = vpack.c.bf16 %v2695, %v2695
    %v2704 = vpack.c.bf16 %v2696, %v2696
    %v2705 = vld [vmem:[%s4] sm:$0xf]
    %v2706 = vld [vmem:[%s4 + $0x4] sm:$0xf]
    %v2707 = vld [vmem:[%s4 + $0x8] sm:$0xf]
    %v2708 = vld [vmem:[%s4 + $0xc] sm:$0xf]
    %v2709 = vld [vmem:[%s4 + $0x10] sm:$0xf]
    %v2710 = vld [vmem:[%s4 + $0x14] sm:$0xf]
    %v2711 = vld [vmem:[%s4 + $0x18] sm:$0xf]
    %v2712 = vld [vmem:[%s4 + $0x1c] sm:$0xf]
    %v2713 = vld [vmem:[%s4 + $0x20] sm:$0xf]
    %v2714 = vld [vmem:[%s4 + $0x24] sm:$0xf]
    %v2715 = vld [vmem:[%s4 + $0x28] sm:$0xf]
    %v2716 = vld [vmem:[%s4 + $0x2c] sm:$0xf]
    %v2717 = vld [vmem:[%s4 + $0x30] sm:$0xf]
    %v2718 = vld [vmem:[%s4 + $0x34] sm:$0xf]
    %v2719 = vld [vmem:[%s4 + $0x38] sm:$0xf]
    %v2720 = vld [vmem:[%s4 + $0x3c] sm:$0xf]
    %v2721 = vld [vmem:[%s4 + $0x40] sm:$0xf]
    %v2722 = vld [vmem:[%s4 + $0x44] sm:$0xf]
    %v2723 = vld [vmem:[%s4 + $0x48] sm:$0xf]
    %v2724 = vld [vmem:[%s4 + $0x4c] sm:$0xf]
    %v2725 = vld [vmem:[%s4 + $0x50] sm:$0xf]
    %v2726 = vld [vmem:[%s4 + $0x54] sm:$0xf]
    %v2727 = vld [vmem:[%s4 + $0x58] sm:$0xf]
    %v2728 = vld [vmem:[%s4 + $0x5c] sm:$0xf]
    %v2729 = vld [vmem:[%s4 + $0x60] sm:$0xf]
    %v2730 = vld [vmem:[%s4 + $0x64] sm:$0xf]
    %v2731 = vld [vmem:[%s4 + $0x68] sm:$0xf]
    %v2732 = vld [vmem:[%s4 + $0x6c] sm:$0xf]
    %v2733 = vld [vmem:[%s4 + $0x70] sm:$0xf]
    %v2734 = vld [vmem:[%s4 + $0x74] sm:$0xf]
    %v2735 = vld [vmem:[%s4 + $0x78] sm:$0xf]
    %v2736 = vld [vmem:[%s4 + $0x7c] sm:$0xf]
    %v2737 = vld [vmem:[%s4 + $0x80] sm:$0xf]
    %v2738 = vld [vmem:[%s4 + $0x84] sm:$0xf]
    %v2739 = vld [vmem:[%s4 + $0x88] sm:$0xf]
    %v2740 = vld [vmem:[%s4 + $0x8c] sm:$0xf]
    %v2741 = vld [vmem:[%s4 + $0x90] sm:$0xf]
    %v2742 = vld [vmem:[%s4 + $0x94] sm:$0xf]
    %v2743 = vld [vmem:[%s4 + $0x98] sm:$0xf]
    %v2744 = vld [vmem:[%s4 + $0x9c] sm:$0xf]
    %v2745 = vld [vmem:[%s4 + $0xa0] sm:$0xf]
    %v2746 = vld [vmem:[%s4 + $0xa4] sm:$0xf]
    %v2747 = vld [vmem:[%s4 + $0xa8] sm:$0xf]
    %v2748 = vld [vmem:[%s4 + $0xac] sm:$0xf]
    %v2749 = vld [vmem:[%s4 + $0xb0] sm:$0xf]
    %v2750 = vld [vmem:[%s4 + $0xb4] sm:$0xf]
    %v2751 = vld [vmem:[%s4 + $0xb8] sm:$0xf]
    %v2752 = vld [vmem:[%s4 + $0xbc] sm:$0xf]
    %v2753 = vld [vmem:[%s4 + $0xc0] sm:$0xf]
    %v2754 = vld [vmem:[%s4 + $0xc4] sm:$0xf]
    %v2755 = vld [vmem:[%s4 + $0xc8] sm:$0xf]
    %v2756 = vld [vmem:[%s4 + $0xcc] sm:$0xf]
    %v2757 = vld [vmem:[%s4 + $0xd0] sm:$0xf]
    %v2758 = vld [vmem:[%s4 + $0xd4] sm:$0xf]
    %v2759 = vld [vmem:[%s4 + $0xd8] sm:$0xf]
    %v2760 = vld [vmem:[%s4 + $0xdc] sm:$0xf]
    %v2761 = vld [vmem:[%s4 + $0xe0] sm:$0xf]
    %v2762 = vld [vmem:[%s4 + $0xe4] sm:$0xf]
    %v2763 = vld [vmem:[%s4 + $0xe8] sm:$0xf]
    %v2764 = vld [vmem:[%s4 + $0xec] sm:$0xf]
    %v2765 = vld [vmem:[%s4 + $0xf0] sm:$0xf]
    %v2766 = vld [vmem:[%s4 + $0xf4] sm:$0xf]
    %v2767 = vld [vmem:[%s4 + $0xf8] sm:$0xf]
    %v2768 = vld [vmem:[%s4 + $0xfc] sm:$0xf]
    %v2769 = vld [vmem:[%s4 + $0x100] sm:$0xf]
    %v2770 = vld [vmem:[%s4 + $0x104] sm:$0xf]
    %v2771 = vld [vmem:[%s4 + $0x108] sm:$0xf]
    %v2772 = vld [vmem:[%s4 + $0x10c] sm:$0xf]
    %v2773 = vld [vmem:[%s4 + $0x110] sm:$0xf]
    %v2774 = vld [vmem:[%s4 + $0x114] sm:$0xf]
    %v2775 = vld [vmem:[%s4 + $0x118] sm:$0xf]
    %v2776 = vld [vmem:[%s4 + $0x11c] sm:$0xf]
    %v2777 = vld [vmem:[%s4 + $0x120] sm:$0xf]
    %v2778 = vld [vmem:[%s4 + $0x124] sm:$0xf]
    %v2779 = vld [vmem:[%s4 + $0x128] sm:$0xf]
    %v2780 = vld [vmem:[%s4 + $0x12c] sm:$0xf]
    %v2781 = vld [vmem:[%s4 + $0x130] sm:$0xf]
    %v2782 = vld [vmem:[%s4 + $0x134] sm:$0xf]
    %v2783 = vld [vmem:[%s4 + $0x138] sm:$0xf]
    %v2784 = vld [vmem:[%s4 + $0x13c] sm:$0xf]
    %v2785 = vld [vmem:[%s4 + $0x140] sm:$0xf]
    %v2786 = vld [vmem:[%s4 + $0x144] sm:$0xf]
    %v2787 = vld [vmem:[%s4 + $0x148] sm:$0xf]
    %v2788 = vld [vmem:[%s4 + $0x14c] sm:$0xf]
    %v2789 = vld [vmem:[%s4 + $0x150] sm:$0xf]
    %v2790 = vld [vmem:[%s4 + $0x154] sm:$0xf]
    %v2791 = vld [vmem:[%s4 + $0x158] sm:$0xf]
    %v2792 = vld [vmem:[%s4 + $0x15c] sm:$0xf]
    %v2793 = vld [vmem:[%s4 + $0x160] sm:$0xf]
    %v2794 = vld [vmem:[%s4 + $0x164] sm:$0xf]
    %v2795 = vld [vmem:[%s4 + $0x168] sm:$0xf]
    %v2796 = vld [vmem:[%s4 + $0x16c] sm:$0xf]
    %v2797 = vld [vmem:[%s4 + $0x170] sm:$0xf]
    %v2798 = vld [vmem:[%s4 + $0x174] sm:$0xf]
    %v2799 = vld [vmem:[%s4 + $0x178] sm:$0xf]
    %v2800 = vld [vmem:[%s4 + $0x17c] sm:$0xf]
    %v2801 = vld [vmem:[%s4 + $0x180] sm:$0xf]
    %v2802 = vld [vmem:[%s4 + $0x184] sm:$0xf]
    %v2803 = vld [vmem:[%s4 + $0x188] sm:$0xf]
    %v2804 = vld [vmem:[%s4 + $0x18c] sm:$0xf]
    %v2805 = vld [vmem:[%s4 + $0x190] sm:$0xf]
    %v2806 = vld [vmem:[%s4 + $0x194] sm:$0xf]
    %v2807 = vld [vmem:[%s4 + $0x198] sm:$0xf]
    %v2808 = vld [vmem:[%s4 + $0x19c] sm:$0xf]
    %v2809 = vld [vmem:[%s4 + $0x1a0] sm:$0xf]
    %v2810 = vld [vmem:[%s4 + $0x1a4] sm:$0xf]
    %v2811 = vld [vmem:[%s4 + $0x1a8] sm:$0xf]
    %v2812 = vld [vmem:[%s4 + $0x1ac] sm:$0xf]
    %v2813 = vld [vmem:[%s4 + $0x1b0] sm:$0xf]
    %v2814 = vld [vmem:[%s4 + $0x1b4] sm:$0xf]
    %v2815 = vld [vmem:[%s4 + $0x1b8] sm:$0xf]
    %v2816 = vld [vmem:[%s4 + $0x1bc] sm:$0xf]
    %v2817 = vld [vmem:[%s4 + $0x1c0] sm:$0xf]
    %v2818 = vld [vmem:[%s4 + $0x1c4] sm:$0xf]
    %v2819 = vld [vmem:[%s4 + $0x1c8] sm:$0xf]
    %v2820 = vld [vmem:[%s4 + $0x1cc] sm:$0xf]
    %v2821 = vld [vmem:[%s4 + $0x1d0] sm:$0xf]
    %v2822 = vld [vmem:[%s4 + $0x1d4] sm:$0xf]
    %v2823 = vld [vmem:[%s4 + $0x1d8] sm:$0xf]
    %v2824 = vld [vmem:[%s4 + $0x1dc] sm:$0xf]
    %v2825 = vld [vmem:[%s4 + $0x1e0] sm:$0xf]
    %v2826 = vld [vmem:[%s4 + $0x1e4] sm:$0xf]
    %v2827 = vld [vmem:[%s4 + $0x1e8] sm:$0xf]
    %v2828 = vld [vmem:[%s4 + $0x1ec] sm:$0xf]
    %v2829 = vld [vmem:[%s4 + $0x1f0] sm:$0xf]
    %v2830 = vld [vmem:[%s4 + $0x1f4] sm:$0xf]
    %v2831 = vld [vmem:[%s4 + $0x1f8] sm:$0xf]
    %v2832 = vld [vmem:[%s4 + $0x1fc] sm:$0xf]
    %v2833 = vld [vmem:[%s5] sm:$0x1]
    %v2835 = vlaneseq
    %v2836 = vshrl.u32 %v2835, 7
    %v2837 = vsub.s32 0, %v2836
    %v2838 = vrot.slane %v2833, %v2837
    %v2968 = vunpack.c.l.b16 %v2705
    %v2969 = vunpack.c.l.b16 %v2706
    %v2970 = vunpack.c.l.b16 %v2707
    %v2971 = vunpack.c.l.b16 %v2708
    %v2972 = vunpack.c.l.b16 %v2709
    %v2973 = vunpack.c.l.b16 %v2710
    %v2974 = vunpack.c.l.b16 %v2711
    %v2975 = vunpack.c.l.b16 %v2712
    %v2976 = vunpack.c.l.b16 %v2713
    %v2977 = vunpack.c.l.b16 %v2714
    %v2978 = vunpack.c.l.b16 %v2715
    %v2979 = vunpack.c.l.b16 %v2716
    %v2980 = vunpack.c.l.b16 %v2717
    %v2981 = vunpack.c.l.b16 %v2718
    %v2982 = vunpack.c.l.b16 %v2719
    %v2983 = vunpack.c.l.b16 %v2720
    %v2984 = vunpack.c.l.b16 %v2721
    %v2985 = vunpack.c.l.b16 %v2722
    %v2986 = vunpack.c.l.b16 %v2723
    %v2987 = vunpack.c.l.b16 %v2724
    %v2988 = vunpack.c.l.b16 %v2725
    %v2989 = vunpack.c.l.b16 %v2726
    %v2990 = vunpack.c.l.b16 %v2727
    %v2991 = vunpack.c.l.b16 %v2728
    %v2992 = vunpack.c.l.b16 %v2729
    %v2993 = vunpack.c.l.b16 %v2730
    %v2994 = vunpack.c.l.b16 %v2731
    %v2995 = vunpack.c.l.b16 %v2732
    %v2996 = vunpack.c.l.b16 %v2733
    %v2997 = vunpack.c.l.b16 %v2734
    %v2998 = vunpack.c.l.b16 %v2735
    %v2999 = vunpack.c.l.b16 %v2736
    %v3000 = vunpack.c.l.b16 %v2737
    %v3001 = vunpack.c.l.b16 %v2738
    %v3002 = vunpack.c.l.b16 %v2739
    %v3003 = vunpack.c.l.b16 %v2740
    %v3004 = vunpack.c.l.b16 %v2741
    %v3005 = vunpack.c.l.b16 %v2742
    %v3006 = vunpack.c.l.b16 %v2743
    %v3007 = vunpack.c.l.b16 %v2744
    %v3008 = vunpack.c.l.b16 %v2745
    %v3009 = vunpack.c.l.b16 %v2746
    %v3010 = vunpack.c.l.b16 %v2747
    %v3011 = vunpack.c.l.b16 %v2748
    %v3012 = vunpack.c.l.b16 %v2749
    %v3013 = vunpack.c.l.b16 %v2750
    %v3014 = vunpack.c.l.b16 %v2751
    %v3015 = vunpack.c.l.b16 %v2752
    %v3016 = vunpack.c.l.b16 %v2753
    %v3017 = vunpack.c.l.b16 %v2754
    %v3018 = vunpack.c.l.b16 %v2755
    %v3019 = vunpack.c.l.b16 %v2756
    %v3020 = vunpack.c.l.b16 %v2757
    %v3021 = vunpack.c.l.b16 %v2758
    %v3022 = vunpack.c.l.b16 %v2759
    %v3023 = vunpack.c.l.b16 %v2760
    %v3024 = vunpack.c.l.b16 %v2761
    %v3025 = vunpack.c.l.b16 %v2762
    %v3026 = vunpack.c.l.b16 %v2763
    %v3027 = vunpack.c.l.b16 %v2764
    %v3028 = vunpack.c.l.b16 %v2765
    %v3029 = vunpack.c.l.b16 %v2766
    %v3030 = vunpack.c.l.b16 %v2767
    %v3031 = vunpack.c.l.b16 %v2768
    %v3032 = vunpack.c.l.b16 %v2769
    %v3033 = vunpack.c.l.b16 %v2770
    %v3034 = vunpack.c.l.b16 %v2771
    %v3035 = vunpack.c.l.b16 %v2772
    %v3036 = vunpack.c.l.b16 %v2773
    %v3037 = vunpack.c.l.b16 %v2774
    %v3038 = vunpack.c.l.b16 %v2775
    %v3039 = vunpack.c.l.b16 %v2776
    %v3040 = vunpack.c.l.b16 %v2777
    %v3041 = vunpack.c.l.b16 %v2778
    %v3042 = vunpack.c.l.b16 %v2779
    %v3043 = vunpack.c.l.b16 %v2780
    %v3044 = vunpack.c.l.b16 %v2781
    %v3045 = vunpack.c.l.b16 %v2782
    %v3046 = vunpack.c.l.b16 %v2783
    %v3047 = vunpack.c.l.b16 %v2784
    %v3048 = vunpack.c.l.b16 %v2785
    %v3049 = vunpack.c.l.b16 %v2786
    %v3050 = vunpack.c.l.b16 %v2787
    %v3051 = vunpack.c.l.b16 %v2788
    %v3052 = vunpack.c.l.b16 %v2789
    %v3053 = vunpack.c.l.b16 %v2790
    %v3054 = vunpack.c.l.b16 %v2791
    %v3055 = vunpack.c.l.b16 %v2792
    %v3056 = vunpack.c.l.b16 %v2793
    %v3057 = vunpack.c.l.b16 %v2794
    %v3058 = vunpack.c.l.b16 %v2795
    %v3059 = vunpack.c.l.b16 %v2796
    %v3060 = vunpack.c.l.b16 %v2797
    %v3061 = vunpack.c.l.b16 %v2798
    %v3062 = vunpack.c.l.b16 %v2799
    %v3063 = vunpack.c.l.b16 %v2800
    %v3064 = vunpack.c.l.b16 %v2801
    %v3065 = vunpack.c.l.b16 %v2802
    %v3066 = vunpack.c.l.b16 %v2803
    %v3067 = vunpack.c.l.b16 %v2804
    %v3068 = vunpack.c.l.b16 %v2805
    %v3069 = vunpack.c.l.b16 %v2806
    %v3070 = vunpack.c.l.b16 %v2807
    %v3071 = vunpack.c.l.b16 %v2808
    %v3072 = vunpack.c.l.b16 %v2809
    %v3073 = vunpack.c.l.b16 %v2810
    %v3074 = vunpack.c.l.b16 %v2811
    %v3075 = vunpack.c.l.b16 %v2812
    %v3076 = vunpack.c.l.b16 %v2813
    %v3077 = vunpack.c.l.b16 %v2814
    %v3078 = vunpack.c.l.b16 %v2815
    %v3079 = vunpack.c.l.b16 %v2816
    %v3080 = vunpack.c.l.b16 %v2817
    %v3081 = vunpack.c.l.b16 %v2818
    %v3082 = vunpack.c.l.b16 %v2819
    %v3083 = vunpack.c.l.b16 %v2820
    %v3084 = vunpack.c.l.b16 %v2821
    %v3085 = vunpack.c.l.b16 %v2822
    %v3086 = vunpack.c.l.b16 %v2823
    %v3087 = vunpack.c.l.b16 %v2824
    %v3088 = vunpack.c.l.b16 %v2825
    %v3089 = vunpack.c.l.b16 %v2826
    %v3090 = vunpack.c.l.b16 %v2827
    %v3091 = vunpack.c.l.b16 %v2828
    %v3092 = vunpack.c.l.b16 %v2829
    %v3093 = vunpack.c.l.b16 %v2830
    %v3094 = vunpack.c.l.b16 %v2831
    %v3095 = vunpack.c.l.b16 %v2832
    %v3096 = vpack.c.b16 %v2969, %v2968
    %v3097 = vpack.c.b16 %v2971, %v2970
    %v3098 = vpack.c.b16 %v2973, %v2972
    %v3099 = vpack.c.b16 %v2975, %v2974
    %v3100 = vpack.c.b16 %v2977, %v2976
    %v3101 = vpack.c.b16 %v2979, %v2978
    %v3102 = vpack.c.b16 %v2981, %v2980
    %v3103 = vpack.c.b16 %v2983, %v2982
    %v3104 = vpack.c.b16 %v2985, %v2984
    %v3105 = vpack.c.b16 %v2987, %v2986
    %v3106 = vpack.c.b16 %v2989, %v2988
    %v3107 = vpack.c.b16 %v2991, %v2990
    %v3108 = vpack.c.b16 %v2993, %v2992
    %v3109 = vpack.c.b16 %v2995, %v2994
    %v3110 = vpack.c.b16 %v2997, %v2996
    %v3111 = vpack.c.b16 %v2999, %v2998
    %v3112 = vpack.c.b16 %v3001, %v3000
    %v3113 = vpack.c.b16 %v3003, %v3002
    %v3114 = vpack.c.b16 %v3005, %v3004
    %v3115 = vpack.c.b16 %v3007, %v3006
    %v3116 = vpack.c.b16 %v3009, %v3008
    %v3117 = vpack.c.b16 %v3011, %v3010
    %v3118 = vpack.c.b16 %v3013, %v3012
    %v3119 = vpack.c.b16 %v3015, %v3014
    %v3120 = vpack.c.b16 %v3017, %v3016
    %v3121 = vpack.c.b16 %v3019, %v3018
    %v3122 = vpack.c.b16 %v3021, %v3020
    %v3123 = vpack.c.b16 %v3023, %v3022
    %v3124 = vpack.c.b16 %v3025, %v3024
    %v3125 = vpack.c.b16 %v3027, %v3026
    %v3126 = vpack.c.b16 %v3029, %v3028
    %v3127 = vpack.c.b16 %v3031, %v3030
    %v3128 = vpack.c.b16 %v3033, %v3032
    %v3129 = vpack.c.b16 %v3035, %v3034
    %v3130 = vpack.c.b16 %v3037, %v3036
    %v3131 = vpack.c.b16 %v3039, %v3038
    %v3132 = vpack.c.b16 %v3041, %v3040
    %v3133 = vpack.c.b16 %v3043, %v3042
    %v3134 = vpack.c.b16 %v3045, %v3044
    %v3135 = vpack.c.b16 %v3047, %v3046
    %v3136 = vpack.c.b16 %v3049, %v3048
    %v3137 = vpack.c.b16 %v3051, %v3050
    %v3138 = vpack.c.b16 %v3053, %v3052
    %v3139 = vpack.c.b16 %v3055, %v3054
    %v3140 = vpack.c.b16 %v3057, %v3056
    %v3141 = vpack.c.b16 %v3059, %v3058
    %v3142 = vpack.c.b16 %v3061, %v3060
    %v3143 = vpack.c.b16 %v3063, %v3062
    %v3144 = vpack.c.b16 %v3065, %v3064
    %v3145 = vpack.c.b16 %v3067, %v3066
    %v3146 = vpack.c.b16 %v3069, %v3068
    %v3147 = vpack.c.b16 %v3071, %v3070
    %v3148 = vpack.c.b16 %v3073, %v3072
    %v3149 = vpack.c.b16 %v3075, %v3074
    %v3150 = vpack.c.b16 %v3077, %v3076
    %v3151 = vpack.c.b16 %v3079, %v3078
    %v3152 = vpack.c.b16 %v3081, %v3080
    %v3153 = vpack.c.b16 %v3083, %v3082
    %v3154 = vpack.c.b16 %v3085, %v3084
    %v3155 = vpack.c.b16 %v3087, %v3086
    %v3156 = vpack.c.b16 %v3089, %v3088
    %v3157 = vpack.c.b16 %v3091, %v3090
    %v3158 = vpack.c.b16 %v3093, %v3092
    %v3159 = vpack.c.b16 %v3095, %v3094
    %3224 = vmatprep.subr.bf16.mxu0 0
    %3225 = vmatpush1.bf16.msra.mxu0 %v3096
    %3226 = vmatprep.subr.bf16.mxu0 0
    %3227 = vmatpush1.bf16.msra.mxu0 %v3097
    %3228 = vmatprep.subr.bf16.mxu0 0
    %3229 = vmatpush1.bf16.msra.mxu0 %v3098
    %3230 = vmatprep.subr.bf16.mxu0 0
    %3231 = vmatpush1.bf16.msra.mxu0 %v3099
    %3232 = vmatprep.subr.bf16.mxu0 0
    %3233 = vmatpush1.bf16.msra.mxu0 %v3100
    %3234 = vmatprep.subr.bf16.mxu0 0
    %3235 = vmatpush1.bf16.msra.mxu0 %v3101
    %3236 = vmatprep.subr.bf16.mxu0 0
    %3237 = vmatpush1.bf16.msra.mxu0 %v3102
    %3238 = vmatprep.subr.bf16.mxu0 0
    %3239 = vmatpush1.bf16.msra.mxu0 %v3103
    %3240 = vmatprep.subr.bf16.mxu0 0
    %3241 = vmatpush1.bf16.msra.mxu0 %v3104
    %3242 = vmatprep.subr.bf16.mxu0 0
    %3243 = vmatpush1.bf16.msra.mxu0 %v3105
    %3244 = vmatprep.subr.bf16.mxu0 0
    %3245 = vmatpush1.bf16.msra.mxu0 %v3106
    %3246 = vmatprep.subr.bf16.mxu0 0
    %3247 = vmatpush1.bf16.msra.mxu0 %v3107
    %3248 = vmatprep.subr.bf16.mxu0 0
    %3249 = vmatpush1.bf16.msra.mxu0 %v3108
    %3250 = vmatprep.subr.bf16.mxu0 0
    %3251 = vmatpush1.bf16.msra.mxu0 %v3109
    %3252 = vmatprep.subr.bf16.mxu0 0
    %3253 = vmatpush1.bf16.msra.mxu0 %v3110
    %3254 = vmatprep.subr.bf16.mxu0 0
    %3255 = vmatpush1.bf16.msra.mxu0 %v3111
    %3256 = vmatprep.mubr.bf16.mxu0 %v2698
    %3257 = vmatmul.mubr.bf16.gmra.mrb[0].mxu0 %v2697
    %v3258 = vpop.f32.mrb[0].mxu0
    %v3259 = vadd.f32 %v2838, %v3258
    %v3260 = vpop.f32.mrb[0].mxu0
    %v3261 = vpop.f32.mrb[0].mxu0
    %v3262 = vpop.f32.mrb[0].mxu0
    %3263 = vdwg.mxu0
    %3264 = vmatprep.subr.bf16.mxu0 0
    %3265 = vmatpush1.bf16.msra.mxu0 %v3112
    %3266 = vmatprep.subr.bf16.mxu0 0
    %3267 = vmatpush1.bf16.msra.mxu0 %v3113
    %3268 = vmatprep.subr.bf16.mxu0 0
    %3269 = vmatpush1.bf16.msra.mxu0 %v3114
    %3270 = vmatprep.subr.bf16.mxu0 0
    %3271 = vmatpush1.bf16.msra.mxu0 %v3115
    %3272 = vmatprep.subr.bf16.mxu0 0
    %3273 = vmatpush1.bf16.msra.mxu0 %v3116
    %3274 = vmatprep.subr.bf16.mxu0 0
    %3275 = vmatpush1.bf16.msra.mxu0 %v3117
    %3276 = vmatprep.subr.bf16.mxu0 0
    %3277 = vmatpush1.bf16.msra.mxu0 %v3118
    %3278 = vmatprep.subr.bf16.mxu0 0
    %3279 = vmatpush1.bf16.msra.mxu0 %v3119
    %3280 = vmatprep.subr.bf16.mxu0 0
    %3281 = vmatpush1.bf16.msra.mxu0 %v3120
    %3282 = vmatprep.subr.bf16.mxu0 0
    %3283 = vmatpush1.bf16.msra.mxu0 %v3121
    %3284 = vmatprep.subr.bf16.mxu0 0
    %3285 = vmatpush1.bf16.msra.mxu0 %v3122
    %3286 = vmatprep.subr.bf16.mxu0 0
    %3287 = vmatpush1.bf16.msra.mxu0 %v3123
    %3288 = vmatprep.subr.bf16.mxu0 0
    %3289 = vmatpush1.bf16.msra.mxu0 %v3124
    %3290 = vmatprep.subr.bf16.mxu0 0
    %3291 = vmatpush1.bf16.msra.mxu0 %v3125
    %3292 = vmatprep.subr.bf16.mxu0 0
    %3293 = vmatpush1.bf16.msra.mxu0 %v3126
    %3294 = vmatprep.subr.bf16.mxu0 0
    %3295 = vmatpush1.bf16.msra.mxu0 %v3127
    %3296 = vmatprep.mubr.bf16.mxu0 %v2700
    %3297 = vmatmul.mubr.bf16.gmra.mrb[0].mxu0 %v2699
    %v3298 = vpop.f32.mrb[0].mxu0
    %v3299 = vadd.f32 %v3259, %v3298
    %v3300 = vpop.f32.mrb[0].mxu0
    %v3301 = vpop.f32.mrb[0].mxu0
    %v3302 = vpop.f32.mrb[0].mxu0
    %3303 = vdwg.mxu0
    %3304 = vmatprep.subr.bf16.mxu0 0
    %3305 = vmatpush1.bf16.msra.mxu0 %v3128
    %3306 = vmatprep.subr.bf16.mxu0 0
    %3307 = vmatpush1.bf16.msra.mxu0 %v3129
    %3308 = vmatprep.subr.bf16.mxu0 0
    %3309 = vmatpush1.bf16.msra.mxu0 %v3130
    %3310 = vmatprep.subr.bf16.mxu0 0
    %3311 = vmatpush1.bf16.msra.mxu0 %v3131
    %3312 = vmatprep.subr.bf16.mxu0 0
    %3313 = vmatpush1.bf16.msra.mxu0 %v3132
    %3314 = vmatprep.subr.bf16.mxu0 0
    %3315 = vmatpush1.bf16.msra.mxu0 %v3133
    %3316 = vmatprep.subr.bf16.mxu0 0
    %3317 = vmatpush1.bf16.msra.mxu0 %v3134
    %3318 = vmatprep.subr.bf16.mxu0 0
    %3319 = vmatpush1.bf16.msra.mxu0 %v3135
    %3320 = vmatprep.subr.bf16.mxu0 0
    %3321 = vmatpush1.bf16.msra.mxu0 %v3136
    %3322 = vmatprep.subr.bf16.mxu0 0
    %3323 = vmatpush1.bf16.msra.mxu0 %v3137
    %3324 = vmatprep.subr.bf16.mxu0 0
    %3325 = vmatpush1.bf16.msra.mxu0 %v3138
    %3326 = vmatprep.subr.bf16.mxu0 0
    %3327 = vmatpush1.bf16.msra.mxu0 %v3139
    %3328 = vmatprep.subr.bf16.mxu0 0
    %3329 = vmatpush1.bf16.msra.mxu0 %v3140
    %3330 = vmatprep.subr.bf16.mxu0 0
    %3331 = vmatpush1.bf16.msra.mxu0 %v3141
    %3332 = vmatprep.subr.bf16.mxu0 0
    %3333 = vmatpush1.bf16.msra.mxu0 %v3142
    %3334 = vmatprep.subr.bf16.mxu0 0
    %3335 = vmatpush1.bf16.msra.mxu0 %v3143
    %3336 = vmatprep.mubr.bf16.mxu0 %v2702
    %3337 = vmatmul.mubr.bf16.gmra.mrb[0].mxu0 %v2701
    %v3338 = vpop.f32.mrb[0].mxu0
    %v3339 = vadd.f32 %v3299, %v3338
    %v3340 = vpop.f32.mrb[0].mxu0
    %v3341 = vpop.f32.mrb[0].mxu0
    %v3342 = vpop.f32.mrb[0].mxu0
    %3343 = vdwg.mxu0
    %3344 = vmatprep.subr.bf16.mxu0 0
    %3345 = vmatpush1.bf16.msra.mxu0 %v3144
    %3346 = vmatprep.subr.bf16.mxu0 0
    %3347 = vmatpush1.bf16.msra.mxu0 %v3145
    %3348 = vmatprep.subr.bf16.mxu0 0
    %3349 = vmatpush1.bf16.msra.mxu0 %v3146
    %3350 = vmatprep.subr.bf16.mxu0 0
    %3351 = vmatpush1.bf16.msra.mxu0 %v3147
    %3352 = vmatprep.subr.bf16.mxu0 0
    %3353 = vmatpush1.bf16.msra.mxu0 %v3148
    %3354 = vmatprep.subr.bf16.mxu0 0
    %3355 = vmatpush1.bf16.msra.mxu0 %v3149
    %3356 = vmatprep.subr.bf16.mxu0 0
    %3357 = vmatpush1.bf16.msra.mxu0 %v3150
    %3358 = vmatprep.subr.bf16.mxu0 0
    %3359 = vmatpush1.bf16.msra.mxu0 %v3151
    %3360 = vmatprep.subr.bf16.mxu0 0
    %3361 = vmatpush1.bf16.msra.mxu0 %v3152
    %3362 = vmatprep.subr.bf16.mxu0 0
    %3363 = vmatpush1.bf16.msra.mxu0 %v3153
    %3364 = vmatprep.subr.bf16.mxu0 0
    %3365 = vmatpush1.bf16.msra.mxu0 %v3154
    %3366 = vmatprep.subr.bf16.mxu0 0
    %3367 = vmatpush1.bf16.msra.mxu0 %v3155
    %3368 = vmatprep.subr.bf16.mxu0 0
    %3369 = vmatpush1.bf16.msra.mxu0 %v3156
    %3370 = vmatprep.subr.bf16.mxu0 0
    %3371 = vmatpush1.bf16.msra.mxu0 %v3157
    %3372 = vmatprep.subr.bf16.mxu0 0
    %3373 = vmatpush1.bf16.msra.mxu0 %v3158
    %3374 = vmatprep.subr.bf16.mxu0 0
    %3375 = vmatpush1.bf16.msra.mxu0 %v3159
    %3376 = vmatprep.mubr.bf16.mxu0 %v2704
    %3377 = vmatmul.mubr.bf16.gmra.mrb[0].mxu0 %v2703
    %v3378 = vpop.f32.mrb[0].mxu0
    %v3379 = vadd.f32 %v3339, %v3378
    %v3380 = vpop.f32.mrb[0].mxu0
    %v3381 = vpop.f32.mrb[0].mxu0
    %v3382 = vpop.f32.mrb[0].mxu0
    %3383 = vdwg.mxu0
    %v3384 = vmax.f32 %v3379, 0.0
    %vm3385 = vcmask 254976
    %3386 = vst.msk [vmem:[#allocation3] sm:$0x3] %vm3385, %v3384
    // Predicated region
    $region26: #{blstm_python_feature_net.1} parent=1 // pred_check
      _
    $region27: #{blstm_python_feature_net.1} parent=1 // pred_check_branch
      %3388 = sbr.rel (0) target = $region29
    $region28: #{blstm_python_feature_net.1} parent=1 // pred_region
      %s3390 = ssub.s32 32, 32
      %3391 = vsyncadd [#allocation4], %s3390
      %s3393 = sshll.u32 [#allocation3], 4
      %s3394 = int_to_ptr.vmem [resolvable:$true] %s3393
      %3396 = dma.vmem_to_hbm [thread:$0]  %s3394, 32, %s6, [#allocation4]
    $region29: #{blstm_python_feature_net.1} parent=1 // pred_fallthru
      _
    // Predicated region
    $region30: #{blstm_python_feature_net.1} parent=1 // pred_check
      _
    $region31: #{blstm_python_feature_net.1} parent=1 // pred_check_branch
      %3398 = sbr.rel (0) target = $region33
    $region32: #{blstm_python_feature_net.1} parent=1 // pred_region
      %3399 = dma.done [#allocation4], 32
    $region33: #{blstm_python_feature_net.1} parent=1 // pred_fallthru
      _
    %3400 = vsyncpa [#allocation4], 1

</llo_original>
